<compile_context>
chip_gen: v6e
topology: v6e:2x2x1
jax: 0.10.0
libtpu: 0.0.40
codegen_flags: <defaults>
</compile_context>

<pallas_src>
import functools
import math

import jax
import jax.numpy as jnp
from jax import lax
from jax.experimental import pallas as pl
from jax.experimental.pallas import tpu as pltpu


# -----------------------------------------------------------------------------
# Fused kernel: expand + BN0 + SiLU + depthwise (strided) + BN1 + SiLU + SE
#               + project + BN2 + shortcut
# -----------------------------------------------------------------------------
def _mbconv_kernel(x_ref, w_exp_ref, bn0_s_ref, bn0_b_ref, w_dw_ref,
                   bn1_s_ref, bn1_b_ref, se_w1_ref, se_b1_ref,
                   se_w2_ref, se_b2_ref, w_proj_ref, bn2_s_ref, bn2_b_ref,
                   *rest, H, W, C_in, C_mid, C_out, K, P, S, Ho, Wo,
                   use_sc_conv):
    i = 0
    if use_sc_conv:
        w_sc_ref, b_sc_ref = rest[0], rest[1]
        i = 2
    out_ref = rest[i]
    pad_ref = rest[i + 1]
    y_ref = rest[i + 2]
    xsub_ref = rest[i + 3] if S > 1 else None

    f32 = jnp.float32
    bf16 = jnp.bfloat16
    Wp_pad = pad_ref.shape[1]

    # ---- stage 1: expand 1x1 conv + BN0 + SiLU, strip-wise into the bf16 pad scratch ----
    w_exp = w_exp_ref[...]
    bn0_s = bn0_s_ref[...]
    bn0_b = bn0_b_ref[...]
    zl = P
    zr = Wp_pad - W - P

    if P > 0:
        zb = jnp.zeros((P, Wp_pad, C_mid), bf16)
        pad_ref[0:P] = zb                                   # top border rows
        pad_ref[P + H:P + H + P] = zb                       # bottom border rows

    def expand_rows(r0, nrows):
        xs = x_ref[0, pl.ds(r0, nrows), :, :]               # (nrows, W, C_in) bf16
        xe = jnp.dot(xs.reshape(nrows * W, C_in), w_exp,
                     preferred_element_type=f32)
        xe = xe * bn0_s + bn0_b
        xe = xe * jax.nn.sigmoid(xe)                        # SiLU
        xe = xe.reshape(nrows, W, C_mid)
        parts = []
        if zl:
            parts.append(jnp.zeros((nrows, zl, C_mid), f32))
        parts.append(xe)
        if zr:
            parts.append(jnp.zeros((nrows, zr, C_mid), f32))
        blk = parts[0] if len(parts) == 1 else jnp.concatenate(parts, axis=1)
        # full-width, aligned store of the padded row block (no narrow border stores)
        pad_ref[pl.ds(P + r0, nrows)] = blk.astype(bf16)

    rs_e = min(8, H)
    n_e, rem_e = divmod(H, rs_e)

    def e_body(r, c):
        expand_rows(r * rs_e, rs_e)
        return c
    lax.fori_loop(0, n_e, e_body, 0)
    if rem_e:
        expand_rows(n_e * rs_e, rem_e)

    # ---- stage 2: depthwise KxK conv + BN1 + SiLU + global-average-pool accumulation ----
    bn1_s = bn1_s_ref[...]
    bn1_b = bn1_b_ref[...]

    if S == 1:
        # broadcasts + taps hoisted out of the loops (JAX does not CSE broadcast_in_dim)
        bn1_s3 = bn1_s.reshape(1, 1, C_mid)
        bn1_b3 = bn1_b.reshape(1, 1, C_mid)
        taps = [[w_dw_ref[ky:ky + 1, kx:kx + 1, :] for kx in range(K)]
                for ky in range(K)]                         # (1, 1, C_mid) f32

        def dw_rows(r0, nrows, pooled):
            acc = jnp.zeros((nrows, W, C_mid), f32)
            for ky in range(K):
                rows = pad_ref[pl.ds(r0 + ky, nrows)].astype(f32)   # one load per ky
                for kx in range(K):
                    acc = acc + rows[:, kx:kx + W, :] * taps[ky][kx]
            acc = acc * bn1_s3 + bn1_b3
            acc = acc * jax.nn.sigmoid(acc)                 # SiLU
            y_ref[pl.ds(r0, nrows)] = acc.astype(bf16)
            return pooled + jnp.sum(acc.reshape(nrows * W, C_mid),
                                    axis=0, keepdims=True)

        rs_d = min(8, Ho)
        n_d, rem_d = divmod(Ho, rs_d)
        pooled = lax.fori_loop(0, n_d,
                               lambda r, p: dw_rows(r * rs_d, rs_d, p),
                               jnp.zeros((1, C_mid), f32))
        if rem_d:
            pooled = dw_rows(n_d * rs_d, rem_d, pooled)
    else:
        # Only strided output rows are computed; strided output columns (and the strided
        # shortcut input) are picked with a cheap bf16 0/1 selection matmul -- the MXU
        # slot is idle under the VPU-bound tap loop, so it is nearly free filler.
        # TODO(synk): switch to strided pad_ref[row, pl.ds(kx, Wo, stride=S), :] reads to
        #             also cut the tap FMAs by S once packed-bf16 strided loads are safe.
        selT = (lax.broadcasted_iota(jnp.int32, (Wo, W), 1)
                == S * lax.broadcasted_iota(jnp.int32, (Wo, W), 0)).astype(bf16)
        taps = [[w_dw_ref[ky, kx:kx + 1, :] for kx in range(K)]
                for ky in range(K)]                         # (1, C_mid) f32

        def dw_row(ho, pooled):
            base = ho * S
            accw = jnp.zeros((W, C_mid), f32)
            for ky in range(K):
                prow = pad_ref[base + ky].astype(f32)       # (Wp_pad, C_mid)
                for kx in range(K):
                    accw = accw + prow[kx:kx + W, :] * taps[ky][kx]
            acc = jnp.dot(selT, accw.astype(bf16),
                          preferred_element_type=f32)       # (Wo, C_mid)
            acc = acc * bn1_s + bn1_b
            acc = acc * jax.nn.sigmoid(acc)                 # SiLU
            y_ref[ho] = acc.astype(bf16)
            # strided shortcut input row via the same selection matmul (exact 0/1 pick)
            xr = x_ref[0, ho * S]                           # (W, C_in) bf16
            xsub_ref[ho] = jnp.dot(selT, xr,
                                   preferred_element_type=f32).astype(bf16)
            return pooled + jnp.sum(acc, axis=0, keepdims=True)

        pooled = lax.fori_loop(0, Ho, dw_row, jnp.zeros((1, C_mid), f32))

    # ---- stage 3: Squeeze-Excite: GAP -> FC -> SiLU -> FC -> sigmoid ----
    pooled = pooled * (1.0 / float(Ho * Wo))                # (1, C_mid) f32
    h = jnp.dot(pooled.astype(bf16), se_w1_ref[...],
                preferred_element_type=f32) + se_b1_ref[...]
    h = h * jax.nn.sigmoid(h)
    g = jax.nn.sigmoid(jnp.dot(h.astype(bf16), se_w2_ref[...],
                               preferred_element_type=f32) + se_b2_ref[...])

    # row -> column without an XLU transpose: diagonal extraction (iota / where / sum)
    gb = jnp.broadcast_to(g, (C_mid, C_mid))
    eye = (lax.broadcasted_iota(jnp.int32, (C_mid, C_mid), 0)
           == lax.broadcasted_iota(jnp.int32, (C_mid, C_mid), 1))
    g_col = jnp.sum(jnp.where(eye, gb, 0.0), axis=1, keepdims=True)   # (C_mid, 1)

    # SE gate folded into the projection weights: one (C_mid, C_out) scale instead of an
    # f32 upcast + scale + downcast pass over the whole (Ho*Wo, C_mid) activation.
    w_pg = (w_proj_ref[...].astype(f32) * g_col).astype(bf16)         # (C_mid, C_out)

    # ---- stage 4: project 1x1 conv + BN2 + shortcut, strip-wise ----
    bn2_s = bn2_s_ref[...]
    bn2_b = bn2_b_ref[...]
    if use_sc_conv:
        w_sc = w_sc_ref[...]
        b_sc = b_sc_ref[...]

    def proj_rows(r0, nrows):
        yb = y_ref[pl.ds(r0, nrows)].reshape(nrows * Wo, C_mid)       # bf16, feeds MXU
        ob = jnp.dot(yb, w_pg, preferred_element_type=f32)
        ob = ob * bn2_s + bn2_b
        if S == 1:
            xb = x_ref[0, pl.ds(r0, nrows), :, :].reshape(nrows * Wo, C_in)
        else:
            xb = xsub_ref[pl.ds(r0, nrows)].reshape(nrows * Wo, C_in)
        if use_sc_conv:
            sc = jnp.dot(xb, w_sc, preferred_element_type=f32) + b_sc
        else:
            sc = xb.astype(f32)          # identity shortcut (S == 1, C_in == C_out)
        out_ref[0, pl.ds(r0, nrows)] = (ob + sc).reshape(nrows, Wo, C_out)

    rs_p = min(8, Ho)
    n_p, rem_p = divmod(Ho, rs_p)

    def p_body(r, c):
        proj_rows(r * rs_p, rs_p)
        return c
    lax.fori_loop(0, n_p, p_body, 0)
    if rem_p:
        proj_rows(n_p * rs_p, rem_p)


# -----------------------------------------------------------------------------
# Wrapper
# -----------------------------------------------------------------------------
def mbconv_forward(x_nhwc, params, *, kernel_size, stride, use_sc_conv):
    N, H, W, C_in = x_nhwc.shape
    C_mid = params['w_exp'].shape[1]
    C_out = params['w_proj'].shape[1]
    C_sq = params['se_w1'].shape[1]
    K = kernel_size
    P = (K - 1) // 2
    S = stride
    Ho = (H - 1) // S + 1
    Wo = (W - 1) // S + 1
    Hp = H + 2 * P
    Wp_pad = ((W + 2 * P + 15) // 16) * 16                # 16-sublane aligned (bf16 packing)
    f32, bf16 = jnp.float32, jnp.bfloat16

    row = lambda v: v.reshape(1, -1).astype(f32)
    wq = lambda v: v.astype(bf16)                         # bf16 weights for MXU matmuls

    args = [x_nhwc.astype(bf16),                          # bf16 input halves HBM->VMEM DMA
            wq(params['w_exp']), row(params['bn0_s']), row(params['bn0_b']),
            params['w_dw'].astype(f32), row(params['bn1_s']), row(params['bn1_b']),
            wq(params['se_w1']), row(params['se_b1']),
            wq(params['se_w2']), row(params['se_b2']),
            wq(params['w_proj']), row(params['bn2_s']), row(params['bn2_b'])]
    in_specs = [
        pl.BlockSpec((1, H, W, C_in), lambda n: (n, 0, 0, 0)),
        pl.BlockSpec((C_in, C_mid), lambda n: (0, 0)),
        pl.BlockSpec((1, C_mid), lambda n: (0, 0)),
        pl.BlockSpec((1, C_mid), lambda n: (0, 0)),
        pl.BlockSpec((K, K, C_mid), lambda n: (0, 0, 0)),
        pl.BlockSpec((1, C_mid), lambda n: (0, 0)),
        pl.BlockSpec((1, C_mid), lambda n: (0, 0)),
        pl.BlockSpec((C_mid, C_sq), lambda n: (0, 0)),
        pl.BlockSpec((1, C_sq), lambda n: (0, 0)),
        pl.BlockSpec((C_sq, C_mid), lambda n: (0, 0)),
        pl.BlockSpec((1, C_mid), lambda n: (0, 0)),
        pl.BlockSpec((C_mid, C_out), lambda n: (0, 0)),
        pl.BlockSpec((1, C_out), lambda n: (0, 0)),
        pl.BlockSpec((1, C_out), lambda n: (0, 0)),
    ]
    if use_sc_conv:
        # shortcut weights only exist (and are only DMA'd) when actually needed
        args += [wq(params['w_sc']), row(params['b_sc'])]
        in_specs += [pl.BlockSpec((C_in, C_out), lambda n: (0, 0)),
                     pl.BlockSpec((1, C_out), lambda n: (0, 0))]

    scratch = [pltpu.VMEM((Hp, Wp_pad, C_mid), bf16),     # padded activation (bf16)
               pltpu.VMEM((Ho, Wo, C_mid), bf16)]         # post-dw activation (bf16)
    if S > 1:
        scratch.append(pltpu.VMEM((Ho, Wo, C_in), bf16))  # strided shortcut input

    kernel = functools.partial(
        _mbconv_kernel, H=H, W=W, C_in=C_in, C_mid=C_mid, C_out=C_out,
        K=K, P=P, S=S, Ho=Ho, Wo=Wo, use_sc_conv=use_sc_conv)

    fn = pl.pallas_call(
        kernel,
        out_shape=jax.ShapeDtypeStruct((N, Ho, Wo, C_out), f32),
        grid=(N,),
        in_specs=in_specs,
        out_specs=pl.BlockSpec((1, Ho, Wo, C_out), lambda n: (n, 0, 0, 0)),
        scratch_shapes=scratch,
        compiler_params=pltpu.CompilerParams(
            dimension_semantics=("parallel",),            # batch is independent
            vmem_limit_bytes=48 * 1024 * 1024),
    )
    return fn(*args)


# -----------------------------------------------------------------------------
# Deterministic parameter construction (synthetic; no checkpoint load)
# -----------------------------------------------------------------------------
def _fold_bn(gamma, beta, mean, var, eps):
    scale = gamma / jnp.sqrt(var + eps)
    return scale, beta - mean * scale


def make_params(key, in_ch, out_ch, kernel_size, expand_ratio, se_ratio, stride,
                bn_eps=1e-3):
    mid = int(in_ch * expand_ratio)
    sq = max(1, int(in_ch * se_ratio))
    keys = iter(jax.random.split(key, 32))

    def nrm(shape, fan_in):
        return jax.random.normal(next(keys), shape, jnp.float32) * (1.0 / math.sqrt(fan_in))

    def bn(c):
        gamma = 1.0 + 0.1 * jax.random.normal(next(keys), (c,), jnp.float32)
        beta = 0.1 * jax.random.normal(next(keys), (c,), jnp.float32)
        mean = 0.1 * jax.random.normal(next(keys), (c,), jnp.float32)
        var = jax.random.uniform(next(keys), (c,), jnp.float32, minval=0.5, maxval=1.5)
        return _fold_bn(gamma, beta, mean, var, bn_eps)

    p = {}
    p['w_exp'] = nrm((in_ch, mid), in_ch)                       # 1x1 expand conv (no bias)
    p['bn0_s'], p['bn0_b'] = bn(mid)
    p['w_dw'] = nrm((kernel_size, kernel_size, mid), kernel_size * kernel_size)
    p['bn1_s'], p['bn1_b'] = bn(mid)
    p['se_w1'] = nrm((mid, sq), mid)
    p['se_b1'] = 0.1 * jax.random.normal(next(keys), (sq,), jnp.float32)
    p['se_w2'] = nrm((sq, mid), sq)
    p['se_b2'] = 0.1 * jax.random.normal(next(keys), (mid,), jnp.float32)
    p['w_proj'] = nrm((mid, out_ch), mid)                       # 1x1 project conv (no bias)
    p['bn2_s'], p['bn2_b'] = bn(out_ch)

    use_sc_conv = (stride != 1) or (in_ch != out_ch)
    if use_sc_conv:
        w = nrm((in_ch, out_ch), in_ch)                         # 1x1 strided conv (bias=True)
        b = 0.1 * jax.random.normal(next(keys), (out_ch,), jnp.float32)
        s, bb = bn(out_ch)                                      # shortcut BatchNorm, folded
        p['w_sc'] = w * s[None, :]
        p['b_sc'] = (b * s) + bb
    return p, use_sc_conv


# -----------------------------------------------------------------------------
# Pure-JAX reference (same math, mirroring the kernel's bf16 inputs / storage)
# -----------------------------------------------------------------------------
def mbconv_ref(x, params, *, kernel_size, stride, use_sc_conv):
    K = kernel_size
    P = (K - 1) // 2
    S = stride
    N, H, W, _ = x.shape
    C_mid = params['w_exp'].shape[1]
    f32, bf16 = jnp.float32, jnp.bfloat16
    silu = lambda t: t * jax.nn.sigmoid(t)
    mm = lambda a, b: jnp.einsum('...c,cd->...d', a.astype(bf16), b.astype(bf16),
                                 preferred_element_type=f32)

    x = x.astype(bf16).astype(f32)                        # kernel receives bf16 input
    xe = silu(mm(x, params['w_exp']) * params['bn0_s'] + params['bn0_b'])
    xe = xe.astype(bf16).astype(f32)                      # kernel stores pad scratch in bf16
    xp = jnp.pad(xe, ((0, 0), (P, P), (P, P), (0, 0)))
    acc = jnp.zeros((N, H, W, C_mid), jnp.float32)
    for ky in range(K):
        for kx in range(K):
            acc = acc + xp[:, ky:ky + H, kx:kx + W, :] * params['w_dw'][ky, kx]
    y = silu(acc * params['bn1_s'] + params['bn1_b'])
    y = y[:, ::S, ::S, :]

    pooled = y.mean(axis=(1, 2))
    h = silu(mm(pooled, params['se_w1']) + params['se_b1'])
    g = jax.nn.sigmoid(mm(h, params['se_w2']) + params['se_b2'])

    # SE gate folded into the projection weights (mirrors the kernel)
    w_b = params['w_proj'].astype(bf16).astype(f32)
    w_pg = (w_b[None, :, :] * g[:, :, None]).astype(bf16)          # (N, C_mid, C_out)
    out = jnp.einsum('nhwc,ncd->nhwd', y.astype(bf16), w_pg,
                     preferred_element_type=f32)
    out = out * params['bn2_s'] + params['bn2_b']

    sc = x[:, ::S, ::S, :]
    if use_sc_conv:
        sc = mm(sc, params['w_sc']) + params['b_sc']
    return out + sc


# -----------------------------------------------------------------------------
if __name__ == "__main__":
    key = jax.random.PRNGKey(0)
    k_in, k_par = jax.random.split(key)
    N, H, W = 2, 16, 16

    configs = [
        # classic MBConv residual block: stride 1, in == out, SE, drop_connect (identity in eval)
        dict(in_ch=32, out_ch=32, kernel_size=3, stride=1, expand_ratio=4, se_ratio=0.25),
        # downsampling block: stride 2, channel change -> conv+BN shortcut
        dict(in_ch=32, out_ch=64, kernel_size=3, stride=2, expand_ratio=2, se_ratio=0.25),
    ]

    for i, cfg in enumerate(configs):
        params, use_sc_conv = make_params(
            jax.random.fold_in(k_par, i), cfg['in_ch'], cfg['out_ch'],
            cfg['kernel_size'], cfg['expand_ratio'], cfg['se_ratio'], cfg['stride'])

        # PyTorch-style NCHW input, transposed to NHWC for the kernel.
        x_nchw = jax.random.normal(jax.random.fold_in(k_in, i),
                                   (N, cfg['in_ch'], H, W), jnp.float32)
        x = jnp.transpose(x_nchw, (0, 2, 3, 1))

        out = mbconv_forward(x, params, kernel_size=cfg['kernel_size'],
                             stride=cfg['stride'], use_sc_conv=use_sc_conv)
        out = jax.block_until_ready(out)

        ref = mbconv_ref(x, params, kernel_size=cfg['kernel_size'],
                         stride=cfg['stride'], use_sc_conv=use_sc_conv)
        assert out.shape == ref.shape, (out.shape, ref.shape)
        err = float(jnp.max(jnp.abs(out - ref)))
        assert err < 5e-2, f"config {i}: max abs err {err}"

    print("KERNEL_OK")
</pallas_src>

<mosaic_0001>
module attributes {stable_mosaic.version = 11 : i64} {
  func.func @_mbconv_kernel(%arg0: i32, %arg1: memref<1x16x16x32xbf16, #tpu.memory_space<vmem>>, %arg2: memref<32x128xbf16, #tpu.memory_space<vmem>>, %arg3: memref<1x128xf32, #tpu.memory_space<vmem>>, %arg4: memref<1x128xf32, #tpu.memory_space<vmem>>, %arg5: memref<3x3x128xf32, #tpu.memory_space<vmem>>, %arg6: memref<1x128xf32, #tpu.memory_space<vmem>>, %arg7: memref<1x128xf32, #tpu.memory_space<vmem>>, %arg8: memref<128x8xbf16, #tpu.memory_space<vmem>>, %arg9: memref<1x8xf32, #tpu.memory_space<vmem>>, %arg10: memref<8x128xbf16, #tpu.memory_space<vmem>>, %arg11: memref<1x128xf32, #tpu.memory_space<vmem>>, %arg12: memref<128x32xbf16, #tpu.memory_space<vmem>>, %arg13: memref<1x32xf32, #tpu.memory_space<vmem>>, %arg14: memref<1x32xf32, #tpu.memory_space<vmem>>, %arg15: memref<1x16x16x32xf32, #tpu.memory_space<vmem>>, %arg16: memref<18x32x128xbf16, #tpu.memory_space<vmem>>, %arg17: memref<16x16x128xbf16, #tpu.memory_space<vmem>>) attributes {dimension_semantics = [#tpu.dimension_semantics<parallel>], iteration_bounds = array<i64: 2>, scalar_prefetch = 0 : i64, scratch_operands = 2 : i64, tpu.core_type = #tpu.core_type<tc>, window_params = [{transform_indices = @transform_0, window_bounds = array<i64: 1, 16, 16, 32>}, {pipeline_mode = #tpu.pipeline_mode<synchronous>, transform_indices = @transform_1, window_bounds = array<i64: 32, 128>}, {pipeline_mode = #tpu.pipeline_mode<synchronous>, transform_indices = @transform_2, window_bounds = array<i64: 1, 128>}, {pipeline_mode = #tpu.pipeline_mode<synchronous>, transform_indices = @transform_3, window_bounds = array<i64: 1, 128>}, {pipeline_mode = #tpu.pipeline_mode<synchronous>, transform_indices = @transform_4, window_bounds = array<i64: 3, 3, 128>}, {pipeline_mode = #tpu.pipeline_mode<synchronous>, transform_indices = @transform_5, window_bounds = array<i64: 1, 128>}, {pipeline_mode = #tpu.pipeline_mode<synchronous>, transform_indices = @transform_6, window_bounds = array<i64: 1, 128>}, {pipeline_mode = #tpu.pipeline_mode<synchronous>, transform_indices = @transform_7, window_bounds = array<i64: 128, 8>}, {pipeline_mode = #tpu.pipeline_mode<synchronous>, transform_indices = @transform_8, window_bounds = array<i64: 1, 8>}, {pipeline_mode = #tpu.pipeline_mode<synchronous>, transform_indices = @transform_9, window_bounds = array<i64: 8, 128>}, {pipeline_mode = #tpu.pipeline_mode<synchronous>, transform_indices = @transform_10, window_bounds = array<i64: 1, 128>}, {pipeline_mode = #tpu.pipeline_mode<synchronous>, transform_indices = @transform_11, window_bounds = array<i64: 128, 32>}, {pipeline_mode = #tpu.pipeline_mode<synchronous>, transform_indices = @transform_12, window_bounds = array<i64: 1, 32>}, {pipeline_mode = #tpu.pipeline_mode<synchronous>, transform_indices = @transform_13, window_bounds = array<i64: 1, 32>}, {transform_indices = @transform_14, window_bounds = array<i64: 1, 16, 16, 32>}]} {
    %c0 = arith.constant 0 : index
    %c0_0 = arith.constant 0 : index
    %0 = vector.load %arg2[%c0, %c0_0] : memref<32x128xbf16, #tpu.memory_space<vmem>>, vector<32x128xbf16>
    %c0_1 = arith.constant 0 : index
    %c0_2 = arith.constant 0 : index
    %1 = vector.load %arg3[%c0_1, %c0_2] : memref<1x128xf32, #tpu.memory_space<vmem>>, vector<1x128xf32>
    %c0_3 = arith.constant 0 : index
    %c0_4 = arith.constant 0 : index
    %2 = vector.load %arg4[%c0_3, %c0_4] : memref<1x128xf32, #tpu.memory_space<vmem>>, vector<1x128xf32>
    %cst = arith.constant 0.000000e+00 : bf16
    %3 = vector.broadcast %cst : bf16 to vector<1x32x128xbf16>
    %c0_5 = arith.constant 0 : index
    %c0_6 = arith.constant 0 : index
    %c0_7 = arith.constant 0 : index
    %4 = vector.load %arg16[%c0_5, %c0_6, %c0_7] : memref<18x32x128xbf16, #tpu.memory_space<vmem>>, vector<1x32x128xbf16>
    tpu.vector_store %arg16[%c0_5, %c0_6, %c0_7], %3 {strides = array<i32>} : memref<18x32x128xbf16, #tpu.memory_space<vmem>>, vector<1x32x128xbf16>,
    %c17 = arith.constant 17 : index
    %c0_8 = arith.constant 0 : index
    %c0_9 = arith.constant 0 : index
    %5 = vector.load %arg16[%c17, %c0_8, %c0_9] : memref<18x32x128xbf16, #tpu.memory_space<vmem>>, vector<1x32x128xbf16>
    tpu.vector_store %arg16[%c17, %c0_8, %c0_9], %3 {strides = array<i32>} : memref<18x32x128xbf16, #tpu.memory_space<vmem>>, vector<1x32x128xbf16>,
    %c0_i32 = arith.constant 0 : i32
    %c2_i32 = arith.constant 2 : i32
    %6 = arith.addi %c0_i32, %c2_i32 : i32
    %c1_i32 = arith.constant 1 : i32
    scf.for %arg18 = %c0_i32 to %6 step %c1_i32  : i32 {
      %c8_i32 = arith.constant 8 : i32
      %63 = arith.muli %arg18, %c8_i32 : i32
      %c0_70 = arith.constant 0 : index
      %64 = arith.index_cast %63 : i32 to index
      %c0_71 = arith.constant 0 : index
      %c0_72 = arith.constant 0 : index
      %65 = vector.load %arg1[%c0_70, %64, %c0_71, %c0_72] : memref<1x16x16x32xbf16, #tpu.memory_space<vmem>>, vector<1x8x16x32xbf16>
      %66 = vector.shape_cast %65 : vector<1x8x16x32xbf16> to vector<8x16x32xbf16>
      %67 = vector.shape_cast %66 : vector<8x16x32xbf16> to vector<128x32xbf16>
      %cst_73 = arith.constant dense<0.000000e+00> : vector<128x128xf32>
      %68 = tpu.matmul %67, %0, %cst_73 {dimension_numbers = #tpu.dot_dimension_numbers<[1], [0], [0], [1], [0, 0, 1, 1], [], []>} : vector<128x32xbf16>, vector<32x128xbf16>, vector<128x128xf32> -> vector<128x128xf32>
      %69 = vector.broadcast %1 : vector<1x128xf32> to vector<128x128xf32>
      %70 = arith.mulf %68, %69 : vector<128x128xf32>
      %71 = vector.broadcast %2 : vector<1x128xf32> to vector<128x128xf32>
      %72 = arith.addf %70, %71 : vector<128x128xf32>
      %73 = arith.negf %72 : vector<128x128xf32>
      %74 = math.exp %73 : vector<128x128xf32>
      %cst_74 = arith.constant 1.000000e+00 : f32
      %75 = vector.broadcast %cst_74 : f32 to vector<128x128xf32>
      %76 = arith.addf %75, %74 : vector<128x128xf32>
      %77 = arith.divf %75, %76 : vector<128x128xf32>
      %78 = arith.mulf %72, %77 : vector<128x128xf32>
      %79 = vector.shape_cast %78 : vector<128x128xf32> to vector<8x16x128xf32>
      %cst_75 = arith.constant 0.000000e+00 : f32
      %80 = vector.broadcast %cst_75 : f32 to vector<8x1x128xf32>
      %cst_76 = arith.constant 0.000000e+00 : f32
      %81 = vector.broadcast %cst_76 : f32 to vector<8x15x128xf32>
      %82 = tpu.concatenate %80, %79, %81 in 1 : vector<8x1x128xf32>, vector<8x16x128xf32>, vector<8x15x128xf32> -> vector<8x32x128xf32>
      %83 = arith.truncf %82 : vector<8x32x128xf32> to vector<8x32x128xbf16>
      %c1_i32_77 = arith.constant 1 : i32
      %84 = arith.addi %c1_i32_77, %63 : i32
      %85 = arith.index_cast %84 : i32 to index
      %c0_78 = arith.constant 0 : index
      %c0_79 = arith.constant 0 : index
      %86 = vector.load %arg16[%85, %c0_78, %c0_79] : memref<18x32x128xbf16, #tpu.memory_space<vmem>>, vector<8x32x128xbf16>
      tpu.vector_store %arg16[%85, %c0_78, %c0_79], %83 {strides = array<i32>} : memref<18x32x128xbf16, #tpu.memory_space<vmem>>, vector<8x32x128xbf16>,
    }
    %c2_i32_10 = arith.constant 2 : i32
    %c0_11 = arith.constant 0 : index
    %c0_12 = arith.constant 0 : index
    %7 = vector.load %arg6[%c0_11, %c0_12] : memref<1x128xf32, #tpu.memory_space<vmem>>, vector<1x128xf32>
    %c0_13 = arith.constant 0 : index
    %c0_14 = arith.constant 0 : index
    %8 = vector.load %arg7[%c0_13, %c0_14] : memref<1x128xf32, #tpu.memory_space<vmem>>, vector<1x128xf32>
    %9 = vector.shape_cast %7 : vector<1x128xf32> to vector<1x1x128xf32>
    %10 = vector.shape_cast %8 : vector<1x128xf32> to vector<1x1x128xf32>
    %c0_15 = arith.constant 0 : index
    %c0_16 = arith.constant 0 : index
    %c0_17 = arith.constant 0 : index
    %11 = vector.load %arg5[%c0_15, %c0_16, %c0_17] : memref<3x3x128xf32, #tpu.memory_space<vmem>>, vector<1x1x128xf32>
    %c0_18 = arith.constant 0 : index
    %c1 = arith.constant 1 : index
    %c0_19 = arith.constant 0 : index
    %12 = vector.load %arg5[%c0_18, %c1, %c0_19] : memref<3x3x128xf32, #tpu.memory_space<vmem>>, vector<1x1x128xf32>
    %c0_20 = arith.constant 0 : index
    %c2 = arith.constant 2 : index
    %c0_21 = arith.constant 0 : index
    %13 = vector.load %arg5[%c0_20, %c2, %c0_21] : memref<3x3x128xf32, #tpu.memory_space<vmem>>, vector<1x1x128xf32>
    %c1_22 = arith.constant 1 : index
    %c0_23 = arith.constant 0 : index
    %c0_24 = arith.constant 0 : index
    %14 = vector.load %arg5[%c1_22, %c0_23, %c0_24] : memref<3x3x128xf32, #tpu.memory_space<vmem>>, vector<1x1x128xf32>
    %c1_25 = arith.constant 1 : index
    %c1_26 = arith.constant 1 : index
    %c0_27 = arith.constant 0 : index
    %15 = vector.load %arg5[%c1_25, %c1_26, %c0_27] : memref<3x3x128xf32, #tpu.memory_space<vmem>>, vector<1x1x128xf32>
    %c1_28 = arith.constant 1 : index
    %c2_29 = arith.constant 2 : index
    %c0_30 = arith.constant 0 : index
    %16 = vector.load %arg5[%c1_28, %c2_29, %c0_30] : memref<3x3x128xf32, #tpu.memory_space<vmem>>, vector<1x1x128xf32>
    %c2_31 = arith.constant 2 : index
    %c0_32 = arith.constant 0 : index
    %c0_33 = arith.constant 0 : index
    %17 = vector.load %arg5[%c2_31, %c0_32, %c0_33] : memref<3x3x128xf32, #tpu.memory_space<vmem>>, vector<1x1x128xf32>
    %c2_34 = arith.constant 2 : index
    %c1_35 = arith.constant 1 : index
    %c0_36 = arith.constant 0 : index
    %18 = vector.load %arg5[%c2_34, %c1_35, %c0_36] : memref<3x3x128xf32, #tpu.memory_space<vmem>>, vector<1x1x128xf32>
    %c2_37 = arith.constant 2 : index
    %c2_38 = arith.constant 2 : index
    %c0_39 = arith.constant 0 : index
    %19 = vector.load %arg5[%c2_37, %c2_38, %c0_39] : memref<3x3x128xf32, #tpu.memory_space<vmem>>, vector<1x1x128xf32>
    %cst_40 = arith.constant 0.000000e+00 : f32
    %20 = vector.broadcast %cst_40 : f32 to vector<1x128xf32>
    %c0_i32_41 = arith.constant 0 : i32
    %c2_i32_42 = arith.constant 2 : i32
    %21 = arith.addi %c0_i32_41, %c2_i32_42 : i32
    %c1_i32_43 = arith.constant 1 : i32
    %22 = scf.for %arg18 = %c0_i32_41 to %21 step %c1_i32_43 iter_args(%arg19 = %20) -> (vector<1x128xf32>)  : i32 {
      %c8_i32 = arith.constant 8 : i32
      %63 = arith.muli %arg18, %c8_i32 : i32
      %cst_70 = arith.constant 0.000000e+00 : f32
      %64 = vector.broadcast %cst_70 : f32 to vector<8x16x128xf32>
      %c0_i32_71 = arith.constant 0 : i32
      %65 = arith.addi %63, %c0_i32_71 : i32
      %66 = arith.index_cast %65 : i32 to index
      %c0_72 = arith.constant 0 : index
      %c0_73 = arith.constant 0 : index
      %67 = vector.load %arg16[%66, %c0_72, %c0_73] : memref<18x32x128xbf16, #tpu.memory_space<vmem>>, vector<8x32x128xbf16>
      %68 = arith.extf %67 : vector<8x32x128xbf16> to vector<8x32x128xf32>
      %69 = vector.extract_strided_slice %68 {offsets = [0, 0, 0], sizes = [8, 16, 128], strides = [1, 1, 1]} : vector<8x32x128xf32> to vector<8x16x128xf32>
      %70 = vector.broadcast %11 : vector<1x1x128xf32> to vector<8x16x128xf32>
      %71 = arith.mulf %69, %70 : vector<8x16x128xf32>
      %72 = arith.addf %64, %71 : vector<8x16x128xf32>
      %73 = vector.extract_strided_slice %68 {offsets = [0, 1, 0], sizes = [8, 16, 128], strides = [1, 1, 1]} : vector<8x32x128xf32> to vector<8x16x128xf32>
      %74 = vector.broadcast %12 : vector<1x1x128xf32> to vector<8x16x128xf32>
      %75 = arith.mulf %73, %74 : vector<8x16x128xf32>
      %76 = arith.addf %72, %75 : vector<8x16x128xf32>
      %77 = vector.extract_strided_slice %68 {offsets = [0, 2, 0], sizes = [8, 16, 128], strides = [1, 1, 1]} : vector<8x32x128xf32> to vector<8x16x128xf32>
      %78 = vector.broadcast %13 : vector<1x1x128xf32> to vector<8x16x128xf32>
      %79 = arith.mulf %77, %78 : vector<8x16x128xf32>
      %80 = arith.addf %76, %79 : vector<8x16x128xf32>
      %c1_i32_74 = arith.constant 1 : i32
      %81 = arith.addi %63, %c1_i32_74 : i32
      %82 = arith.index_cast %81 : i32 to index
      %c0_75 = arith.constant 0 : index
      %c0_76 = arith.constant 0 : index
      %83 = vector.load %arg16[%82, %c0_75, %c0_76] : memref<18x32x128xbf16, #tpu.memory_space<vmem>>, vector<8x32x128xbf16>
      %84 = arith.extf %83 : vector<8x32x128xbf16> to vector<8x32x128xf32>
      %85 = vector.extract_strided_slice %84 {offsets = [0, 0, 0], sizes = [8, 16, 128], strides = [1, 1, 1]} : vector<8x32x128xf32> to vector<8x16x128xf32>
      %86 = vector.broadcast %14 : vector<1x1x128xf32> to vector<8x16x128xf32>
      %87 = arith.mulf %85, %86 : vector<8x16x128xf32>
      %88 = arith.addf %80, %87 : vector<8x16x128xf32>
      %89 = vector.extract_strided_slice %84 {offsets = [0, 1, 0], sizes = [8, 16, 128], strides = [1, 1, 1]} : vector<8x32x128xf32> to vector<8x16x128xf32>
      %90 = vector.broadcast %15 : vector<1x1x128xf32> to vector<8x16x128xf32>
      %91 = arith.mulf %89, %90 : vector<8x16x128xf32>
      %92 = arith.addf %88, %91 : vector<8x16x128xf32>
      %93 = vector.extract_strided_slice %84 {offsets = [0, 2, 0], sizes = [8, 16, 128], strides = [1, 1, 1]} : vector<8x32x128xf32> to vector<8x16x128xf32>
      %94 = vector.broadcast %16 : vector<1x1x128xf32> to vector<8x16x128xf32>
      %95 = arith.mulf %93, %94 : vector<8x16x128xf32>
      %96 = arith.addf %92, %95 : vector<8x16x128xf32>
      %c2_i32_77 = arith.constant 2 : i32
      %97 = arith.addi %63, %c2_i32_77 : i32
      %98 = arith.index_cast %97 : i32 to index
      %c0_78 = arith.constant 0 : index
      %c0_79 = arith.constant 0 : index
      %99 = vector.load %arg16[%98, %c0_78, %c0_79] : memref<18x32x128xbf16, #tpu.memory_space<vmem>>, vector<8x32x128xbf16>
      %100 = arith.extf %99 : vector<8x32x128xbf16> to vector<8x32x128xf32>
      %101 = vector.extract_strided_slice %100 {offsets = [0, 0, 0], sizes = [8, 16, 128], strides = [1, 1, 1]} : vector<8x32x128xf32> to vector<8x16x128xf32>
      %102 = vector.broadcast %17 : vector<1x1x128xf32> to vector<8x16x128xf32>
      %103 = arith.mulf %101, %102 : vector<8x16x128xf32>
      %104 = arith.addf %96, %103 : vector<8x16x128xf32>
      %105 = vector.extract_strided_slice %100 {offsets = [0, 1, 0], sizes = [8, 16, 128], strides = [1, 1, 1]} : vector<8x32x128xf32> to vector<8x16x128xf32>
      %106 = vector.broadcast %18 : vector<1x1x128xf32> to vector<8x16x128xf32>
      %107 = arith.mulf %105, %106 : vector<8x16x128xf32>
      %108 = arith.addf %104, %107 : vector<8x16x128xf32>
      %109 = vector.extract_strided_slice %100 {offsets = [0, 2, 0], sizes = [8, 16, 128], strides = [1, 1, 1]} : vector<8x32x128xf32> to vector<8x16x128xf32>
      %110 = vector.broadcast %19 : vector<1x1x128xf32> to vector<8x16x128xf32>
      %111 = arith.mulf %109, %110 : vector<8x16x128xf32>
      %112 = arith.addf %108, %111 : vector<8x16x128xf32>
      %113 = vector.broadcast %9 : vector<1x1x128xf32> to vector<8x16x128xf32>
      %114 = arith.mulf %112, %113 : vector<8x16x128xf32>
      %115 = vector.broadcast %10 : vector<1x1x128xf32> to vector<8x16x128xf32>
      %116 = arith.addf %114, %115 : vector<8x16x128xf32>
      %117 = arith.negf %116 : vector<8x16x128xf32>
      %118 = math.exp %117 : vector<8x16x128xf32>
      %cst_80 = arith.constant 1.000000e+00 : f32
      %119 = vector.broadcast %cst_80 : f32 to vector<8x16x128xf32>
      %120 = arith.addf %119, %118 : vector<8x16x128xf32>
      %121 = arith.divf %119, %120 : vector<8x16x128xf32>
      %122 = arith.mulf %116, %121 : vector<8x16x128xf32>
      %123 = arith.truncf %122 : vector<8x16x128xf32> to vector<8x16x128xbf16>
      %124 = arith.index_cast %63 : i32 to index
      %c0_81 = arith.constant 0 : index
      %c0_82 = arith.constant 0 : index
      %125 = vector.load %arg17[%124, %c0_81, %c0_82] : memref<16x16x128xbf16, #tpu.memory_space<vmem>>, vector<8x16x128xbf16>
      tpu.vector_store %arg17[%124, %c0_81, %c0_82], %123 {strides = array<i32>} : memref<16x16x128xbf16, #tpu.memory_space<vmem>>, vector<8x16x128xbf16>,
      %126 = vector.shape_cast %122 : vector<8x16x128xf32> to vector<128x128xf32>
      %cst_83 = arith.constant dense<0.000000e+00> : vector<128xf32>
      %127 = vector.multi_reduction <add>, %126, %cst_83 [0] : vector<128x128xf32> to vector<128xf32>
      %128 = vector.shape_cast %127 : vector<128xf32> to vector<1x128xf32>
      %129 = arith.addf %arg19, %128 : vector<1x128xf32>
      scf.yield %129 : vector<1x128xf32>
    }
    %c2_i32_44 = arith.constant 2 : i32
    %cst_45 = arith.constant 3.906250e-03 : f32
    %23 = vector.broadcast %cst_45 : f32 to vector<1x128xf32>
    %24 = arith.mulf %22, %23 : vector<1x128xf32>
    %25 = arith.truncf %24 : vector<1x128xf32> to vector<1x128xbf16>
    %c0_46 = arith.constant 0 : index
    %c0_47 = arith.constant 0 : index
    %26 = vector.load %arg8[%c0_46, %c0_47] : memref<128x8xbf16, #tpu.memory_space<vmem>>, vector<128x8xbf16>
    %cst_48 = arith.constant dense<0.000000e+00> : vector<1x8xf32>
    %27 = tpu.matmul %25, %26, %cst_48 {dimension_numbers = #tpu.dot_dimension_numbers<[1], [0], [0], [1], [0, 0, 1, 1], [], []>} : vector<1x128xbf16>, vector<128x8xbf16>, vector<1x8xf32> -> vector<1x8xf32>
    %c0_49 = arith.constant 0 : index
    %c0_50 = arith.constant 0 : index
    %28 = vector.load %arg9[%c0_49, %c0_50] : memref<1x8xf32, #tpu.memory_space<vmem>>, vector<1x8xf32>
    %29 = arith.addf %27, %28 : vector<1x8xf32>
    %30 = arith.negf %29 : vector<1x8xf32>
    %31 = math.exp %30 : vector<1x8xf32>
    %cst_51 = arith.constant 1.000000e+00 : f32
    %32 = vector.broadcast %cst_51 : f32 to vector<1x8xf32>
    %33 = arith.addf %32, %31 : vector<1x8xf32>
    %34 = arith.divf %32, %33 : vector<1x8xf32>
    %35 = arith.mulf %29, %34 : vector<1x8xf32>
    %36 = arith.truncf %35 : vector<1x8xf32> to vector<1x8xbf16>
    %c0_52 = arith.constant 0 : index
    %c0_53 = arith.constant 0 : index
    %37 = vector.load %arg10[%c0_52, %c0_53] : memref<8x128xbf16, #tpu.memory_space<vmem>>, vector<8x128xbf16>
    %cst_54 = arith.constant dense<0.000000e+00> : vector<1x128xf32>
    %38 = tpu.matmul %36, %37, %cst_54 {dimension_numbers = #tpu.dot_dimension_numbers<[1], [0], [0], [1], [0, 0, 1, 1], [], []>} : vector<1x8xbf16>, vector<8x128xbf16>, vector<1x128xf32> -> vector<1x128xf32>
    %c0_55 = arith.constant 0 : index
    %c0_56 = arith.constant 0 : index
    %39 = vector.load %arg11[%c0_55, %c0_56] : memref<1x128xf32, #tpu.memory_space<vmem>>, vector<1x128xf32>
    %40 = arith.addf %38, %39 : vector<1x128xf32>
    %41 = arith.negf %40 : vector<1x128xf32>
    %42 = math.exp %41 : vector<1x128xf32>
    %cst_57 = arith.constant 1.000000e+00 : f32
    %43 = vector.broadcast %cst_57 : f32 to vector<1x128xf32>
    %44 = arith.addf %43, %42 : vector<1x128xf32>
    %45 = arith.divf %43, %44 : vector<1x128xf32>
    %46 = vector.shape_cast %45 : vector<1x128xf32> to vector<1x128xf32>
    %47 = vector.broadcast %46 : vector<1x128xf32> to vector<128x128xf32>
    %48 = tpu.iota {dimensions = array<i32: 0>} : vector<128x128xi32>
    %49 = tpu.iota {dimensions = array<i32: 1>} : vector<128x128xi32>
    %50 = arith.cmpi eq, %48, %49 : vector<128x128xi32>
    %cst_58 = arith.constant 0.000000e+00 : f32
    %51 = vector.broadcast %cst_58 : f32 to vector<128x128xf32>
    %52 = arith.select %50, %47, %51 : vector<128x128xi1>, vector<128x128xf32>
    %cst_59 = arith.constant dense<0.000000e+00> : vector<128xf32>
    %53 = vector.multi_reduction <add>, %52, %cst_59 [1] : vector<128x128xf32> to vector<128xf32>
    %54 = vector.shape_cast %53 : vector<128xf32> to vector<128x1xf32>
    %c0_60 = arith.constant 0 : index
    %c0_61 = arith.constant 0 : index
    %55 = vector.load %arg12[%c0_60, %c0_61] : memref<128x32xbf16, #tpu.memory_space<vmem>>, vector<128x32xbf16>
    %56 = arith.extf %55 : vector<128x32xbf16> to vector<128x32xf32>
    %57 = vector.broadcast %54 : vector<128x1xf32> to vector<128x32xf32>
    %58 = arith.mulf %56, %57 : vector<128x32xf32>
    %59 = arith.truncf %58 : vector<128x32xf32> to vector<128x32xbf16>
    %c0_62 = arith.constant 0 : index
    %c0_63 = arith.constant 0 : index
    %60 = vector.load %arg13[%c0_62, %c0_63] : memref<1x32xf32, #tpu.memory_space<vmem>>, vector<1x32xf32>
    %c0_64 = arith.constant 0 : index
    %c0_65 = arith.constant 0 : index
    %61 = vector.load %arg14[%c0_64, %c0_65] : memref<1x32xf32, #tpu.memory_space<vmem>>, vector<1x32xf32>
    %c0_i32_66 = arith.constant 0 : i32
    %c2_i32_67 = arith.constant 2 : i32
    %62 = arith.addi %c0_i32_66, %c2_i32_67 : i32
    %c1_i32_68 = arith.constant 1 : i32
    scf.for %arg18 = %c0_i32_66 to %62 step %c1_i32_68  : i32 {
      %c8_i32 = arith.constant 8 : i32
      %63 = arith.muli %arg18, %c8_i32 : i32
      %64 = arith.index_cast %63 : i32 to index
      %c0_70 = arith.constant 0 : index
      %c0_71 = arith.constant 0 : index
      %65 = vector.load %arg17[%64, %c0_70, %c0_71] : memref<16x16x128xbf16, #tpu.memory_space<vmem>>, vector<8x16x128xbf16>
      %66 = vector.shape_cast %65 : vector<8x16x128xbf16> to vector<128x128xbf16>
      %cst_72 = arith.constant dense<0.000000e+00> : vector<128x32xf32>
      %67 = tpu.matmul %66, %59, %cst_72 {dimension_numbers = #tpu.dot_dimension_numbers<[1], [0], [0], [1], [0, 0, 1, 1], [], []>} : vector<128x128xbf16>, vector<128x32xbf16>, vector<128x32xf32> -> vector<128x32xf32>
      %68 = vector.broadcast %60 : vector<1x32xf32> to vector<128x32xf32>
      %69 = arith.mulf %67, %68 : vector<128x32xf32>
      %70 = vector.broadcast %61 : vector<1x32xf32> to vector<128x32xf32>
      %71 = arith.addf %69, %70 : vector<128x32xf32>
      %c0_73 = arith.constant 0 : index
      %72 = arith.index_cast %63 : i32 to index
      %c0_74 = arith.constant 0 : index
      %c0_75 = arith.constant 0 : index
      %73 = vector.load %arg1[%c0_73, %72, %c0_74, %c0_75] : memref<1x16x16x32xbf16, #tpu.memory_space<vmem>>, vector<1x8x16x32xbf16>
      %74 = vector.shape_cast %73 : vector<1x8x16x32xbf16> to vector<8x16x32xbf16>
      %75 = vector.shape_cast %74 : vector<8x16x32xbf16> to vector<128x32xbf16>
      %76 = arith.extf %75 : vector<128x32xbf16> to vector<128x32xf32>
      %77 = arith.addf %71, %76 : vector<128x32xf32>
      %78 = vector.shape_cast %77 : vector<128x32xf32> to vector<8x16x32xf32>
      %c0_76 = arith.constant 0 : index
      %79 = arith.index_cast %63 : i32 to index
      %c0_77 = arith.constant 0 : index
      %c0_78 = arith.constant 0 : index
      %80 = vector.load %arg15[%c0_76, %79, %c0_77, %c0_78] : memref<1x16x16x32xf32, #tpu.memory_space<vmem>>, vector<1x8x16x32xf32>
      %81 = vector.shape_cast %80 : vector<1x8x16x32xf32> to vector<8x16x32xf32>
      %82 = vector.shape_cast %78 : vector<8x16x32xf32> to vector<1x8x16x32xf32>
      tpu.vector_store %arg15[%c0_76, %79, %c0_77, %c0_78], %82 {strides = array<i32>} : memref<1x16x16x32xf32, #tpu.memory_space<vmem>>, vector<1x8x16x32xf32>,
    }
    %c2_i32_69 = arith.constant 2 : i32
    return
  }
  func.func @transform_0(%arg0: i32) -> (i32, i32, i32, i32) {
    %c0_i32 = arith.constant 0 : i32
    %c0_i32_0 = arith.constant 0 : i32
    %c0_i32_1 = arith.constant 0 : i32
    %c0_i32_2 = arith.constant 0 : i32
    return %arg0, %c0_i32, %c0_i32_0, %c0_i32_1 : i32, i32, i32, i32
  }
  func.func @transform_1(%arg0: i32) -> (i32, i32) {
    %c0_i32 = arith.constant 0 : i32
    %c0_i32_0 = arith.constant 0 : i32
    %c0_i32_1 = arith.constant 0 : i32
    return %c0_i32, %c0_i32_0 : i32, i32
  }
  func.func @transform_2(%arg0: i32) -> (i32, i32) {
    %c0_i32 = arith.constant 0 : i32
    %c0_i32_0 = arith.constant 0 : i32
    %c0_i32_1 = arith.constant 0 : i32
    return %c0_i32, %c0_i32_0 : i32, i32
  }
  func.func @transform_3(%arg0: i32) -> (i32, i32) {
    %c0_i32 = arith.constant 0 : i32
    %c0_i32_0 = arith.constant 0 : i32
    %c0_i32_1 = arith.constant 0 : i32
    return %c0_i32, %c0_i32_0 : i32, i32
  }
  func.func @transform_4(%arg0: i32) -> (i32, i32, i32) {
    %c0_i32 = arith.constant 0 : i32
    %c0_i32_0 = arith.constant 0 : i32
    %c0_i32_1 = arith.constant 0 : i32
    %c0_i32_2 = arith.constant 0 : i32
    return %c0_i32, %c0_i32_0, %c0_i32_1 : i32, i32, i32
  }
  func.func @transform_5(%arg0: i32) -> (i32, i32) {
    %c0_i32 = arith.constant 0 : i32
    %c0_i32_0 = arith.constant 0 : i32
    %c0_i32_1 = arith.constant 0 : i32
    return %c0_i32, %c0_i32_0 : i32, i32
  }
  func.func @transform_6(%arg0: i32) -> (i32, i32) {
    %c0_i32 = arith.constant 0 : i32
    %c0_i32_0 = arith.constant 0 : i32
    %c0_i32_1 = arith.constant 0 : i32
    return %c0_i32, %c0_i32_0 : i32, i32
  }
  func.func @transform_7(%arg0: i32) -> (i32, i32) {
    %c0_i32 = arith.constant 0 : i32
    %c0_i32_0 = arith.constant 0 : i32
    %c0_i32_1 = arith.constant 0 : i32
    return %c0_i32, %c0_i32_0 : i32, i32
  }
  func.func @transform_8(%arg0: i32) -> (i32, i32) {
    %c0_i32 = arith.constant 0 : i32
    %c0_i32_0 = arith.constant 0 : i32
    %c0_i32_1 = arith.constant 0 : i32
    return %c0_i32, %c0_i32_0 : i32, i32
  }
  func.func @transform_9(%arg0: i32) -> (i32, i32) {
    %c0_i32 = arith.constant 0 : i32
    %c0_i32_0 = arith.constant 0 : i32
    %c0_i32_1 = arith.constant 0 : i32
    return %c0_i32, %c0_i32_0 : i32, i32
  }
  func.func @transform_10(%arg0: i32) -> (i32, i32) {
    %c0_i32 = arith.constant 0 : i32
    %c0_i32_0 = arith.constant 0 : i32
    %c0_i32_1 = arith.constant 0 : i32
    return %c0_i32, %c0_i32_0 : i32, i32
  }
  func.func @transform_11(%arg0: i32) -> (i32, i32) {
    %c0_i32 = arith.constant 0 : i32
    %c0_i32_0 = arith.constant 0 : i32
    %c0_i32_1 = arith.constant 0 : i32
    return %c0_i32, %c0_i32_0 : i32, i32
  }
  func.func @transform_12(%arg0: i32) -> (i32, i32) {
    %c0_i32 = arith.constant 0 : i32
    %c0_i32_0 = arith.constant 0 : i32
    %c0_i32_1 = arith.constant 0 : i32
    return %c0_i32, %c0_i32_0 : i32, i32
  }
  func.func @transform_13(%arg0: i32) -> (i32, i32) {
    %c0_i32 = arith.constant 0 : i32
    %c0_i32_0 = arith.constant 0 : i32
    %c0_i32_1 = arith.constant 0 : i32
    return %c0_i32, %c0_i32_0 : i32, i32
  }
  func.func @transform_14(%arg0: i32) -> (i32, i32, i32, i32) {
    %c0_i32 = arith.constant 0 : i32
    %c0_i32_0 = arith.constant 0 : i32
    %c0_i32_1 = arith.constant 0 : i32
    %c0_i32_2 = arith.constant 0 : i32
    return %arg0, %c0_i32, %c0_i32_0, %c0_i32_1 : i32, i32, i32, i32
  }
}

</mosaic_0001>

<llo_original>
// kernel: tpu_custom_call.1
$region0: #{tpu_custom_call.1}
  #allocation0 [shape = 'u32[]', space=smem, size = 0x4, offset = 0x4, fixed_abs, tag = 'smem constant byte address 0x4 - core index']
  #allocation1 [shape = 'u32[144,128]{1,0:T(1,128)}', space=vmem, size = 0x12000, scoped, tag = 'internal scratch']
  #allocation2 [shape = 'bf16[18,32,128]{2,1,0:T(8,128)(2,1)}', space=vmem, size = 0x24000, scoped, tag = 'scratch operand']
  #allocation3 [shape = 'bf16[16,16,128]{2,1,0:T(8,128)(2,1)}', space=vmem, size = 0x10000, scoped, tag = 'scratch operand']
  %s0 = inlined_call_operand.hbm [shape: bf16[2,16,16,32], index: 0, kind: input, shape index: {}]
  %s1 = inlined_call_operand.vmem [shape: bf16[32,128], index: 1, kind: input, shape index: {}]
  %s2 = inlined_call_operand.vmem [shape: f32[1,128], index: 2, kind: input, shape index: {}]
  %s3 = inlined_call_operand.vmem [shape: f32[1,128], index: 3, kind: input, shape index: {}]
  %s4 = inlined_call_operand.vmem [shape: f32[3,3,128], index: 4, kind: input, shape index: {}]
  %s5 = inlined_call_operand.vmem [shape: f32[1,128], index: 5, kind: input, shape index: {}]
  %s6 = inlined_call_operand.vmem [shape: f32[1,128], index: 6, kind: input, shape index: {}]
  %s7 = inlined_call_operand.vmem [shape: bf16[128,8], index: 7, kind: input, shape index: {}]
  %s8 = inlined_call_operand.vmem [shape: f32[1,8], index: 8, kind: input, shape index: {}]
  %s9 = inlined_call_operand.vmem [shape: bf16[8,128], index: 9, kind: input, shape index: {}]
  %s10 = inlined_call_operand.vmem [shape: f32[1,128], index: 10, kind: input, shape index: {}]
  %s11 = inlined_call_operand.vmem [shape: bf16[128,32], index: 11, kind: input, shape index: {}]
  %s12 = inlined_call_operand.vmem [shape: f32[1,32], index: 12, kind: input, shape index: {}]
  %s13 = inlined_call_operand.vmem [shape: f32[1,32], index: 13, kind: input, shape index: {}]
  %s14 = inlined_call_operand.hbm [shape: f32[2,16,16,32], index: 14, kind: output, shape index: {}]
  %s15 = sld [smem:[#allocation0]]
  $region114: #{tpu_custom_call.1} parent=0
    _
  %s17 = ssub.s32 1, %s15
  %s18 = scalar_select 0, %s17, %s15
  $region1: #{tpu_custom_call.1} parent=0
    #allocation4 [shape = 'u8[131072]{0}', space=vmem, size = 0x20000, scoped, tag = 'input window, operand 0']
    #allocation5 [shape = 's32[2]{0}', space=sflag, size = 0x8, scoped, tag = 'scoped memory for tpu_custom_call.1']
    #allocation6 [shape = 's32[2]{0}', space=sflag, size = 0x8, scoped, tag = 'scoped memory for tpu_custom_call.1']
    #allocation7 [shape = 'u8[262144]{0}', space=vmem, size = 0x40000, scoped, tag = 'output window, operand 0']
    %19 = vsyncpa [#allocation5], 0
    %s20 = scalar_lea.sflag [#allocation5], 1
    %21 = vsyncpa %s20, 0
    %22 = vsyncpa [#allocation6], 0
    %s23 = scalar_lea.sflag [#allocation6], 1
    %24 = vsyncpa %s23, 0
    loop: start=0, step=1, limit=4
    $region2: #{tpu_custom_call.1} parent=1 // loop_pre_header
      _
    $region3: #{tpu_custom_call.1} parent=1 // loop_header
      %s26 = sphi 0, %s30
      %p27 = scmp.ge.s32.totalorder %s26, 4
      %s36 = sphi 0, %s38
      %s39 = sphi 0, %s36
      %s40 = sphi 0, %s39
      %s56 = sphi 0, %s40
      %s60 = sphi 0, %s60
      %s62 = sphi 0, %s60
      %s63 = sphi 0, %s62
      %s77 = sphi 0, %s63
      %s81 = sphi 0, %s81
      %s83 = sphi 0, %s81
      %s84 = sphi 0, %s83
      %s98 = sphi 0, %s84
      %s102 = sphi 0, %s102
      %s104 = sphi 0, %s102
      %s105 = sphi 0, %s104
      %s119 = sphi 0, %s105
      %s123 = sphi 0, %s123
      %s125 = sphi 0, %s123
      %s126 = sphi 0, %s125
      %s140 = sphi 0, %s126
      %s144 = sphi 0, %s144
      %s146 = sphi 0, %s144
      %s147 = sphi 0, %s146
      %s161 = sphi 0, %s147
      %s165 = sphi 0, %s165
      %s167 = sphi 0, %s165
      %s168 = sphi 0, %s167
      %s182 = sphi 0, %s168
      %s186 = sphi 0, %s186
      %s188 = sphi 0, %s186
      %s189 = sphi 0, %s188
      %s203 = sphi 0, %s189
      %s207 = sphi 0, %s207
      %s209 = sphi 0, %s207
      %s210 = sphi 0, %s209
      %s224 = sphi 0, %s210
      %s228 = sphi 0, %s228
      %s230 = sphi 0, %s228
      %s231 = sphi 0, %s230
      %s245 = sphi 0, %s231
      %s249 = sphi 0, %s249
      %s251 = sphi 0, %s249
      %s252 = sphi 0, %s251
      %s266 = sphi 0, %s252
      %s270 = sphi 0, %s270
      %s272 = sphi 0, %s270
      %s273 = sphi 0, %s272
      %s287 = sphi 0, %s273
      %s291 = sphi 0, %s291
      %s293 = sphi 0, %s291
      %s294 = sphi 0, %s293
      %s308 = sphi 0, %s294
      %s312 = sphi 0, %s312
      %s314 = sphi 0, %s312
      %s315 = sphi 0, %s314
      %s329 = sphi 0, %s315
      %s335 = sphi 0, %s337
      %s338 = sphi 0, %s335
      %s339 = sphi 0, %s338
      %s355 = sphi 0, %s339
    $region4: #{tpu_custom_call.1} parent=1 // loop_header_branch
      %29 = sbr.rel (%p27) target = $region8
    $region5: #{tpu_custom_call.1} parent=1 // loop_body
      %s31 = ssub.s32 %s26, 1
      %s32 = ssub.s32 %s26, 2
      %s33 = sadd.s32 %s26, 1
      %s34 = ssub.s32 %s26, %s33
      %p35 = scmp.eq.s32.totalorder %s34, 0
      %s37 = sadd.s32 %s36, 1
      %s38 = scalar_select %p35, %s36, %s37
      %p41 = pneg %p35
      %p42 = scmp.eq.s32.totalorder %s26, 1
      %p43 = por %p41, %p42
      %p44 = scmp.ne.s32.totalorder %s36, %s39
      %p45 = scmp.eq.s32.totalorder %s26, 0
      %p46 = por %p44, %p45
      %p47 = scmp.ne.s32.totalorder %s36, %s39
      %p48 = scmp.eq.s32.totalorder %s31, 1
      %p49 = por %p47, %p48
      %p50 = scmp.ne.s32.totalorder %s39, %s40
      %p51 = scmp.eq.s32.totalorder %s31, 0
      %p52 = por %p50, %p51
      %p53 = scmp.ne.s32.totalorder %s39, %s40
      %p54 = scmp.eq.s32.totalorder %s32, 1
      %p55 = por %p53, %p54
      %p57 = scmp.ne.s32.totalorder %s40, %s56
      %p58 = scmp.eq.s32.totalorder %s32, 0
      %p59 = por %p57, %p58
      %s61 = sadd.s32 %s60, 1
      %p64 = scmp.eq.s32.totalorder %s26, 1
      %p65 = scmp.ne.s32.totalorder %s60, %s62
      %p66 = scmp.eq.s32.totalorder %s26, 0
      %p67 = por %p65, %p66
      %p68 = scmp.ne.s32.totalorder %s60, %s62
      %p69 = scmp.eq.s32.totalorder %s31, 1
      %p70 = por %p68, %p69
      %p71 = scmp.ne.s32.totalorder %s62, %s63
      %p72 = scmp.eq.s32.totalorder %s31, 0
      %p73 = por %p71, %p72
      %p74 = scmp.ne.s32.totalorder %s62, %s63
      %p75 = scmp.eq.s32.totalorder %s32, 1
      %p76 = por %p74, %p75
      %p78 = scmp.ne.s32.totalorder %s63, %s77
      %p79 = scmp.eq.s32.totalorder %s32, 0
      %p80 = por %p78, %p79
      %s82 = sadd.s32 %s81, 1
      %p85 = scmp.eq.s32.totalorder %s26, 1
      %p86 = scmp.ne.s32.totalorder %s81, %s83
      %p87 = scmp.eq.s32.totalorder %s26, 0
      %p88 = por %p86, %p87
      %p89 = scmp.ne.s32.totalorder %s81, %s83
      %p90 = scmp.eq.s32.totalorder %s31, 1
      %p91 = por %p89, %p90
      %p92 = scmp.ne.s32.totalorder %s83, %s84
      %p93 = scmp.eq.s32.totalorder %s31, 0
      %p94 = por %p92, %p93
      %p95 = scmp.ne.s32.totalorder %s83, %s84
      %p96 = scmp.eq.s32.totalorder %s32, 1
      %p97 = por %p95, %p96
      %p99 = scmp.ne.s32.totalorder %s84, %s98
      %p100 = scmp.eq.s32.totalorder %s32, 0
      %p101 = por %p99, %p100
      %s103 = sadd.s32 %s102, 1
      %p106 = scmp.eq.s32.totalorder %s26, 1
      %p107 = scmp.ne.s32.totalorder %s102, %s104
      %p108 = scmp.eq.s32.totalorder %s26, 0
      %p109 = por %p107, %p108
      %p110 = scmp.ne.s32.totalorder %s102, %s104
      %p111 = scmp.eq.s32.totalorder %s31, 1
      %p112 = por %p110, %p111
      %p113 = scmp.ne.s32.totalorder %s104, %s105
      %p114 = scmp.eq.s32.totalorder %s31, 0
      %p115 = por %p113, %p114
      %p116 = scmp.ne.s32.totalorder %s104, %s105
      %p117 = scmp.eq.s32.totalorder %s32, 1
      %p118 = por %p116, %p117
      %p120 = scmp.ne.s32.totalorder %s105, %s119
      %p121 = scmp.eq.s32.totalorder %s32, 0
      %p122 = por %p120, %p121
      %s124 = sadd.s32 %s123, 1
      %p127 = scmp.eq.s32.totalorder %s26, 1
      %p128 = scmp.ne.s32.totalorder %s123, %s125
      %p129 = scmp.eq.s32.totalorder %s26, 0
      %p130 = por %p128, %p129
      %p131 = scmp.ne.s32.totalorder %s123, %s125
      %p132 = scmp.eq.s32.totalorder %s31, 1
      %p133 = por %p131, %p132
      %p134 = scmp.ne.s32.totalorder %s125, %s126
      %p135 = scmp.eq.s32.totalorder %s31, 0
      %p136 = por %p134, %p135
      %p137 = scmp.ne.s32.totalorder %s125, %s126
      %p138 = scmp.eq.s32.totalorder %s32, 1
      %p139 = por %p137, %p138
      %p141 = scmp.ne.s32.totalorder %s126, %s140
      %p142 = scmp.eq.s32.totalorder %s32, 0
      %p143 = por %p141, %p142
      %s145 = sadd.s32 %s144, 1
      %p148 = scmp.eq.s32.totalorder %s26, 1
      %p149 = scmp.ne.s32.totalorder %s144, %s146
      %p150 = scmp.eq.s32.totalorder %s26, 0
      %p151 = por %p149, %p150
      %p152 = scmp.ne.s32.totalorder %s144, %s146
      %p153 = scmp.eq.s32.totalorder %s31, 1
      %p154 = por %p152, %p153
      %p155 = scmp.ne.s32.totalorder %s146, %s147
      %p156 = scmp.eq.s32.totalorder %s31, 0
      %p157 = por %p155, %p156
      %p158 = scmp.ne.s32.totalorder %s146, %s147
      %p159 = scmp.eq.s32.totalorder %s32, 1
      %p160 = por %p158, %p159
      %p162 = scmp.ne.s32.totalorder %s147, %s161
      %p163 = scmp.eq.s32.totalorder %s32, 0
      %p164 = por %p162, %p163
      %s166 = sadd.s32 %s165, 1
      %p169 = scmp.eq.s32.totalorder %s26, 1
      %p170 = scmp.ne.s32.totalorder %s165, %s167
      %p171 = scmp.eq.s32.totalorder %s26, 0
      %p172 = por %p170, %p171
      %p173 = scmp.ne.s32.totalorder %s165, %s167
      %p174 = scmp.eq.s32.totalorder %s31, 1
      %p175 = por %p173, %p174
      %p176 = scmp.ne.s32.totalorder %s167, %s168
      %p177 = scmp.eq.s32.totalorder %s31, 0
      %p178 = por %p176, %p177
      %p179 = scmp.ne.s32.totalorder %s167, %s168
      %p180 = scmp.eq.s32.totalorder %s32, 1
      %p181 = por %p179, %p180
      %p183 = scmp.ne.s32.totalorder %s168, %s182
      %p184 = scmp.eq.s32.totalorder %s32, 0
      %p185 = por %p183, %p184
      %s187 = sadd.s32 %s186, 1
      %p190 = scmp.eq.s32.totalorder %s26, 1
      %p191 = scmp.ne.s32.totalorder %s186, %s188
      %p192 = scmp.eq.s32.totalorder %s26, 0
      %p193 = por %p191, %p192
      %p194 = scmp.ne.s32.totalorder %s186, %s188
      %p195 = scmp.eq.s32.totalorder %s31, 1
      %p196 = por %p194, %p195
      %p197 = scmp.ne.s32.totalorder %s188, %s189
      %p198 = scmp.eq.s32.totalorder %s31, 0
      %p199 = por %p197, %p198
      %p200 = scmp.ne.s32.totalorder %s188, %s189
      %p201 = scmp.eq.s32.totalorder %s32, 1
      %p202 = por %p200, %p201
      %p204 = scmp.ne.s32.totalorder %s189, %s203
      %p205 = scmp.eq.s32.totalorder %s32, 0
      %p206 = por %p204, %p205
      %s208 = sadd.s32 %s207, 1
      %p211 = scmp.eq.s32.totalorder %s26, 1
      %p212 = scmp.ne.s32.totalorder %s207, %s209
      %p213 = scmp.eq.s32.totalorder %s26, 0
      %p214 = por %p212, %p213
      %p215 = scmp.ne.s32.totalorder %s207, %s209
      %p216 = scmp.eq.s32.totalorder %s31, 1
      %p217 = por %p215, %p216
      %p218 = scmp.ne.s32.totalorder %s209, %s210
      %p219 = scmp.eq.s32.totalorder %s31, 0
      %p220 = por %p218, %p219
      %p221 = scmp.ne.s32.totalorder %s209, %s210
      %p222 = scmp.eq.s32.totalorder %s32, 1
      %p223 = por %p221, %p222
      %p225 = scmp.ne.s32.totalorder %s210, %s224
      %p226 = scmp.eq.s32.totalorder %s32, 0
      %p227 = por %p225, %p226
      %s229 = sadd.s32 %s228, 1
      %p232 = scmp.eq.s32.totalorder %s26, 1
      %p233 = scmp.ne.s32.totalorder %s228, %s230
      %p234 = scmp.eq.s32.totalorder %s26, 0
      %p235 = por %p233, %p234
      %p236 = scmp.ne.s32.totalorder %s228, %s230
      %p237 = scmp.eq.s32.totalorder %s31, 1
      %p238 = por %p236, %p237
      %p239 = scmp.ne.s32.totalorder %s230, %s231
      %p240 = scmp.eq.s32.totalorder %s31, 0
      %p241 = por %p239, %p240
      %p242 = scmp.ne.s32.totalorder %s230, %s231
      %p243 = scmp.eq.s32.totalorder %s32, 1
      %p244 = por %p242, %p243
      %p246 = scmp.ne.s32.totalorder %s231, %s245
      %p247 = scmp.eq.s32.totalorder %s32, 0
      %p248 = por %p246, %p247
      %s250 = sadd.s32 %s249, 1
      %p253 = scmp.eq.s32.totalorder %s26, 1
      %p254 = scmp.ne.s32.totalorder %s249, %s251
      %p255 = scmp.eq.s32.totalorder %s26, 0
      %p256 = por %p254, %p255
      %p257 = scmp.ne.s32.totalorder %s249, %s251
      %p258 = scmp.eq.s32.totalorder %s31, 1
      %p259 = por %p257, %p258
      %p260 = scmp.ne.s32.totalorder %s251, %s252
      %p261 = scmp.eq.s32.totalorder %s31, 0
      %p262 = por %p260, %p261
      %p263 = scmp.ne.s32.totalorder %s251, %s252
      %p264 = scmp.eq.s32.totalorder %s32, 1
      %p265 = por %p263, %p264
      %p267 = scmp.ne.s32.totalorder %s252, %s266
      %p268 = scmp.eq.s32.totalorder %s32, 0
      %p269 = por %p267, %p268
      %s271 = sadd.s32 %s270, 1
      %p274 = scmp.eq.s32.totalorder %s26, 1
      %p275 = scmp.ne.s32.totalorder %s270, %s272
      %p276 = scmp.eq.s32.totalorder %s26, 0
      %p277 = por %p275, %p276
      %p278 = scmp.ne.s32.totalorder %s270, %s272
      %p279 = scmp.eq.s32.totalorder %s31, 1
      %p280 = por %p278, %p279
      %p281 = scmp.ne.s32.totalorder %s272, %s273
      %p282 = scmp.eq.s32.totalorder %s31, 0
      %p283 = por %p281, %p282
      %p284 = scmp.ne.s32.totalorder %s272, %s273
      %p285 = scmp.eq.s32.totalorder %s32, 1
      %p286 = por %p284, %p285
      %p288 = scmp.ne.s32.totalorder %s273, %s287
      %p289 = scmp.eq.s32.totalorder %s32, 0
      %p290 = por %p288, %p289
      %s292 = sadd.s32 %s291, 1
      %p295 = scmp.eq.s32.totalorder %s26, 1
      %p296 = scmp.ne.s32.totalorder %s291, %s293
      %p297 = scmp.eq.s32.totalorder %s26, 0
      %p298 = por %p296, %p297
      %p299 = scmp.ne.s32.totalorder %s291, %s293
      %p300 = scmp.eq.s32.totalorder %s31, 1
      %p301 = por %p299, %p300
      %p302 = scmp.ne.s32.totalorder %s293, %s294
      %p303 = scmp.eq.s32.totalorder %s31, 0
      %p304 = por %p302, %p303
      %p305 = scmp.ne.s32.totalorder %s293, %s294
      %p306 = scmp.eq.s32.totalorder %s32, 1
      %p307 = por %p305, %p306
      %p309 = scmp.ne.s32.totalorder %s294, %s308
      %p310 = scmp.eq.s32.totalorder %s32, 0
      %p311 = por %p309, %p310
      %s313 = sadd.s32 %s312, 1
      %p316 = scmp.eq.s32.totalorder %s26, 1
      %p317 = scmp.ne.s32.totalorder %s312, %s314
      %p318 = scmp.eq.s32.totalorder %s26, 0
      %p319 = por %p317, %p318
      %p320 = scmp.ne.s32.totalorder %s312, %s314
      %p321 = scmp.eq.s32.totalorder %s31, 1
      %p322 = por %p320, %p321
      %p323 = scmp.ne.s32.totalorder %s314, %s315
      %p324 = scmp.eq.s32.totalorder %s31, 0
      %p325 = por %p323, %p324
      %p326 = scmp.ne.s32.totalorder %s314, %s315
      %p327 = scmp.eq.s32.totalorder %s32, 1
      %p328 = por %p326, %p327
      %p330 = scmp.ne.s32.totalorder %s315, %s329
      %p331 = scmp.eq.s32.totalorder %s32, 0
      %p332 = por %p330, %p331
      %s333 = ssub.s32 %s26, %s33
      %p334 = scmp.eq.s32.totalorder %s333, 0
      %s336 = sadd.s32 %s335, 1
      %s337 = scalar_select %p334, %s335, %s336
      %p340 = pneg %p334
      %p341 = scmp.eq.s32.totalorder %s26, 1
      %p342 = por %p340, %p341
      %p343 = scmp.ne.s32.totalorder %s335, %s338
      %p344 = scmp.eq.s32.totalorder %s26, 0
      %p345 = por %p343, %p344
      %p346 = scmp.ne.s32.totalorder %s335, %s338
      %p347 = scmp.eq.s32.totalorder %s31, 1
      %p348 = por %p346, %p347
      %p349 = scmp.ne.s32.totalorder %s338, %s339
      %p350 = scmp.eq.s32.totalorder %s31, 0
      %p351 = por %p349, %p350
      %p352 = scmp.ne.s32.totalorder %s338, %s339
      %p353 = scmp.eq.s32.totalorder %s32, 1
      %p354 = por %p352, %p353
      %p356 = scmp.ne.s32.totalorder %s339, %s355
      %p357 = scmp.eq.s32.totalorder %s32, 0
      %p358 = por %p356, %p357
      %p359 = scmp.le.s32.totalorder 1, %s26
      %p360 = scmp.lt.s32.totalorder %s26, 3
      %p361 = pnand %p359, %p360
      %p362 = pneg %p361
      // Predicated region
      $region9: #{tpu_custom_call.1} parent=5 // pred_check
        _
      $region10: #{tpu_custom_call.1} parent=5 // pred_check_branch
        %364 = sbr.rel (%p361) target = $region12
      $region11: #{tpu_custom_call.1} parent=5 // pred_region
        %s365 = ssub.s32 %s26, 1
        // Predicated region
        $region13: #{tpu_custom_call.1} parent=11 // pred_check
          %p366 = pneg %p73
        $region14: #{tpu_custom_call.1} parent=11 // pred_check_branch
          %368 = sbr.rel (%p366) target = $region16
        $region15: #{tpu_custom_call.1} parent=11 // pred_region
          _
        $region16: #{tpu_custom_call.1} parent=11 // pred_fallthru
          _
        // Predicated region
        $region17: #{tpu_custom_call.1} parent=11 // pred_check
          %p369 = pneg %p94
        $region18: #{tpu_custom_call.1} parent=11 // pred_check_branch
          %371 = sbr.rel (%p369) target = $region20
        $region19: #{tpu_custom_call.1} parent=11 // pred_region
          _
        $region20: #{tpu_custom_call.1} parent=11 // pred_fallthru
          _
        // Predicated region
        $region21: #{tpu_custom_call.1} parent=11 // pred_check
          %p372 = pneg %p115
        $region22: #{tpu_custom_call.1} parent=11 // pred_check_branch
          %374 = sbr.rel (%p372) target = $region24
        $region23: #{tpu_custom_call.1} parent=11 // pred_region
          _
        $region24: #{tpu_custom_call.1} parent=11 // pred_fallthru
          _
        // Predicated region
        $region25: #{tpu_custom_call.1} parent=11 // pred_check
          %p375 = pneg %p136
        $region26: #{tpu_custom_call.1} parent=11 // pred_check_branch
          %377 = sbr.rel (%p375) target = $region28
        $region27: #{tpu_custom_call.1} parent=11 // pred_region
          _
        $region28: #{tpu_custom_call.1} parent=11 // pred_fallthru
          _
        // Predicated region
        $region29: #{tpu_custom_call.1} parent=11 // pred_check
          %p378 = pneg %p157
        $region30: #{tpu_custom_call.1} parent=11 // pred_check_branch
          %380 = sbr.rel (%p378) target = $region32
        $region31: #{tpu_custom_call.1} parent=11 // pred_region
          _
        $region32: #{tpu_custom_call.1} parent=11 // pred_fallthru
          _
        // Predicated region
        $region33: #{tpu_custom_call.1} parent=11 // pred_check
          %p381 = pneg %p178
        $region34: #{tpu_custom_call.1} parent=11 // pred_check_branch
          %383 = sbr.rel (%p381) target = $region36
        $region35: #{tpu_custom_call.1} parent=11 // pred_region
          _
        $region36: #{tpu_custom_call.1} parent=11 // pred_fallthru
          _
        // Predicated region
        $region37: #{tpu_custom_call.1} parent=11 // pred_check
          %p384 = pneg %p199
        $region38: #{tpu_custom_call.1} parent=11 // pred_check_branch
          %386 = sbr.rel (%p384) target = $region40
        $region39: #{tpu_custom_call.1} parent=11 // pred_region
          _
        $region40: #{tpu_custom_call.1} parent=11 // pred_fallthru
          _
        // Predicated region
        $region41: #{tpu_custom_call.1} parent=11 // pred_check
          %p387 = pneg %p220
        $region42: #{tpu_custom_call.1} parent=11 // pred_check_branch
          %389 = sbr.rel (%p387) target = $region44
        $region43: #{tpu_custom_call.1} parent=11 // pred_region
          _
        $region44: #{tpu_custom_call.1} parent=11 // pred_fallthru
          _
        // Predicated region
        $region45: #{tpu_custom_call.1} parent=11 // pred_check
          %p390 = pneg %p241
        $region46: #{tpu_custom_call.1} parent=11 // pred_check_branch
          %392 = sbr.rel (%p390) target = $region48
        $region47: #{tpu_custom_call.1} parent=11 // pred_region
          _
        $region48: #{tpu_custom_call.1} parent=11 // pred_fallthru
          _
        // Predicated region
        $region49: #{tpu_custom_call.1} parent=11 // pred_check
          %p393 = pneg %p262
        $region50: #{tpu_custom_call.1} parent=11 // pred_check_branch
          %395 = sbr.rel (%p393) target = $region52
        $region51: #{tpu_custom_call.1} parent=11 // pred_region
          _
        $region52: #{tpu_custom_call.1} parent=11 // pred_fallthru
          _
        // Predicated region
        $region53: #{tpu_custom_call.1} parent=11 // pred_check
          %p396 = pneg %p283
        $region54: #{tpu_custom_call.1} parent=11 // pred_check_branch
          %398 = sbr.rel (%p396) target = $region56
        $region55: #{tpu_custom_call.1} parent=11 // pred_region
          _
        $region56: #{tpu_custom_call.1} parent=11 // pred_fallthru
          _
        // Predicated region
        $region57: #{tpu_custom_call.1} parent=11 // pred_check
          %p399 = pneg %p304
        $region58: #{tpu_custom_call.1} parent=11 // pred_check_branch
          %401 = sbr.rel (%p399) target = $region60
        $region59: #{tpu_custom_call.1} parent=11 // pred_region
          _
        $region60: #{tpu_custom_call.1} parent=11 // pred_fallthru
          _
        // Predicated region
        $region61: #{tpu_custom_call.1} parent=11 // pred_check
          %p402 = pneg %p325
        $region62: #{tpu_custom_call.1} parent=11 // pred_check_branch
          %404 = sbr.rel (%p402) target = $region64
        $region63: #{tpu_custom_call.1} parent=11 // pred_region
          _
        $region64: #{tpu_custom_call.1} parent=11 // pred_fallthru
          _
      $region12: #{tpu_custom_call.1} parent=5 // pred_fallthru
        _
      %p405 = scmp.lt.s32.totalorder %s26, 2
      // Predicated region
      $region65: #{tpu_custom_call.1} parent=5 // pred_check
        %p406 = pneg %p405
      $region66: #{tpu_custom_call.1} parent=5 // pred_check_branch
        %408 = sbr.rel (%p406) target = $region68
      $region67: #{tpu_custom_call.1} parent=5 // pred_region
        // Predicated region
        $region69: #{tpu_custom_call.1} parent=67 // pred_check
          %p409 = pneg %p46
        $region70: #{tpu_custom_call.1} parent=67 // pred_check_branch
          %411 = sbr.rel (%p409) target = $region72
        $region71: #{tpu_custom_call.1} parent=67 // pred_region
          %s412 = sand.u32 %s36, 1
          %s413 = scalar_lea.sflag [#allocation5], %s412
          %s414 = sand.u32 %s36, 1
          %s415 = smul.addr %s414, 128
          %s416 = scalar_lea.vmem [#allocation4], %s415
          %s418 = ssub.s32 2048, 2048
          %419 = vsyncadd %s413, %s418
          %s420 = smul.addr %s26, 32
          %s421 = smul.addr %s420, 64
          %s422 = scalar_lea.hbm %s0, %s421
          %s423 = sshll.u32 %s416, 4
          %s424 = int_to_ptr.vmem [resolvable:$true] %s423
          %429 = dma.hbm_to_vmem [thread:$0]  %s422, 2048, %s424, %s413, 64, 64, 4
        $region72: #{tpu_custom_call.1} parent=67 // pred_fallthru
          _
      $region68: #{tpu_custom_call.1} parent=5 // pred_fallthru
        _
      %p430 = scmp.le.s32.totalorder 1, %s26
      %p431 = scmp.lt.s32.totalorder %s26, 3
      %p432 = pnand %p430, %p431
      %p433 = pneg %p432
      // Predicated region
      $region73: #{tpu_custom_call.1} parent=5 // pred_check
        _
      $region74: #{tpu_custom_call.1} parent=5 // pred_check_branch
        %435 = sbr.rel (%p432) target = $region76
      $region75: #{tpu_custom_call.1} parent=5 // pred_region
        %s436 = ssub.s32 %s26, 1
        %s437 = sand.u32 %s39, 1
        %s438 = scalar_lea.sflag [#allocation5], %s437
        %s439 = sand.u32 %s39, 1
        %s440 = smul.addr %s439, 128
        %s441 = scalar_lea.vmem [#allocation4], %s440
        // Predicated region
        $region77: #{tpu_custom_call.1} parent=75 // pred_check
          %p442 = pneg %p52
        $region78: #{tpu_custom_call.1} parent=75 // pred_check_branch
          %444 = sbr.rel (%p442) target = $region80
        $region79: #{tpu_custom_call.1} parent=75 // pred_region
          %445 = dma.done %s438, 2048
        $region80: #{tpu_custom_call.1} parent=75 // pred_fallthru
          _
        %s446 = sand.u32 %s39, 1
        %s447 = scalar_lea.sflag [#allocation5], %s446
        %s448 = sand.u32 %s39, 1
        %s449 = smul.addr %s448, 128
        %s450 = scalar_lea.vmem [#allocation4], %s449
        %p451 = pneg %p52
        %p452 = pneg %p49
        %p453 = pneg %p73
        %p454 = pneg %p70
        %p455 = pneg %p94
        %p456 = pneg %p91
        %p457 = pneg %p115
        %p458 = pneg %p112
        %p459 = pneg %p136
        %p460 = pneg %p133
        %p461 = pneg %p157
        %p462 = pneg %p154
        %p463 = pneg %p178
        %p464 = pneg %p175
        %p465 = pneg %p199
        %p466 = pneg %p196
        %p467 = pneg %p220
        %p468 = pneg %p217
        %p469 = pneg %p241
        %p470 = pneg %p238
        %p471 = pneg %p262
        %p472 = pneg %p259
        %p473 = pneg %p283
        %p474 = pneg %p280
        %p475 = pneg %p304
        %p476 = pneg %p301
        %p477 = pneg %p325
        %p478 = pneg %p322
        %p479 = pneg %p351
        %p480 = pneg %p348
        %s481 = sand.u32 %s338, 1
        %s482 = scalar_lea.sflag [#allocation6], %s481
        %s483 = sand.u32 %s338, 1
        %s484 = smul.addr %s483, 256
        %s485 = scalar_lea.vmem [#allocation7], %s484
        %v487 = vld [vmem:[%s1] sm:$0xf]
        %v488 = vld [vmem:[%s1 + $0x4] sm:$0xf]
        %v489 = vld [vmem:[%s1 + $0x8] sm:$0xf]
        %v490 = vld [vmem:[%s1 + $0xc] sm:$0xf]
        %v491 = vld [vmem:[%s2] sm:$0x1]
        %v492 = vld [vmem:[%s3] sm:$0x1]
        %493 = vst [vmem:[#allocation2] sm:$0xf] 0
        %494 = vst [vmem:[#allocation2 + $0x4] sm:$0xf] 0
        %495 = vst [vmem:[#allocation2 + $0x8] sm:$0xf] 0
        %496 = vst [vmem:[#allocation2 + $0xc] sm:$0xf] 0
        %s497 = scalar_lea.vmem [#allocation2], 272
        %498 = vst [vmem:[%s497] sm:$0xf] 0
        %499 = vst [vmem:[%s497 + $0x4] sm:$0xf] 0
        %500 = vst [vmem:[%s497 + $0x8] sm:$0xf] 0
        %501 = vst [vmem:[%s497 + $0xc] sm:$0xf] 0
        loop: start=0, step=1, limit=2
        $region81: #{tpu_custom_call.1} parent=75 // loop_pre_header
          _
        $region82: #{tpu_custom_call.1} parent=75 // loop_header
          %s503 = sphi 0, %s507
          %p504 = scmp.ge.s32.totalorder %s503, 2
        $region83: #{tpu_custom_call.1} parent=75 // loop_header_branch
          %506 = sbr.rel (%p504) target = $region87
        $region84: #{tpu_custom_call.1} parent=75 // loop_body
          %s508 = smul.u32 %s503, 8
          %s509 = smul.u32 %s508, 2
          %s510 = smul.addr %s509, 4
          %s511 = scalar_lea.vmem %s441, %s510 [#allocation4]
          %v512 = vld [vmem:[%s511] sm:$0xf]
          %v513 = vld [vmem:[%s511 + $0x4] sm:$0xf]
          %v514 = vld [vmem:[%s511 + $0x8] sm:$0xf]
          %v515 = vld [vmem:[%s511 + $0xc] sm:$0xf]
          %v516 = vld [vmem:[%s511 + $0x10] sm:$0xf]
          %v517 = vld [vmem:[%s511 + $0x14] sm:$0xf]
          %v518 = vld [vmem:[%s511 + $0x18] sm:$0xf]
          %v519 = vld [vmem:[%s511 + $0x1c] sm:$0xf]
          %v520 = vld [vmem:[%s511 + $0x20] sm:$0xf]
          %v521 = vld [vmem:[%s511 + $0x24] sm:$0xf]
          %v522 = vld [vmem:[%s511 + $0x28] sm:$0xf]
          %v523 = vld [vmem:[%s511 + $0x2c] sm:$0xf]
          %v524 = vld [vmem:[%s511 + $0x30] sm:$0xf]
          %v525 = vld [vmem:[%s511 + $0x34] sm:$0xf]
          %v526 = vld [vmem:[%s511 + $0x38] sm:$0xf]
          %v527 = vld [vmem:[%s511 + $0x3c] sm:$0xf]
          %v544 = vunpack.c.l.b16 %v512
          %v545 = vunpack.c.l.b16 %v513
          %v546 = vunpack.c.l.b16 %v514
          %v547 = vunpack.c.l.b16 %v515
          %v548 = vunpack.c.l.b16 %v516
          %v549 = vunpack.c.l.b16 %v517
          %v550 = vunpack.c.l.b16 %v518
          %v551 = vunpack.c.l.b16 %v519
          %v552 = vunpack.c.l.b16 %v520
          %v553 = vunpack.c.l.b16 %v521
          %v554 = vunpack.c.l.b16 %v522
          %v555 = vunpack.c.l.b16 %v523
          %v556 = vunpack.c.l.b16 %v524
          %v557 = vunpack.c.l.b16 %v525
          %v558 = vunpack.c.l.b16 %v526
          %v559 = vunpack.c.l.b16 %v527
          %v560 = vpack.c.b16 %v545, %v544
          %v561 = vpack.c.b16 %v547, %v546
          %v562 = vpack.c.b16 %v549, %v548
          %v563 = vpack.c.b16 %v551, %v550
          %v564 = vpack.c.b16 %v553, %v552
          %v565 = vpack.c.b16 %v555, %v554
          %v566 = vpack.c.b16 %v557, %v556
          %v567 = vpack.c.b16 %v559, %v558
          %v572 = vunpack.c.l.b16 %v487
          %v573 = vunpack.c.l.b16 %v488
          %v574 = vunpack.c.l.b16 %v489
          %v575 = vunpack.c.l.b16 %v490
          %v576 = vpack.c.b16 %v573, %v572
          %v577 = vpack.c.b16 %v575, %v574
          %vm580 = vcmask 261120
          %v582 = vsel %vm580, %v560, 0
          %v585 = vsel %vm580, %v561, 0
          %v588 = vsel %vm580, %v562, 0
          %v591 = vsel %vm580, %v563, 0
          %v594 = vsel %vm580, %v564, 0
          %v597 = vsel %vm580, %v565, 0
          %v600 = vsel %vm580, %v566, 0
          %v603 = vsel %vm580, %v567, 0
          %605 = vmatprep.subr.bf16.mxu0 0
          %606 = vmatpush1.bf16.msra.mxu0 0
          %607 = vmatprep.subr.bf16.mxu0 0
          %608 = vmatpush1.bf16.msra.mxu0 0
          %609 = vmatprep.subr.bf16.mxu0 0
          %610 = vmatpush1.bf16.msra.mxu0 0
          %611 = vmatprep.subr.bf16.mxu0 0
          %612 = vmatpush1.bf16.msra.mxu0 0
          %613 = vmatprep.subr.bf16.mxu0 0
          %614 = vmatpush1.bf16.msra.mxu0 0
          %615 = vmatprep.subr.bf16.mxu0 0
          %616 = vmatpush1.bf16.msra.mxu0 0
          %617 = vmatprep.subr.bf16.mxu0 0
          %618 = vmatpush1.bf16.msra.mxu0 %v577
          %619 = vmatprep.subr.bf16.mxu0 0
          %620 = vmatpush1.bf16.msra.mxu0 %v576
          %621 = vmatprep.subr.bf16.mxu0 0
          %622 = vmatpush2.bf16.msra.mxu0 0
          %623 = vmatprep.subr.bf16.mxu0 0
          %624 = vmatpush2.bf16.msra.mxu0 0
          %625 = vmatprep.subr.bf16.mxu0 0
          %626 = vmatpush2.bf16.msra.mxu0 0
          %627 = vmatprep.subr.bf16.mxu0 0
          %628 = vmatpush2.bf16.msra.mxu0 0
          %629 = vmatprep.subr.bf16.mxu0 0
          %630 = vmatpush2.bf16.msra.mxu0 0
          %631 = vmatprep.subr.bf16.mxu0 0
          %632 = vmatpush2.bf16.msra.mxu0 0
          %633 = vmatprep.subr.bf16.mxu0 0
          %634 = vmatpush2.bf16.msra.mxu0 0
          %635 = vmatprep.subr.bf16.mxu0 0
          %636 = vmatpush2.bf16.msra.mxu0 0
          %637 = vmatprep.mubr.bf16.mxu0 0
          %638 = vmatmul.mubr.bf16.gmra.mxu0 %v582
          %v639 = vpop.f32.mrf.mxu0
          %v640 = vadd.f32 0.0, %v639
          %v641 = vpop.f32.mrf.mxu0
          %v642 = vpop.f32.mrf.mxu0
          %v643 = vadd.f32 0.0, %v642
          %v644 = vpop.f32.mrf.mxu0
          %645 = vmatprep.mubr.bf16.mxu0 0
          %646 = vmatmul.mubr.bf16.gmra.mxu0 %v585
          %v647 = vpop.f32.mrf.mxu0
          %v648 = vadd.f32 0.0, %v647
          %v649 = vpop.f32.mrf.mxu0
          %v650 = vpop.f32.mrf.mxu0
          %v651 = vadd.f32 0.0, %v650
          %v652 = vpop.f32.mrf.mxu0
          %653 = vmatprep.mubr.bf16.mxu0 0
          %654 = vmatmul.mubr.bf16.gmra.mxu0 %v588
          %v655 = vpop.f32.mrf.mxu0
          %v656 = vadd.f32 0.0, %v655
          %v657 = vpop.f32.mrf.mxu0
          %v658 = vpop.f32.mrf.mxu0
          %v659 = vadd.f32 0.0, %v658
          %v660 = vpop.f32.mrf.mxu0
          %661 = vmatprep.mubr.bf16.mxu0 0
          %662 = vmatmul.mubr.bf16.gmra.mxu0 %v591
          %v663 = vpop.f32.mrf.mxu0
          %v664 = vadd.f32 0.0, %v663
          %v665 = vpop.f32.mrf.mxu0
          %v666 = vpop.f32.mrf.mxu0
          %v667 = vadd.f32 0.0, %v666
          %v668 = vpop.f32.mrf.mxu0
          %669 = vmatprep.mubr.bf16.mxu0 0
          %670 = vmatmul.mubr.bf16.gmra.mxu0 %v594
          %v671 = vpop.f32.mrf.mxu0
          %v672 = vadd.f32 0.0, %v671
          %v673 = vpop.f32.mrf.mxu0
          %v674 = vpop.f32.mrf.mxu0
          %v675 = vadd.f32 0.0, %v674
          %v676 = vpop.f32.mrf.mxu0
          %677 = vmatprep.mubr.bf16.mxu0 0
          %678 = vmatmul.mubr.bf16.gmra.mxu0 %v597
          %v679 = vpop.f32.mrf.mxu0
          %v680 = vadd.f32 0.0, %v679
          %v681 = vpop.f32.mrf.mxu0
          %v682 = vpop.f32.mrf.mxu0
          %v683 = vadd.f32 0.0, %v682
          %v684 = vpop.f32.mrf.mxu0
          %685 = vmatprep.mubr.bf16.mxu0 0
          %686 = vmatmul.mubr.bf16.gmra.mxu0 %v600
          %v687 = vpop.f32.mrf.mxu0
          %v688 = vadd.f32 0.0, %v687
          %v689 = vpop.f32.mrf.mxu0
          %v690 = vpop.f32.mrf.mxu0
          %v691 = vadd.f32 0.0, %v690
          %v692 = vpop.f32.mrf.mxu0
          %693 = vmatprep.mubr.bf16.mxu0 0
          %694 = vmatmul.mubr.bf16.gmra.mxu0 %v603
          %v695 = vpop.f32.mrf.mxu0
          %v696 = vadd.f32 0.0, %v695
          %v697 = vpop.f32.mrf.mxu0
          %v698 = vpop.f32.mrf.mxu0
          %v699 = vadd.f32 0.0, %v698
          %v700 = vpop.f32.mrf.mxu0
          %701 = vdwg.mxu0
          %v703 = vlaneseq
          %v704 = vshrl.u32 %v703, 7
          %v705 = vsub.s32 0, %v704
          %v706 = vrot.slane %v491, %v705
          %v708 = vmul.f32 %v640, %v706
          %v709 = vmul.f32 %v643, %v706
          %v710 = vmul.f32 %v648, %v706
          %v711 = vmul.f32 %v651, %v706
          %v712 = vmul.f32 %v656, %v706
          %v713 = vmul.f32 %v659, %v706
          %v714 = vmul.f32 %v664, %v706
          %v715 = vmul.f32 %v667, %v706
          %v716 = vmul.f32 %v672, %v706
          %v717 = vmul.f32 %v675, %v706
          %v718 = vmul.f32 %v680, %v706
          %v719 = vmul.f32 %v683, %v706
          %v720 = vmul.f32 %v688, %v706
          %v721 = vmul.f32 %v691, %v706
          %v722 = vmul.f32 %v696, %v706
          %v723 = vmul.f32 %v699, %v706
          %v725 = vlaneseq
          %v726 = vshrl.u32 %v725, 7
          %v727 = vsub.s32 0, %v726
          %v728 = vrot.slane %v492, %v727
          %v730 = vadd.f32 %v708, %v728
          %v731 = vadd.f32 %v709, %v728
          %v732 = vadd.f32 %v710, %v728
          %v733 = vadd.f32 %v711, %v728
          %v734 = vadd.f32 %v712, %v728
          %v735 = vadd.f32 %v713, %v728
          %v736 = vadd.f32 %v714, %v728
          %v737 = vadd.f32 %v715, %v728
          %v738 = vadd.f32 %v716, %v728
          %v739 = vadd.f32 %v717, %v728
          %v740 = vadd.f32 %v718, %v728
          %v741 = vadd.f32 %v719, %v728
          %v742 = vadd.f32 %v720, %v728
          %v743 = vadd.f32 %v721, %v728
          %v744 = vadd.f32 %v722, %v728
          %v745 = vadd.f32 %v723, %v728
          %v746 = vxor.u32 %v730, 2147483648
          %v747 = vxor.u32 %v731, 2147483648
          %v748 = vxor.u32 %v732, 2147483648
          %v749 = vxor.u32 %v733, 2147483648
          %v750 = vxor.u32 %v734, 2147483648
          %v751 = vxor.u32 %v735, 2147483648
          %v752 = vxor.u32 %v736, 2147483648
          %v753 = vxor.u32 %v737, 2147483648
          %v754 = vxor.u32 %v738, 2147483648
          %v755 = vxor.u32 %v739, 2147483648
          %v756 = vxor.u32 %v740, 2147483648
          %v757 = vxor.u32 %v741, 2147483648
          %v758 = vxor.u32 %v742, 2147483648
          %v759 = vxor.u32 %v743, 2147483648
          %v760 = vxor.u32 %v744, 2147483648
          %v761 = vxor.u32 %v745, 2147483648
          %v762 = vmul.f32 %v746, 1.442695
          %v763 = vpow.pop %v762
          %v764 = vmul.f32 %v747, 1.442695
          %v765 = vpow.pop %v764
          %v766 = vmul.f32 %v748, 1.442695
          %v767 = vpow.pop %v766
          %v768 = vmul.f32 %v749, 1.442695
          %v769 = vpow.pop %v768
          %v770 = vmul.f32 %v750, 1.442695
          %v771 = vpow.pop %v770
          %v772 = vmul.f32 %v751, 1.442695
          %v773 = vpow.pop %v772
          %v774 = vmul.f32 %v752, 1.442695
          %v775 = vpow.pop %v774
          %v776 = vmul.f32 %v753, 1.442695
          %v777 = vpow.pop %v776
          %v778 = vmul.f32 %v754, 1.442695
          %v779 = vpow.pop %v778
          %v780 = vmul.f32 %v755, 1.442695
          %v781 = vpow.pop %v780
          %v782 = vmul.f32 %v756, 1.442695
          %v783 = vpow.pop %v782
          %v784 = vmul.f32 %v757, 1.442695
          %v785 = vpow.pop %v784
          %v786 = vmul.f32 %v758, 1.442695
          %v787 = vpow.pop %v786
          %v788 = vmul.f32 %v759, 1.442695
          %v789 = vpow.pop %v788
          %v790 = vmul.f32 %v760, 1.442695
          %v791 = vpow.pop %v790
          %v792 = vmul.f32 %v761, 1.442695
          %v793 = vpow.pop %v792
          %v794 = vadd.f32 %v763, 1.0
          %v795 = vadd.f32 %v765, 1.0
          %v796 = vadd.f32 %v767, 1.0
          %v797 = vadd.f32 %v769, 1.0
          %v798 = vadd.f32 %v771, 1.0
          %v799 = vadd.f32 %v773, 1.0
          %v800 = vadd.f32 %v775, 1.0
          %v801 = vadd.f32 %v777, 1.0
          %v802 = vadd.f32 %v779, 1.0
          %v803 = vadd.f32 %v781, 1.0
          %v804 = vadd.f32 %v783, 1.0
          %v805 = vadd.f32 %v785, 1.0
          %v806 = vadd.f32 %v787, 1.0
          %v807 = vadd.f32 %v789, 1.0
          %v808 = vadd.f32 %v791, 1.0
          %v809 = vadd.f32 %v793, 1.0
          %v810 = vrcp.pop %v794
          %v811 = vmul.f32 1.0, %v810
          %v812 = vrcp.pop %v795
          %v813 = vmul.f32 1.0, %v812
          %v814 = vrcp.pop %v796
          %v815 = vmul.f32 1.0, %v814
          %v816 = vrcp.pop %v797
          %v817 = vmul.f32 1.0, %v816
          %v818 = vrcp.pop %v798
          %v819 = vmul.f32 1.0, %v818
          %v820 = vrcp.pop %v799
          %v821 = vmul.f32 1.0, %v820
          %v822 = vrcp.pop %v800
          %v823 = vmul.f32 1.0, %v822
          %v824 = vrcp.pop %v801
          %v825 = vmul.f32 1.0, %v824
          %v826 = vrcp.pop %v802
          %v827 = vmul.f32 1.0, %v826
          %v828 = vrcp.pop %v803
          %v829 = vmul.f32 1.0, %v828
          %v830 = vrcp.pop %v804
          %v831 = vmul.f32 1.0, %v830
          %v832 = vrcp.pop %v805
          %v833 = vmul.f32 1.0, %v832
          %v834 = vrcp.pop %v806
          %v835 = vmul.f32 1.0, %v834
          %v836 = vrcp.pop %v807
          %v837 = vmul.f32 1.0, %v836
          %v838 = vrcp.pop %v808
          %v839 = vmul.f32 1.0, %v838
          %v840 = vrcp.pop %v809
          %v841 = vmul.f32 1.0, %v840
          %v842 = vmul.f32 %v730, %v811
          %v843 = vmul.f32 %v731, %v813
          %v844 = vmul.f32 %v732, %v815
          %v845 = vmul.f32 %v733, %v817
          %v846 = vmul.f32 %v734, %v819
          %v847 = vmul.f32 %v735, %v821
          %v848 = vmul.f32 %v736, %v823
          %v849 = vmul.f32 %v737, %v825
          %v850 = vmul.f32 %v738, %v827
          %v851 = vmul.f32 %v739, %v829
          %v852 = vmul.f32 %v740, %v831
          %v853 = vmul.f32 %v741, %v833
          %v854 = vmul.f32 %v742, %v835
          %v855 = vmul.f32 %v743, %v837
          %v856 = vmul.f32 %v744, %v839
          %v857 = vmul.f32 %v745, %v841
          %vm874 = vcmask 1040384
          %v875 = vrot.slane %v842, 7
          %v876 = vrot.slane %v843, 7
          %v877 = vsel %vm874, %v875, %v876
          %v878 = vrot.slane %v844, 7
          %v879 = vrot.slane %v845, 7
          %v880 = vsel %vm874, %v878, %v879
          %v881 = vrot.slane %v846, 7
          %v882 = vrot.slane %v847, 7
          %v883 = vsel %vm874, %v881, %v882
          %v884 = vrot.slane %v848, 7
          %v885 = vrot.slane %v849, 7
          %v886 = vsel %vm874, %v884, %v885
          %v887 = vrot.slane %v850, 7
          %v888 = vrot.slane %v851, 7
          %v889 = vsel %vm874, %v887, %v888
          %v890 = vrot.slane %v852, 7
          %v891 = vrot.slane %v853, 7
          %v892 = vsel %vm874, %v890, %v891
          %v893 = vrot.slane %v854, 7
          %v894 = vrot.slane %v855, 7
          %v895 = vsel %vm874, %v893, %v894
          %v896 = vrot.slane %v856, 7
          %v897 = vrot.slane %v857, 7
          %v898 = vsel %vm874, %v896, %v897
          %v923 = vsel %vm874, 0.0, %v875
          %v924 = vsel %vm874, 0.0, %v878
          %v925 = vsel %vm874, 0.0, %v881
          %v926 = vsel %vm874, 0.0, %v884
          %v927 = vsel %vm874, 0.0, %v887
          %v928 = vsel %vm874, 0.0, %v890
          %v929 = vsel %vm874, 0.0, %v893
          %v930 = vsel %vm874, 0.0, %v896
          %v931 = vsel %vm874, %v876, 0.0
          %v932 = vsel %vm874, %v879, 0.0
          %v933 = vsel %vm874, %v882, 0.0
          %v934 = vsel %vm874, %v885, 0.0
          %v935 = vsel %vm874, %v888, 0.0
          %v936 = vsel %vm874, %v891, 0.0
          %v937 = vsel %vm874, %v894, 0.0
          %v938 = vsel %vm874, %v897, 0.0
          %v939 = vpack.c.bf16 %v877, %v923
          %v940 = vpack.c.bf16 0.0, %v931
          %v941 = vpack.c.bf16 %v880, %v924
          %v942 = vpack.c.bf16 0.0, %v932
          %v943 = vpack.c.bf16 %v883, %v925
          %v944 = vpack.c.bf16 0.0, %v933
          %v945 = vpack.c.bf16 %v886, %v926
          %v946 = vpack.c.bf16 0.0, %v934
          %v947 = vpack.c.bf16 %v889, %v927
          %v948 = vpack.c.bf16 0.0, %v935
          %v949 = vpack.c.bf16 %v892, %v928
          %v950 = vpack.c.bf16 0.0, %v936
          %v951 = vpack.c.bf16 %v895, %v929
          %v952 = vpack.c.bf16 0.0, %v937
          %v953 = vpack.c.bf16 %v898, %v930
          %v954 = vpack.c.bf16 0.0, %v938
          %s955 = sadd.s32 %s508, 1
          %v972 = vunpack.c.l.b16 %v939
          %v973 = vunpack.c.h.b16 %v939
          %v974 = vunpack.c.l.b16 %v940
          %v975 = vunpack.c.h.b16 %v940
          %v976 = vunpack.c.l.b16 %v941
          %v977 = vunpack.c.h.b16 %v941
          %v978 = vunpack.c.l.b16 %v942
          %v979 = vunpack.c.h.b16 %v942
          %v980 = vunpack.c.l.b16 %v943
          %v981 = vunpack.c.h.b16 %v943
          %v982 = vunpack.c.l.b16 %v944
          %v983 = vunpack.c.h.b16 %v944
          %v984 = vunpack.c.l.b16 %v945
          %v985 = vunpack.c.h.b16 %v945
          %v986 = vunpack.c.l.b16 %v946
          %v987 = vunpack.c.h.b16 %v946
          %v988 = vunpack.c.l.b16 %v947
          %v989 = vunpack.c.h.b16 %v947
          %v990 = vunpack.c.l.b16 %v948
          %v991 = vunpack.c.h.b16 %v948
          %v992 = vunpack.c.l.b16 %v949
          %v993 = vunpack.c.h.b16 %v949
          %v994 = vunpack.c.l.b16 %v950
          %v995 = vunpack.c.h.b16 %v950
          %v996 = vunpack.c.l.b16 %v951
          %v997 = vunpack.c.h.b16 %v951
          %v998 = vunpack.c.l.b16 %v952
          %v999 = vunpack.c.h.b16 %v952
          %v1000 = vunpack.c.l.b16 %v953
          %v1001 = vunpack.c.h.b16 %v953
          %v1002 = vunpack.c.l.b16 %v954
          %v1003 = vunpack.c.h.b16 %v954
          %v1004 = vpack.c.b16 %v972, %v972
          %v1005 = vpack.c.b16 %v973, %v973
          %v1006 = vpack.c.b16 %v974, %v974
          %v1007 = vpack.c.b16 %v975, %v975
          %v1008 = vpack.c.b16 %v976, %v976
          %v1009 = vpack.c.b16 %v977, %v977
          %v1010 = vpack.c.b16 %v978, %v978
          %v1011 = vpack.c.b16 %v979, %v979
          %v1012 = vpack.c.b16 %v980, %v980
          %v1013 = vpack.c.b16 %v981, %v981
          %v1014 = vpack.c.b16 %v982, %v982
          %v1015 = vpack.c.b16 %v983, %v983
          %v1016 = vpack.c.b16 %v984, %v984
          %v1017 = vpack.c.b16 %v985, %v985
          %v1018 = vpack.c.b16 %v986, %v986
          %v1019 = vpack.c.b16 %v987, %v987
          %v1020 = vpack.c.b16 %v988, %v988
          %v1021 = vpack.c.b16 %v989, %v989
          %v1022 = vpack.c.b16 %v990, %v990
          %v1023 = vpack.c.b16 %v991, %v991
          %v1024 = vpack.c.b16 %v992, %v992
          %v1025 = vpack.c.b16 %v993, %v993
          %v1026 = vpack.c.b16 %v994, %v994
          %v1027 = vpack.c.b16 %v995, %v995
          %v1028 = vpack.c.b16 %v996, %v996
          %v1029 = vpack.c.b16 %v997, %v997
          %v1030 = vpack.c.b16 %v998, %v998
          %v1031 = vpack.c.b16 %v999, %v999
          %v1032 = vpack.c.b16 %v1000, %v1000
          %v1033 = vpack.c.b16 %v1001, %v1001
          %v1034 = vpack.c.b16 %v1002, %v1002
          %v1035 = vpack.c.b16 %v1003, %v1003
          %s1068 = smul.u32 %s955, 4
          %s1069 = smul.addr %s1068, 4
          %s1070 = scalar_lea.vmem [#allocation2], %s1069
          %1071 = vst [vmem:[%s1070] sm:$0xf] %v1004
          %1072 = vst [vmem:[%s1070 + $0x4] sm:$0xf] %v1005
          %1073 = vst [vmem:[%s1070 + $0x8] sm:$0xf] %v1006
          %1074 = vst [vmem:[%s1070 + $0xc] sm:$0xf] %v1007
          %1075 = vst [vmem:[%s1070 + $0x10] sm:$0xf] %v1008
          %1076 = vst [vmem:[%s1070 + $0x14] sm:$0xf] %v1009
          %1077 = vst [vmem:[%s1070 + $0x18] sm:$0xf] %v1010
          %1078 = vst [vmem:[%s1070 + $0x1c] sm:$0xf] %v1011
          %1079 = vst [vmem:[%s1070 + $0x20] sm:$0xf] %v1012
          %1080 = vst [vmem:[%s1070 + $0x24] sm:$0xf] %v1013
          %1081 = vst [vmem:[%s1070 + $0x28] sm:$0xf] %v1014
          %1082 = vst [vmem:[%s1070 + $0x2c] sm:$0xf] %v1015
          %1083 = vst [vmem:[%s1070 + $0x30] sm:$0xf] %v1016
          %1084 = vst [vmem:[%s1070 + $0x34] sm:$0xf] %v1017
          %1085 = vst [vmem:[%s1070 + $0x38] sm:$0xf] %v1018
          %1086 = vst [vmem:[%s1070 + $0x3c] sm:$0xf] %v1019
          %1087 = vst [vmem:[%s1070 + $0x40] sm:$0xf] %v1020
          %1088 = vst [vmem:[%s1070 + $0x44] sm:$0xf] %v1021
          %1089 = vst [vmem:[%s1070 + $0x48] sm:$0xf] %v1022
          %1090 = vst [vmem:[%s1070 + $0x4c] sm:$0xf] %v1023
          %1091 = vst [vmem:[%s1070 + $0x50] sm:$0xf] %v1024
          %1092 = vst [vmem:[%s1070 + $0x54] sm:$0xf] %v1025
          %1093 = vst [vmem:[%s1070 + $0x58] sm:$0xf] %v1026
          %1094 = vst [vmem:[%s1070 + $0x5c] sm:$0xf] %v1027
          %1095 = vst [vmem:[%s1070 + $0x60] sm:$0xf] %v1028
          %1096 = vst [vmem:[%s1070 + $0x64] sm:$0xf] %v1029
          %1097 = vst [vmem:[%s1070 + $0x68] sm:$0xf] %v1030
          %1098 = vst [vmem:[%s1070 + $0x6c] sm:$0xf] %v1031
          %1099 = vst [vmem:[%s1070 + $0x70] sm:$0xf] %v1032
          %1100 = vst [vmem:[%s1070 + $0x74] sm:$0xf] %v1033
          %1101 = vst [vmem:[%s1070 + $0x78] sm:$0xf] %v1034
          %1102 = vst [vmem:[%s1070 + $0x7c] sm:$0xf] %v1035
        $region85: #{tpu_custom_call.1} parent=75 // loop_footer
          %s507 = sadd.s32 1, %s503
        $region86: #{tpu_custom_call.1} parent=75 // loop_footer_branch
          %502 = sbr.rel target = $region82
        $region87: #{tpu_custom_call.1} parent=75 // loop_exit
          _
        %v1103 = vld [vmem:[%s5] sm:$0x1]
        %v1104 = vld [vmem:[%s6] sm:$0x1]
        %v1105 = vld [vmem:[%s4] sm:$0x1]
        %v1106 = vld [vmem:[%s4 + $0x1] sm:$0x1]
        %v1107 = vld [vmem:[%s4 + $0x2] sm:$0x1]
        %s1108 = scalar_lea.vmem %s4, 4
        %v1109 = vld [vmem:[%s1108] sm:$0x1]
        %v1110 = vld [vmem:[%s1108 + $0x1] sm:$0x1]
        %v1111 = vld [vmem:[%s1108 + $0x2] sm:$0x1]
        %s1112 = scalar_lea.vmem %s4, 8
        %v1113 = vld [vmem:[%s1112] sm:$0x1]
        %v1114 = vld [vmem:[%s1112 + $0x1] sm:$0x1]
        %v1115 = vld [vmem:[%s1112 + $0x2] sm:$0x1]
        loop: start=0, step=1, limit=2
        $region88: #{tpu_custom_call.1} parent=75 // loop_pre_header
          _
        $region89: #{tpu_custom_call.1} parent=75 // loop_header
          %s1117 = sphi 0, %s1121
          %p1118 = scmp.ge.s32.totalorder %s1117, 2
          %v1122 = vphi 0.0, %v2393
        $region90: #{tpu_custom_call.1} parent=75 // loop_header_branch
          %1120 = sbr.rel (%p1118) target = $region94
        $region91: #{tpu_custom_call.1} parent=75 // loop_body
          %s1123 = smul.u32 %s1117, 8
          %s1124 = smul.u32 %s1123, 4
          %s1125 = smul.addr %s1124, 4
          %s1126 = scalar_lea.vmem [#allocation2], %s1125
          %v1127 = vld [vmem:[%s1126] sm:$0xf]
          %v1128 = vld [vmem:[%s1126 + $0x4] sm:$0xf]
          %v1129 = vld [vmem:[%s1126 + $0x8] sm:$0xf]
          %v1130 = vld [vmem:[%s1126 + $0x10] sm:$0xf]
          %v1131 = vld [vmem:[%s1126 + $0x14] sm:$0xf]
          %v1132 = vld [vmem:[%s1126 + $0x18] sm:$0xf]
          %v1133 = vld [vmem:[%s1126 + $0x20] sm:$0xf]
          %v1134 = vld [vmem:[%s1126 + $0x24] sm:$0xf]
          %v1135 = vld [vmem:[%s1126 + $0x28] sm:$0xf]
          %v1136 = vld [vmem:[%s1126 + $0x30] sm:$0xf]
          %v1137 = vld [vmem:[%s1126 + $0x34] sm:$0xf]
          %v1138 = vld [vmem:[%s1126 + $0x38] sm:$0xf]
          %v1139 = vld [vmem:[%s1126 + $0x40] sm:$0xf]
          %v1140 = vld [vmem:[%s1126 + $0x44] sm:$0xf]
          %v1141 = vld [vmem:[%s1126 + $0x48] sm:$0xf]
          %v1142 = vld [vmem:[%s1126 + $0x50] sm:$0xf]
          %v1143 = vld [vmem:[%s1126 + $0x54] sm:$0xf]
          %v1144 = vld [vmem:[%s1126 + $0x58] sm:$0xf]
          %v1145 = vld [vmem:[%s1126 + $0x60] sm:$0xf]
          %v1146 = vld [vmem:[%s1126 + $0x64] sm:$0xf]
          %v1147 = vld [vmem:[%s1126 + $0x68] sm:$0xf]
          %v1148 = vld [vmem:[%s1126 + $0x70] sm:$0xf]
          %v1149 = vld [vmem:[%s1126 + $0x74] sm:$0xf]
          %v1150 = vld [vmem:[%s1126 + $0x78] sm:$0xf]
          %v1151 = vunpack.c.l.bf16 %v1127
          %v1152 = vunpack.c.l.bf16 %v1128
          %v1153 = vunpack.c.l.bf16 %v1129
          %v1154 = vunpack.c.l.bf16 %v1130
          %v1155 = vunpack.c.l.bf16 %v1131
          %v1156 = vunpack.c.l.bf16 %v1132
          %v1157 = vunpack.c.l.bf16 %v1133
          %v1158 = vunpack.c.l.bf16 %v1134
          %v1159 = vunpack.c.l.bf16 %v1135
          %v1160 = vunpack.c.l.bf16 %v1136
          %v1161 = vunpack.c.l.bf16 %v1137
          %v1162 = vunpack.c.l.bf16 %v1138
          %v1163 = vunpack.c.l.bf16 %v1139
          %v1164 = vunpack.c.l.bf16 %v1140
          %v1165 = vunpack.c.l.bf16 %v1141
          %v1166 = vunpack.c.l.bf16 %v1142
          %v1167 = vunpack.c.l.bf16 %v1143
          %v1168 = vunpack.c.l.bf16 %v1144
          %v1169 = vunpack.c.l.bf16 %v1145
          %v1170 = vunpack.c.l.bf16 %v1146
          %v1171 = vunpack.c.l.bf16 %v1147
          %v1172 = vunpack.c.l.bf16 %v1148
          %v1173 = vunpack.c.l.bf16 %v1149
          %v1174 = vunpack.c.l.bf16 %v1150
          %v1175 = vlaneseq
          %v1176 = vshrl.u32 %v1175, 7
          %v1177 = vsub.s32 0, %v1176
          %v1178 = vrot.slane %v1105, %v1177
          %v1179 = vmul.f32 %v1151, %v1178
          %v1180 = vmul.f32 %v1152, %v1178
          %v1181 = vmul.f32 %v1154, %v1178
          %v1182 = vmul.f32 %v1155, %v1178
          %v1183 = vmul.f32 %v1157, %v1178
          %v1184 = vmul.f32 %v1158, %v1178
          %v1185 = vmul.f32 %v1160, %v1178
          %v1186 = vmul.f32 %v1161, %v1178
          %v1187 = vmul.f32 %v1163, %v1178
          %v1188 = vmul.f32 %v1164, %v1178
          %v1189 = vmul.f32 %v1166, %v1178
          %v1190 = vmul.f32 %v1167, %v1178
          %v1191 = vmul.f32 %v1169, %v1178
          %v1192 = vmul.f32 %v1170, %v1178
          %v1193 = vmul.f32 %v1172, %v1178
          %v1194 = vmul.f32 %v1173, %v1178
          %v1195 = vadd.f32 %v1179, 0.0
          %v1196 = vadd.f32 %v1180, 0.0
          %v1197 = vadd.f32 %v1181, 0.0
          %v1198 = vadd.f32 %v1182, 0.0
          %v1199 = vadd.f32 %v1183, 0.0
          %v1200 = vadd.f32 %v1184, 0.0
          %v1201 = vadd.f32 %v1185, 0.0
          %v1202 = vadd.f32 %v1186, 0.0
          %v1203 = vadd.f32 %v1187, 0.0
          %v1204 = vadd.f32 %v1188, 0.0
          %v1205 = vadd.f32 %v1189, 0.0
          %v1206 = vadd.f32 %v1190, 0.0
          %v1207 = vadd.f32 %v1191, 0.0
          %v1208 = vadd.f32 %v1192, 0.0
          %v1209 = vadd.f32 %v1193, 0.0
          %v1210 = vadd.f32 %v1194, 0.0
          %v1211 = vlaneseq
          %v1212 = vshrl.u32 %v1211, 7
          %v1213 = vsub.s32 0, %v1212
          %v1214 = vrot.slane %v1106, %v1213
          %v1215 = vmul.f32 %v1151, %v1214
          %v1216 = vmul.f32 %v1152, %v1214
          %v1217 = vmul.f32 %v1153, %v1214
          %v1218 = vmul.f32 %v1154, %v1214
          %v1219 = vmul.f32 %v1155, %v1214
          %v1220 = vmul.f32 %v1156, %v1214
          %v1221 = vmul.f32 %v1157, %v1214
          %v1222 = vmul.f32 %v1158, %v1214
          %v1223 = vmul.f32 %v1159, %v1214
          %v1224 = vmul.f32 %v1160, %v1214
          %v1225 = vmul.f32 %v1161, %v1214
          %v1226 = vmul.f32 %v1162, %v1214
          %v1227 = vmul.f32 %v1163, %v1214
          %v1228 = vmul.f32 %v1164, %v1214
          %v1229 = vmul.f32 %v1165, %v1214
          %v1230 = vmul.f32 %v1166, %v1214
          %v1231 = vmul.f32 %v1167, %v1214
          %v1232 = vmul.f32 %v1168, %v1214
          %v1233 = vmul.f32 %v1169, %v1214
          %v1234 = vmul.f32 %v1170, %v1214
          %v1235 = vmul.f32 %v1171, %v1214
          %v1236 = vmul.f32 %v1172, %v1214
          %v1237 = vmul.f32 %v1173, %v1214
          %v1238 = vmul.f32 %v1174, %v1214
          %vm1263 = vcmask 1046528
          %v1264 = vrot.slane %v1215, 1
          %v1265 = vrot.slane %v1216, 1
          %v1266 = vsel %vm1263, %v1264, %v1265
          %v1267 = vrot.slane %v1217, 1
          %v1268 = vsel %vm1263, %v1265, %v1267
          %v1269 = vrot.slane %v1218, 1
          %v1270 = vrot.slane %v1219, 1
          %v1271 = vsel %vm1263, %v1269, %v1270
          %v1272 = vrot.slane %v1220, 1
          %v1273 = vsel %vm1263, %v1270, %v1272
          %v1274 = vrot.slane %v1221, 1
          %v1275 = vrot.slane %v1222, 1
          %v1276 = vsel %vm1263, %v1274, %v1275
          %v1277 = vrot.slane %v1223, 1
          %v1278 = vsel %vm1263, %v1275, %v1277
          %v1279 = vrot.slane %v1224, 1
          %v1280 = vrot.slane %v1225, 1
          %v1281 = vsel %vm1263, %v1279, %v1280
          %v1282 = vrot.slane %v1226, 1
          %v1283 = vsel %vm1263, %v1280, %v1282
          %v1284 = vrot.slane %v1227, 1
          %v1285 = vrot.slane %v1228, 1
          %v1286 = vsel %vm1263, %v1284, %v1285
          %v1287 = vrot.slane %v1229, 1
          %v1288 = vsel %vm1263, %v1285, %v1287
          %v1289 = vrot.slane %v1230, 1
          %v1290 = vrot.slane %v1231, 1
          %v1291 = vsel %vm1263, %v1289, %v1290
          %v1292 = vrot.slane %v1232, 1
          %v1293 = vsel %vm1263, %v1290, %v1292
          %v1294 = vrot.slane %v1233, 1
          %v1295 = vrot.slane %v1234, 1
          %v1296 = vsel %vm1263, %v1294, %v1295
          %v1297 = vrot.slane %v1235, 1
          %v1298 = vsel %vm1263, %v1295, %v1297
          %v1299 = vrot.slane %v1236, 1
          %v1300 = vrot.slane %v1237, 1
          %v1301 = vsel %vm1263, %v1299, %v1300
          %v1302 = vrot.slane %v1238, 1
          %v1303 = vsel %vm1263, %v1300, %v1302
          %v1320 = vadd.f32 %v1195, %v1266
          %v1321 = vadd.f32 %v1196, %v1268
          %v1322 = vadd.f32 %v1197, %v1271
          %v1323 = vadd.f32 %v1198, %v1273
          %v1324 = vadd.f32 %v1199, %v1276
          %v1325 = vadd.f32 %v1200, %v1278
          %v1326 = vadd.f32 %v1201, %v1281
          %v1327 = vadd.f32 %v1202, %v1283
          %v1328 = vadd.f32 %v1203, %v1286
          %v1329 = vadd.f32 %v1204, %v1288
          %v1330 = vadd.f32 %v1205, %v1291
          %v1331 = vadd.f32 %v1206, %v1293
          %v1332 = vadd.f32 %v1207, %v1296
          %v1333 = vadd.f32 %v1208, %v1298
          %v1334 = vadd.f32 %v1209, %v1301
          %v1335 = vadd.f32 %v1210, %v1303
          %v1336 = vlaneseq
          %v1337 = vshrl.u32 %v1336, 7
          %v1338 = vsub.s32 0, %v1337
          %v1339 = vrot.slane %v1107, %v1338
          %v1340 = vmul.f32 %v1151, %v1339
          %v1341 = vmul.f32 %v1152, %v1339
          %v1342 = vmul.f32 %v1153, %v1339
          %v1343 = vmul.f32 %v1154, %v1339
          %v1344 = vmul.f32 %v1155, %v1339
          %v1345 = vmul.f32 %v1156, %v1339
          %v1346 = vmul.f32 %v1157, %v1339
          %v1347 = vmul.f32 %v1158, %v1339
          %v1348 = vmul.f32 %v1159, %v1339
          %v1349 = vmul.f32 %v1160, %v1339
          %v1350 = vmul.f32 %v1161, %v1339
          %v1351 = vmul.f32 %v1162, %v1339
          %v1352 = vmul.f32 %v1163, %v1339
          %v1353 = vmul.f32 %v1164, %v1339
          %v1354 = vmul.f32 %v1165, %v1339
          %v1355 = vmul.f32 %v1166, %v1339
          %v1356 = vmul.f32 %v1167, %v1339
          %v1357 = vmul.f32 %v1168, %v1339
          %v1358 = vmul.f32 %v1169, %v1339
          %v1359 = vmul.f32 %v1170, %v1339
          %v1360 = vmul.f32 %v1171, %v1339
          %v1361 = vmul.f32 %v1172, %v1339
          %v1362 = vmul.f32 %v1173, %v1339
          %v1363 = vmul.f32 %v1174, %v1339
          %vm1388 = vcmask 1045504
          %v1389 = vrot.slane %v1340, 2
          %v1390 = vrot.slane %v1341, 2
          %v1391 = vsel %vm1388, %v1389, %v1390
          %v1392 = vrot.slane %v1342, 2
          %v1393 = vsel %vm1388, %v1390, %v1392
          %v1394 = vrot.slane %v1343, 2
          %v1395 = vrot.slane %v1344, 2
          %v1396 = vsel %vm1388, %v1394, %v1395
          %v1397 = vrot.slane %v1345, 2
          %v1398 = vsel %vm1388, %v1395, %v1397
          %v1399 = vrot.slane %v1346, 2
          %v1400 = vrot.slane %v1347, 2
          %v1401 = vsel %vm1388, %v1399, %v1400
          %v1402 = vrot.slane %v1348, 2
          %v1403 = vsel %vm1388, %v1400, %v1402
          %v1404 = vrot.slane %v1349, 2
          %v1405 = vrot.slane %v1350, 2
          %v1406 = vsel %vm1388, %v1404, %v1405
          %v1407 = vrot.slane %v1351, 2
          %v1408 = vsel %vm1388, %v1405, %v1407
          %v1409 = vrot.slane %v1352, 2
          %v1410 = vrot.slane %v1353, 2
          %v1411 = vsel %vm1388, %v1409, %v1410
          %v1412 = vrot.slane %v1354, 2
          %v1413 = vsel %vm1388, %v1410, %v1412
          %v1414 = vrot.slane %v1355, 2
          %v1415 = vrot.slane %v1356, 2
          %v1416 = vsel %vm1388, %v1414, %v1415
          %v1417 = vrot.slane %v1357, 2
          %v1418 = vsel %vm1388, %v1415, %v1417
          %v1419 = vrot.slane %v1358, 2
          %v1420 = vrot.slane %v1359, 2
          %v1421 = vsel %vm1388, %v1419, %v1420
          %v1422 = vrot.slane %v1360, 2
          %v1423 = vsel %vm1388, %v1420, %v1422
          %v1424 = vrot.slane %v1361, 2
          %v1425 = vrot.slane %v1362, 2
          %v1426 = vsel %vm1388, %v1424, %v1425
          %v1427 = vrot.slane %v1363, 2
          %v1428 = vsel %vm1388, %v1425, %v1427
          %v1445 = vadd.f32 %v1320, %v1391
          %v1446 = vadd.f32 %v1321, %v1393
          %v1447 = vadd.f32 %v1322, %v1396
          %v1448 = vadd.f32 %v1323, %v1398
          %v1449 = vadd.f32 %v1324, %v1401
          %v1450 = vadd.f32 %v1325, %v1403
          %v1451 = vadd.f32 %v1326, %v1406
          %v1452 = vadd.f32 %v1327, %v1408
          %v1453 = vadd.f32 %v1328, %v1411
          %v1454 = vadd.f32 %v1329, %v1413
          %v1455 = vadd.f32 %v1330, %v1416
          %v1456 = vadd.f32 %v1331, %v1418
          %v1457 = vadd.f32 %v1332, %v1421
          %v1458 = vadd.f32 %v1333, %v1423
          %v1459 = vadd.f32 %v1334, %v1426
          %v1460 = vadd.f32 %v1335, %v1428
          %s1461 = sadd.s32 %s1123, 1
          %s1462 = smul.u32 %s1461, 4
          %s1463 = smul.addr %s1462, 4
          %s1464 = scalar_lea.vmem [#allocation2], %s1463
          %v1465 = vld [vmem:[%s1464] sm:$0xf]
          %v1466 = vld [vmem:[%s1464 + $0x4] sm:$0xf]
          %v1467 = vld [vmem:[%s1464 + $0x8] sm:$0xf]
          %v1468 = vld [vmem:[%s1464 + $0x10] sm:$0xf]
          %v1469 = vld [vmem:[%s1464 + $0x14] sm:$0xf]
          %v1470 = vld [vmem:[%s1464 + $0x18] sm:$0xf]
          %v1471 = vld [vmem:[%s1464 + $0x20] sm:$0xf]
          %v1472 = vld [vmem:[%s1464 + $0x24] sm:$0xf]
          %v1473 = vld [vmem:[%s1464 + $0x28] sm:$0xf]
          %v1474 = vld [vmem:[%s1464 + $0x30] sm:$0xf]
          %v1475 = vld [vmem:[%s1464 + $0x34] sm:$0xf]
          %v1476 = vld [vmem:[%s1464 + $0x38] sm:$0xf]
          %v1477 = vld [vmem:[%s1464 + $0x40] sm:$0xf]
          %v1478 = vld [vmem:[%s1464 + $0x44] sm:$0xf]
          %v1479 = vld [vmem:[%s1464 + $0x48] sm:$0xf]
          %v1480 = vld [vmem:[%s1464 + $0x50] sm:$0xf]
          %v1481 = vld [vmem:[%s1464 + $0x54] sm:$0xf]
          %v1482 = vld [vmem:[%s1464 + $0x58] sm:$0xf]
          %v1483 = vld [vmem:[%s1464 + $0x60] sm:$0xf]
          %v1484 = vld [vmem:[%s1464 + $0x64] sm:$0xf]
          %v1485 = vld [vmem:[%s1464 + $0x68] sm:$0xf]
          %v1486 = vld [vmem:[%s1464 + $0x70] sm:$0xf]
          %v1487 = vld [vmem:[%s1464 + $0x74] sm:$0xf]
          %v1488 = vld [vmem:[%s1464 + $0x78] sm:$0xf]
          %v1489 = vunpack.c.l.bf16 %v1465
          %v1490 = vunpack.c.l.bf16 %v1466
          %v1491 = vunpack.c.l.bf16 %v1467
          %v1492 = vunpack.c.l.bf16 %v1468
          %v1493 = vunpack.c.l.bf16 %v1469
          %v1494 = vunpack.c.l.bf16 %v1470
          %v1495 = vunpack.c.l.bf16 %v1471
          %v1496 = vunpack.c.l.bf16 %v1472
          %v1497 = vunpack.c.l.bf16 %v1473
          %v1498 = vunpack.c.l.bf16 %v1474
          %v1499 = vunpack.c.l.bf16 %v1475
          %v1500 = vunpack.c.l.bf16 %v1476
          %v1501 = vunpack.c.l.bf16 %v1477
          %v1502 = vunpack.c.l.bf16 %v1478
          %v1503 = vunpack.c.l.bf16 %v1479
          %v1504 = vunpack.c.l.bf16 %v1480
          %v1505 = vunpack.c.l.bf16 %v1481
          %v1506 = vunpack.c.l.bf16 %v1482
          %v1507 = vunpack.c.l.bf16 %v1483
          %v1508 = vunpack.c.l.bf16 %v1484
          %v1509 = vunpack.c.l.bf16 %v1485
          %v1510 = vunpack.c.l.bf16 %v1486
          %v1511 = vunpack.c.l.bf16 %v1487
          %v1512 = vunpack.c.l.bf16 %v1488
          %v1513 = vlaneseq
          %v1514 = vshrl.u32 %v1513, 7
          %v1515 = vsub.s32 0, %v1514
          %v1516 = vrot.slane %v1109, %v1515
          %v1517 = vmul.f32 %v1489, %v1516
          %v1518 = vmul.f32 %v1490, %v1516
          %v1519 = vmul.f32 %v1492, %v1516
          %v1520 = vmul.f32 %v1493, %v1516
          %v1521 = vmul.f32 %v1495, %v1516
          %v1522 = vmul.f32 %v1496, %v1516
          %v1523 = vmul.f32 %v1498, %v1516
          %v1524 = vmul.f32 %v1499, %v1516
          %v1525 = vmul.f32 %v1501, %v1516
          %v1526 = vmul.f32 %v1502, %v1516
          %v1527 = vmul.f32 %v1504, %v1516
          %v1528 = vmul.f32 %v1505, %v1516
          %v1529 = vmul.f32 %v1507, %v1516
          %v1530 = vmul.f32 %v1508, %v1516
          %v1531 = vmul.f32 %v1510, %v1516
          %v1532 = vmul.f32 %v1511, %v1516
          %v1533 = vadd.f32 %v1445, %v1517
          %v1534 = vadd.f32 %v1446, %v1518
          %v1535 = vadd.f32 %v1447, %v1519
          %v1536 = vadd.f32 %v1448, %v1520
          %v1537 = vadd.f32 %v1449, %v1521
          %v1538 = vadd.f32 %v1450, %v1522
          %v1539 = vadd.f32 %v1451, %v1523
          %v1540 = vadd.f32 %v1452, %v1524
          %v1541 = vadd.f32 %v1453, %v1525
          %v1542 = vadd.f32 %v1454, %v1526
          %v1543 = vadd.f32 %v1455, %v1527
          %v1544 = vadd.f32 %v1456, %v1528
          %v1545 = vadd.f32 %v1457, %v1529
          %v1546 = vadd.f32 %v1458, %v1530
          %v1547 = vadd.f32 %v1459, %v1531
          %v1548 = vadd.f32 %v1460, %v1532
          %v1549 = vlaneseq
          %v1550 = vshrl.u32 %v1549, 7
          %v1551 = vsub.s32 0, %v1550
          %v1552 = vrot.slane %v1110, %v1551
          %v1553 = vmul.f32 %v1489, %v1552
          %v1554 = vmul.f32 %v1490, %v1552
          %v1555 = vmul.f32 %v1491, %v1552
          %v1556 = vmul.f32 %v1492, %v1552
          %v1557 = vmul.f32 %v1493, %v1552
          %v1558 = vmul.f32 %v1494, %v1552
          %v1559 = vmul.f32 %v1495, %v1552
          %v1560 = vmul.f32 %v1496, %v1552
          %v1561 = vmul.f32 %v1497, %v1552
          %v1562 = vmul.f32 %v1498, %v1552
          %v1563 = vmul.f32 %v1499, %v1552
          %v1564 = vmul.f32 %v1500, %v1552
          %v1565 = vmul.f32 %v1501, %v1552
          %v1566 = vmul.f32 %v1502, %v1552
          %v1567 = vmul.f32 %v1503, %v1552
          %v1568 = vmul.f32 %v1504, %v1552
          %v1569 = vmul.f32 %v1505, %v1552
          %v1570 = vmul.f32 %v1506, %v1552
          %v1571 = vmul.f32 %v1507, %v1552
          %v1572 = vmul.f32 %v1508, %v1552
          %v1573 = vmul.f32 %v1509, %v1552
          %v1574 = vmul.f32 %v1510, %v1552
          %v1575 = vmul.f32 %v1511, %v1552
          %v1576 = vmul.f32 %v1512, %v1552
          %v1601 = vrot.slane %v1553, 1
          %v1602 = vrot.slane %v1554, 1
          %v1603 = vsel %vm1263, %v1601, %v1602
          %v1604 = vrot.slane %v1555, 1
          %v1605 = vsel %vm1263, %v1602, %v1604
          %v1606 = vrot.slane %v1556, 1
          %v1607 = vrot.slane %v1557, 1
          %v1608 = vsel %vm1263, %v1606, %v1607
          %v1609 = vrot.slane %v1558, 1
          %v1610 = vsel %vm1263, %v1607, %v1609
          %v1611 = vrot.slane %v1559, 1
          %v1612 = vrot.slane %v1560, 1
          %v1613 = vsel %vm1263, %v1611, %v1612
          %v1614 = vrot.slane %v1561, 1
          %v1615 = vsel %vm1263, %v1612, %v1614
          %v1616 = vrot.slane %v1562, 1
          %v1617 = vrot.slane %v1563, 1
          %v1618 = vsel %vm1263, %v1616, %v1617
          %v1619 = vrot.slane %v1564, 1
          %v1620 = vsel %vm1263, %v1617, %v1619
          %v1621 = vrot.slane %v1565, 1
          %v1622 = vrot.slane %v1566, 1
          %v1623 = vsel %vm1263, %v1621, %v1622
          %v1624 = vrot.slane %v1567, 1
          %v1625 = vsel %vm1263, %v1622, %v1624
          %v1626 = vrot.slane %v1568, 1
          %v1627 = vrot.slane %v1569, 1
          %v1628 = vsel %vm1263, %v1626, %v1627
          %v1629 = vrot.slane %v1570, 1
          %v1630 = vsel %vm1263, %v1627, %v1629
          %v1631 = vrot.slane %v1571, 1
          %v1632 = vrot.slane %v1572, 1
          %v1633 = vsel %vm1263, %v1631, %v1632
          %v1634 = vrot.slane %v1573, 1
          %v1635 = vsel %vm1263, %v1632, %v1634
          %v1636 = vrot.slane %v1574, 1
          %v1637 = vrot.slane %v1575, 1
          %v1638 = vsel %vm1263, %v1636, %v1637
          %v1639 = vrot.slane %v1576, 1
          %v1640 = vsel %vm1263, %v1637, %v1639
          %v1657 = vadd.f32 %v1533, %v1603
          %v1658 = vadd.f32 %v1534, %v1605
          %v1659 = vadd.f32 %v1535, %v1608
          %v1660 = vadd.f32 %v1536, %v1610
          %v1661 = vadd.f32 %v1537, %v1613
          %v1662 = vadd.f32 %v1538, %v1615
          %v1663 = vadd.f32 %v1539, %v1618
          %v1664 = vadd.f32 %v1540, %v1620
          %v1665 = vadd.f32 %v1541, %v1623
          %v1666 = vadd.f32 %v1542, %v1625
          %v1667 = vadd.f32 %v1543, %v1628
          %v1668 = vadd.f32 %v1544, %v1630
          %v1669 = vadd.f32 %v1545, %v1633
          %v1670 = vadd.f32 %v1546, %v1635
          %v1671 = vadd.f32 %v1547, %v1638
          %v1672 = vadd.f32 %v1548, %v1640
          %v1673 = vlaneseq
          %v1674 = vshrl.u32 %v1673, 7
          %v1675 = vsub.s32 0, %v1674
          %v1676 = vrot.slane %v1111, %v1675
          %v1677 = vmul.f32 %v1489, %v1676
          %v1678 = vmul.f32 %v1490, %v1676
          %v1679 = vmul.f32 %v1491, %v1676
          %v1680 = vmul.f32 %v1492, %v1676
          %v1681 = vmul.f32 %v1493, %v1676
          %v1682 = vmul.f32 %v1494, %v1676
          %v1683 = vmul.f32 %v1495, %v1676
          %v1684 = vmul.f32 %v1496, %v1676
          %v1685 = vmul.f32 %v1497, %v1676
          %v1686 = vmul.f32 %v1498, %v1676
          %v1687 = vmul.f32 %v1499, %v1676
          %v1688 = vmul.f32 %v1500, %v1676
          %v1689 = vmul.f32 %v1501, %v1676
          %v1690 = vmul.f32 %v1502, %v1676
          %v1691 = vmul.f32 %v1503, %v1676
          %v1692 = vmul.f32 %v1504, %v1676
          %v1693 = vmul.f32 %v1505, %v1676
          %v1694 = vmul.f32 %v1506, %v1676
          %v1695 = vmul.f32 %v1507, %v1676
          %v1696 = vmul.f32 %v1508, %v1676
          %v1697 = vmul.f32 %v1509, %v1676
          %v1698 = vmul.f32 %v1510, %v1676
          %v1699 = vmul.f32 %v1511, %v1676
          %v1700 = vmul.f32 %v1512, %v1676
          %v1725 = vrot.slane %v1677, 2
          %v1726 = vrot.slane %v1678, 2
          %v1727 = vsel %vm1388, %v1725, %v1726
          %v1728 = vrot.slane %v1679, 2
          %v1729 = vsel %vm1388, %v1726, %v1728
          %v1730 = vrot.slane %v1680, 2
          %v1731 = vrot.slane %v1681, 2
          %v1732 = vsel %vm1388, %v1730, %v1731
          %v1733 = vrot.slane %v1682, 2
          %v1734 = vsel %vm1388, %v1731, %v1733
          %v1735 = vrot.slane %v1683, 2
          %v1736 = vrot.slane %v1684, 2
          %v1737 = vsel %vm1388, %v1735, %v1736
          %v1738 = vrot.slane %v1685, 2
          %v1739 = vsel %vm1388, %v1736, %v1738
          %v1740 = vrot.slane %v1686, 2
          %v1741 = vrot.slane %v1687, 2
          %v1742 = vsel %vm1388, %v1740, %v1741
          %v1743 = vrot.slane %v1688, 2
          %v1744 = vsel %vm1388, %v1741, %v1743
          %v1745 = vrot.slane %v1689, 2
          %v1746 = vrot.slane %v1690, 2
          %v1747 = vsel %vm1388, %v1745, %v1746
          %v1748 = vrot.slane %v1691, 2
          %v1749 = vsel %vm1388, %v1746, %v1748
          %v1750 = vrot.slane %v1692, 2
          %v1751 = vrot.slane %v1693, 2
          %v1752 = vsel %vm1388, %v1750, %v1751
          %v1753 = vrot.slane %v1694, 2
          %v1754 = vsel %vm1388, %v1751, %v1753
          %v1755 = vrot.slane %v1695, 2
          %v1756 = vrot.slane %v1696, 2
          %v1757 = vsel %vm1388, %v1755, %v1756
          %v1758 = vrot.slane %v1697, 2
          %v1759 = vsel %vm1388, %v1756, %v1758
          %v1760 = vrot.slane %v1698, 2
          %v1761 = vrot.slane %v1699, 2
          %v1762 = vsel %vm1388, %v1760, %v1761
          %v1763 = vrot.slane %v1700, 2
          %v1764 = vsel %vm1388, %v1761, %v1763
          %v1781 = vadd.f32 %v1657, %v1727
          %v1782 = vadd.f32 %v1658, %v1729
          %v1783 = vadd.f32 %v1659, %v1732
          %v1784 = vadd.f32 %v1660, %v1734
          %v1785 = vadd.f32 %v1661, %v1737
          %v1786 = vadd.f32 %v1662, %v1739
          %v1787 = vadd.f32 %v1663, %v1742
          %v1788 = vadd.f32 %v1664, %v1744
          %v1789 = vadd.f32 %v1665, %v1747
          %v1790 = vadd.f32 %v1666, %v1749
          %v1791 = vadd.f32 %v1667, %v1752
          %v1792 = vadd.f32 %v1668, %v1754
          %v1793 = vadd.f32 %v1669, %v1757
          %v1794 = vadd.f32 %v1670, %v1759
          %v1795 = vadd.f32 %v1671, %v1762
          %v1796 = vadd.f32 %v1672, %v1764
          %s1797 = sadd.s32 %s1123, 2
          %s1798 = smul.u32 %s1797, 4
          %s1799 = smul.addr %s1798, 4
          %s1800 = scalar_lea.vmem [#allocation2], %s1799
          %v1801 = vld [vmem:[%s1800] sm:$0xf]
          %v1802 = vld [vmem:[%s1800 + $0x4] sm:$0xf]
          %v1803 = vld [vmem:[%s1800 + $0x8] sm:$0xf]
          %v1804 = vld [vmem:[%s1800 + $0x10] sm:$0xf]
          %v1805 = vld [vmem:[%s1800 + $0x14] sm:$0xf]
          %v1806 = vld [vmem:[%s1800 + $0x18] sm:$0xf]
          %v1807 = vld [vmem:[%s1800 + $0x20] sm:$0xf]
          %v1808 = vld [vmem:[%s1800 + $0x24] sm:$0xf]
          %v1809 = vld [vmem:[%s1800 + $0x28] sm:$0xf]
          %v1810 = vld [vmem:[%s1800 + $0x30] sm:$0xf]
          %v1811 = vld [vmem:[%s1800 + $0x34] sm:$0xf]
          %v1812 = vld [vmem:[%s1800 + $0x38] sm:$0xf]
          %v1813 = vld [vmem:[%s1800 + $0x40] sm:$0xf]
          %v1814 = vld [vmem:[%s1800 + $0x44] sm:$0xf]
          %v1815 = vld [vmem:[%s1800 + $0x48] sm:$0xf]
          %v1816 = vld [vmem:[%s1800 + $0x50] sm:$0xf]
          %v1817 = vld [vmem:[%s1800 + $0x54] sm:$0xf]
          %v1818 = vld [vmem:[%s1800 + $0x58] sm:$0xf]
          %v1819 = vld [vmem:[%s1800 + $0x60] sm:$0xf]
          %v1820 = vld [vmem:[%s1800 + $0x64] sm:$0xf]
          %v1821 = vld [vmem:[%s1800 + $0x68] sm:$0xf]
          %v1822 = vld [vmem:[%s1800 + $0x70] sm:$0xf]
          %v1823 = vld [vmem:[%s1800 + $0x74] sm:$0xf]
          %v1824 = vld [vmem:[%s1800 + $0x78] sm:$0xf]
          %v1825 = vunpack.c.l.bf16 %v1801
          %v1826 = vunpack.c.l.bf16 %v1802
          %v1827 = vunpack.c.l.bf16 %v1803
          %v1828 = vunpack.c.l.bf16 %v1804
          %v1829 = vunpack.c.l.bf16 %v1805
          %v1830 = vunpack.c.l.bf16 %v1806
          %v1831 = vunpack.c.l.bf16 %v1807
          %v1832 = vunpack.c.l.bf16 %v1808
          %v1833 = vunpack.c.l.bf16 %v1809
          %v1834 = vunpack.c.l.bf16 %v1810
          %v1835 = vunpack.c.l.bf16 %v1811
          %v1836 = vunpack.c.l.bf16 %v1812
          %v1837 = vunpack.c.l.bf16 %v1813
          %v1838 = vunpack.c.l.bf16 %v1814
          %v1839 = vunpack.c.l.bf16 %v1815
          %v1840 = vunpack.c.l.bf16 %v1816
          %v1841 = vunpack.c.l.bf16 %v1817
          %v1842 = vunpack.c.l.bf16 %v1818
          %v1843 = vunpack.c.l.bf16 %v1819
          %v1844 = vunpack.c.l.bf16 %v1820
          %v1845 = vunpack.c.l.bf16 %v1821
          %v1846 = vunpack.c.l.bf16 %v1822
          %v1847 = vunpack.c.l.bf16 %v1823
          %v1848 = vunpack.c.l.bf16 %v1824
          %v1849 = vlaneseq
          %v1850 = vshrl.u32 %v1849, 7
          %v1851 = vsub.s32 0, %v1850
          %v1852 = vrot.slane %v1113, %v1851
          %v1853 = vmul.f32 %v1825, %v1852
          %v1854 = vmul.f32 %v1826, %v1852
          %v1855 = vmul.f32 %v1828, %v1852
          %v1856 = vmul.f32 %v1829, %v1852
          %v1857 = vmul.f32 %v1831, %v1852
          %v1858 = vmul.f32 %v1832, %v1852
          %v1859 = vmul.f32 %v1834, %v1852
          %v1860 = vmul.f32 %v1835, %v1852
          %v1861 = vmul.f32 %v1837, %v1852
          %v1862 = vmul.f32 %v1838, %v1852
          %v1863 = vmul.f32 %v1840, %v1852
          %v1864 = vmul.f32 %v1841, %v1852
          %v1865 = vmul.f32 %v1843, %v1852
          %v1866 = vmul.f32 %v1844, %v1852
          %v1867 = vmul.f32 %v1846, %v1852
          %v1868 = vmul.f32 %v1847, %v1852
          %v1869 = vadd.f32 %v1781, %v1853
          %v1870 = vadd.f32 %v1782, %v1854
          %v1871 = vadd.f32 %v1783, %v1855
          %v1872 = vadd.f32 %v1784, %v1856
          %v1873 = vadd.f32 %v1785, %v1857
          %v1874 = vadd.f32 %v1786, %v1858
          %v1875 = vadd.f32 %v1787, %v1859
          %v1876 = vadd.f32 %v1788, %v1860
          %v1877 = vadd.f32 %v1789, %v1861
          %v1878 = vadd.f32 %v1790, %v1862
          %v1879 = vadd.f32 %v1791, %v1863
          %v1880 = vadd.f32 %v1792, %v1864
          %v1881 = vadd.f32 %v1793, %v1865
          %v1882 = vadd.f32 %v1794, %v1866
          %v1883 = vadd.f32 %v1795, %v1867
          %v1884 = vadd.f32 %v1796, %v1868
          %v1885 = vlaneseq
          %v1886 = vshrl.u32 %v1885, 7
          %v1887 = vsub.s32 0, %v1886
          %v1888 = vrot.slane %v1114, %v1887
          %v1889 = vmul.f32 %v1825, %v1888
          %v1890 = vmul.f32 %v1826, %v1888
          %v1891 = vmul.f32 %v1827, %v1888
          %v1892 = vmul.f32 %v1828, %v1888
          %v1893 = vmul.f32 %v1829, %v1888
          %v1894 = vmul.f32 %v1830, %v1888
          %v1895 = vmul.f32 %v1831, %v1888
          %v1896 = vmul.f32 %v1832, %v1888
          %v1897 = vmul.f32 %v1833, %v1888
          %v1898 = vmul.f32 %v1834, %v1888
          %v1899 = vmul.f32 %v1835, %v1888
          %v1900 = vmul.f32 %v1836, %v1888
          %v1901 = vmul.f32 %v1837, %v1888
          %v1902 = vmul.f32 %v1838, %v1888
          %v1903 = vmul.f32 %v1839, %v1888
          %v1904 = vmul.f32 %v1840, %v1888
          %v1905 = vmul.f32 %v1841, %v1888
          %v1906 = vmul.f32 %v1842, %v1888
          %v1907 = vmul.f32 %v1843, %v1888
          %v1908 = vmul.f32 %v1844, %v1888
          %v1909 = vmul.f32 %v1845, %v1888
          %v1910 = vmul.f32 %v1846, %v1888
          %v1911 = vmul.f32 %v1847, %v1888
          %v1912 = vmul.f32 %v1848, %v1888
          %v1937 = vrot.slane %v1889, 1
          %v1938 = vrot.slane %v1890, 1
          %v1939 = vsel %vm1263, %v1937, %v1938
          %v1940 = vrot.slane %v1891, 1
          %v1941 = vsel %vm1263, %v1938, %v1940
          %v1942 = vrot.slane %v1892, 1
          %v1943 = vrot.slane %v1893, 1
          %v1944 = vsel %vm1263, %v1942, %v1943
          %v1945 = vrot.slane %v1894, 1
          %v1946 = vsel %vm1263, %v1943, %v1945
          %v1947 = vrot.slane %v1895, 1
          %v1948 = vrot.slane %v1896, 1
          %v1949 = vsel %vm1263, %v1947, %v1948
          %v1950 = vrot.slane %v1897, 1
          %v1951 = vsel %vm1263, %v1948, %v1950
          %v1952 = vrot.slane %v1898, 1
          %v1953 = vrot.slane %v1899, 1
          %v1954 = vsel %vm1263, %v1952, %v1953
          %v1955 = vrot.slane %v1900, 1
          %v1956 = vsel %vm1263, %v1953, %v1955
          %v1957 = vrot.slane %v1901, 1
          %v1958 = vrot.slane %v1902, 1
          %v1959 = vsel %vm1263, %v1957, %v1958
          %v1960 = vrot.slane %v1903, 1
          %v1961 = vsel %vm1263, %v1958, %v1960
          %v1962 = vrot.slane %v1904, 1
          %v1963 = vrot.slane %v1905, 1
          %v1964 = vsel %vm1263, %v1962, %v1963
          %v1965 = vrot.slane %v1906, 1
          %v1966 = vsel %vm1263, %v1963, %v1965
          %v1967 = vrot.slane %v1907, 1
          %v1968 = vrot.slane %v1908, 1
          %v1969 = vsel %vm1263, %v1967, %v1968
          %v1970 = vrot.slane %v1909, 1
          %v1971 = vsel %vm1263, %v1968, %v1970
          %v1972 = vrot.slane %v1910, 1
          %v1973 = vrot.slane %v1911, 1
          %v1974 = vsel %vm1263, %v1972, %v1973
          %v1975 = vrot.slane %v1912, 1
          %v1976 = vsel %vm1263, %v1973, %v1975
          %v1993 = vadd.f32 %v1869, %v1939
          %v1994 = vadd.f32 %v1870, %v1941
          %v1995 = vadd.f32 %v1871, %v1944
          %v1996 = vadd.f32 %v1872, %v1946
          %v1997 = vadd.f32 %v1873, %v1949
          %v1998 = vadd.f32 %v1874, %v1951
          %v1999 = vadd.f32 %v1875, %v1954
          %v2000 = vadd.f32 %v1876, %v1956
          %v2001 = vadd.f32 %v1877, %v1959
          %v2002 = vadd.f32 %v1878, %v1961
          %v2003 = vadd.f32 %v1879, %v1964
          %v2004 = vadd.f32 %v1880, %v1966
          %v2005 = vadd.f32 %v1881, %v1969
          %v2006 = vadd.f32 %v1882, %v1971
          %v2007 = vadd.f32 %v1883, %v1974
          %v2008 = vadd.f32 %v1884, %v1976
          %v2009 = vlaneseq
          %v2010 = vshrl.u32 %v2009, 7
          %v2011 = vsub.s32 0, %v2010
          %v2012 = vrot.slane %v1115, %v2011
          %v2013 = vmul.f32 %v1825, %v2012
          %v2014 = vmul.f32 %v1826, %v2012
          %v2015 = vmul.f32 %v1827, %v2012
          %v2016 = vmul.f32 %v1828, %v2012
          %v2017 = vmul.f32 %v1829, %v2012
          %v2018 = vmul.f32 %v1830, %v2012
          %v2019 = vmul.f32 %v1831, %v2012
          %v2020 = vmul.f32 %v1832, %v2012
          %v2021 = vmul.f32 %v1833, %v2012
          %v2022 = vmul.f32 %v1834, %v2012
          %v2023 = vmul.f32 %v1835, %v2012
          %v2024 = vmul.f32 %v1836, %v2012
          %v2025 = vmul.f32 %v1837, %v2012
          %v2026 = vmul.f32 %v1838, %v2012
          %v2027 = vmul.f32 %v1839, %v2012
          %v2028 = vmul.f32 %v1840, %v2012
          %v2029 = vmul.f32 %v1841, %v2012
          %v2030 = vmul.f32 %v1842, %v2012
          %v2031 = vmul.f32 %v1843, %v2012
          %v2032 = vmul.f32 %v1844, %v2012
          %v2033 = vmul.f32 %v1845, %v2012
          %v2034 = vmul.f32 %v1846, %v2012
          %v2035 = vmul.f32 %v1847, %v2012
          %v2036 = vmul.f32 %v1848, %v2012
          %v2061 = vrot.slane %v2013, 2
          %v2062 = vrot.slane %v2014, 2
          %v2063 = vsel %vm1388, %v2061, %v2062
          %v2064 = vrot.slane %v2015, 2
          %v2065 = vsel %vm1388, %v2062, %v2064
          %v2066 = vrot.slane %v2016, 2
          %v2067 = vrot.slane %v2017, 2
          %v2068 = vsel %vm1388, %v2066, %v2067
          %v2069 = vrot.slane %v2018, 2
          %v2070 = vsel %vm1388, %v2067, %v2069
          %v2071 = vrot.slane %v2019, 2
          %v2072 = vrot.slane %v2020, 2
          %v2073 = vsel %vm1388, %v2071, %v2072
          %v2074 = vrot.slane %v2021, 2
          %v2075 = vsel %vm1388, %v2072, %v2074
          %v2076 = vrot.slane %v2022, 2
          %v2077 = vrot.slane %v2023, 2
          %v2078 = vsel %vm1388, %v2076, %v2077
          %v2079 = vrot.slane %v2024, 2
          %v2080 = vsel %vm1388, %v2077, %v2079
          %v2081 = vrot.slane %v2025, 2
          %v2082 = vrot.slane %v2026, 2
          %v2083 = vsel %vm1388, %v2081, %v2082
          %v2084 = vrot.slane %v2027, 2
          %v2085 = vsel %vm1388, %v2082, %v2084
          %v2086 = vrot.slane %v2028, 2
          %v2087 = vrot.slane %v2029, 2
          %v2088 = vsel %vm1388, %v2086, %v2087
          %v2089 = vrot.slane %v2030, 2
          %v2090 = vsel %vm1388, %v2087, %v2089
          %v2091 = vrot.slane %v2031, 2
          %v2092 = vrot.slane %v2032, 2
          %v2093 = vsel %vm1388, %v2091, %v2092
          %v2094 = vrot.slane %v2033, 2
          %v2095 = vsel %vm1388, %v2092, %v2094
          %v2096 = vrot.slane %v2034, 2
          %v2097 = vrot.slane %v2035, 2
          %v2098 = vsel %vm1388, %v2096, %v2097
          %v2099 = vrot.slane %v2036, 2
          %v2100 = vsel %vm1388, %v2097, %v2099
          %v2117 = vadd.f32 %v1993, %v2063
          %v2118 = vadd.f32 %v1994, %v2065
          %v2119 = vadd.f32 %v1995, %v2068
          %v2120 = vadd.f32 %v1996, %v2070
          %v2121 = vadd.f32 %v1997, %v2073
          %v2122 = vadd.f32 %v1998, %v2075
          %v2123 = vadd.f32 %v1999, %v2078
          %v2124 = vadd.f32 %v2000, %v2080
          %v2125 = vadd.f32 %v2001, %v2083
          %v2126 = vadd.f32 %v2002, %v2085
          %v2127 = vadd.f32 %v2003, %v2088
          %v2128 = vadd.f32 %v2004, %v2090
          %v2129 = vadd.f32 %v2005, %v2093
          %v2130 = vadd.f32 %v2006, %v2095
          %v2131 = vadd.f32 %v2007, %v2098
          %v2132 = vadd.f32 %v2008, %v2100
          %v2134 = vlaneseq
          %v2135 = vshrl.u32 %v2134, 7
          %v2136 = vsub.s32 0, %v2135
          %v2137 = vrot.slane %v1103, %v2136
          %v2139 = vmul.f32 %v2117, %v2137
          %v2140 = vmul.f32 %v2118, %v2137
          %v2141 = vmul.f32 %v2119, %v2137
          %v2142 = vmul.f32 %v2120, %v2137
          %v2143 = vmul.f32 %v2121, %v2137
          %v2144 = vmul.f32 %v2122, %v2137
          %v2145 = vmul.f32 %v2123, %v2137
          %v2146 = vmul.f32 %v2124, %v2137
          %v2147 = vmul.f32 %v2125, %v2137
          %v2148 = vmul.f32 %v2126, %v2137
          %v2149 = vmul.f32 %v2127, %v2137
          %v2150 = vmul.f32 %v2128, %v2137
          %v2151 = vmul.f32 %v2129, %v2137
          %v2152 = vmul.f32 %v2130, %v2137
          %v2153 = vmul.f32 %v2131, %v2137
          %v2154 = vmul.f32 %v2132, %v2137
          %v2156 = vlaneseq
          %v2157 = vshrl.u32 %v2156, 7
          %v2158 = vsub.s32 0, %v2157
          %v2159 = vrot.slane %v1104, %v2158
          %v2161 = vadd.f32 %v2139, %v2159
          %v2162 = vadd.f32 %v2140, %v2159
          %v2163 = vadd.f32 %v2141, %v2159
          %v2164 = vadd.f32 %v2142, %v2159
          %v2165 = vadd.f32 %v2143, %v2159
          %v2166 = vadd.f32 %v2144, %v2159
          %v2167 = vadd.f32 %v2145, %v2159
          %v2168 = vadd.f32 %v2146, %v2159
          %v2169 = vadd.f32 %v2147, %v2159
          %v2170 = vadd.f32 %v2148, %v2159
          %v2171 = vadd.f32 %v2149, %v2159
          %v2172 = vadd.f32 %v2150, %v2159
          %v2173 = vadd.f32 %v2151, %v2159
          %v2174 = vadd.f32 %v2152, %v2159
          %v2175 = vadd.f32 %v2153, %v2159
          %v2176 = vadd.f32 %v2154, %v2159
          %v2177 = vxor.u32 %v2161, 2147483648
          %v2178 = vxor.u32 %v2162, 2147483648
          %v2179 = vxor.u32 %v2163, 2147483648
          %v2180 = vxor.u32 %v2164, 2147483648
          %v2181 = vxor.u32 %v2165, 2147483648
          %v2182 = vxor.u32 %v2166, 2147483648
          %v2183 = vxor.u32 %v2167, 2147483648
          %v2184 = vxor.u32 %v2168, 2147483648
          %v2185 = vxor.u32 %v2169, 2147483648
          %v2186 = vxor.u32 %v2170, 2147483648
          %v2187 = vxor.u32 %v2171, 2147483648
          %v2188 = vxor.u32 %v2172, 2147483648
          %v2189 = vxor.u32 %v2173, 2147483648
          %v2190 = vxor.u32 %v2174, 2147483648
          %v2191 = vxor.u32 %v2175, 2147483648
          %v2192 = vxor.u32 %v2176, 2147483648
          %v2193 = vmul.f32 %v2177, 1.442695
          %v2194 = vpow.pop %v2193
          %v2195 = vmul.f32 %v2178, 1.442695
          %v2196 = vpow.pop %v2195
          %v2197 = vmul.f32 %v2179, 1.442695
          %v2198 = vpow.pop %v2197
          %v2199 = vmul.f32 %v2180, 1.442695
          %v2200 = vpow.pop %v2199
          %v2201 = vmul.f32 %v2181, 1.442695
          %v2202 = vpow.pop %v2201
          %v2203 = vmul.f32 %v2182, 1.442695
          %v2204 = vpow.pop %v2203
          %v2205 = vmul.f32 %v2183, 1.442695
          %v2206 = vpow.pop %v2205
          %v2207 = vmul.f32 %v2184, 1.442695
          %v2208 = vpow.pop %v2207
          %v2209 = vmul.f32 %v2185, 1.442695
          %v2210 = vpow.pop %v2209
          %v2211 = vmul.f32 %v2186, 1.442695
          %v2212 = vpow.pop %v2211
          %v2213 = vmul.f32 %v2187, 1.442695
          %v2214 = vpow.pop %v2213
          %v2215 = vmul.f32 %v2188, 1.442695
          %v2216 = vpow.pop %v2215
          %v2217 = vmul.f32 %v2189, 1.442695
          %v2218 = vpow.pop %v2217
          %v2219 = vmul.f32 %v2190, 1.442695
          %v2220 = vpow.pop %v2219
          %v2221 = vmul.f32 %v2191, 1.442695
          %v2222 = vpow.pop %v2221
          %v2223 = vmul.f32 %v2192, 1.442695
          %v2224 = vpow.pop %v2223
          %v2225 = vadd.f32 %v2194, 1.0
          %v2226 = vadd.f32 %v2196, 1.0
          %v2227 = vadd.f32 %v2198, 1.0
          %v2228 = vadd.f32 %v2200, 1.0
          %v2229 = vadd.f32 %v2202, 1.0
          %v2230 = vadd.f32 %v2204, 1.0
          %v2231 = vadd.f32 %v2206, 1.0
          %v2232 = vadd.f32 %v2208, 1.0
          %v2233 = vadd.f32 %v2210, 1.0
          %v2234 = vadd.f32 %v2212, 1.0
          %v2235 = vadd.f32 %v2214, 1.0
          %v2236 = vadd.f32 %v2216, 1.0
          %v2237 = vadd.f32 %v2218, 1.0
          %v2238 = vadd.f32 %v2220, 1.0
          %v2239 = vadd.f32 %v2222, 1.0
          %v2240 = vadd.f32 %v2224, 1.0
          %v2241 = vrcp.pop %v2225
          %v2242 = vmul.f32 1.0, %v2241
          %v2243 = vrcp.pop %v2226
          %v2244 = vmul.f32 1.0, %v2243
          %v2245 = vrcp.pop %v2227
          %v2246 = vmul.f32 1.0, %v2245
          %v2247 = vrcp.pop %v2228
          %v2248 = vmul.f32 1.0, %v2247
          %v2249 = vrcp.pop %v2229
          %v2250 = vmul.f32 1.0, %v2249
          %v2251 = vrcp.pop %v2230
          %v2252 = vmul.f32 1.0, %v2251
          %v2253 = vrcp.pop %v2231
          %v2254 = vmul.f32 1.0, %v2253
          %v2255 = vrcp.pop %v2232
          %v2256 = vmul.f32 1.0, %v2255
          %v2257 = vrcp.pop %v2233
          %v2258 = vmul.f32 1.0, %v2257
          %v2259 = vrcp.pop %v2234
          %v2260 = vmul.f32 1.0, %v2259
          %v2261 = vrcp.pop %v2235
          %v2262 = vmul.f32 1.0, %v2261
          %v2263 = vrcp.pop %v2236
          %v2264 = vmul.f32 1.0, %v2263
          %v2265 = vrcp.pop %v2237
          %v2266 = vmul.f32 1.0, %v2265
          %v2267 = vrcp.pop %v2238
          %v2268 = vmul.f32 1.0, %v2267
          %v2269 = vrcp.pop %v2239
          %v2270 = vmul.f32 1.0, %v2269
          %v2271 = vrcp.pop %v2240
          %v2272 = vmul.f32 1.0, %v2271
          %v2273 = vmul.f32 %v2161, %v2242
          %v2274 = vmul.f32 %v2162, %v2244
          %v2275 = vmul.f32 %v2163, %v2246
          %v2276 = vmul.f32 %v2164, %v2248
          %v2277 = vmul.f32 %v2165, %v2250
          %v2278 = vmul.f32 %v2166, %v2252
          %v2279 = vmul.f32 %v2167, %v2254
          %v2280 = vmul.f32 %v2168, %v2256
          %v2281 = vmul.f32 %v2169, %v2258
          %v2282 = vmul.f32 %v2170, %v2260
          %v2283 = vmul.f32 %v2171, %v2262
          %v2284 = vmul.f32 %v2172, %v2264
          %v2285 = vmul.f32 %v2173, %v2266
          %v2286 = vmul.f32 %v2174, %v2268
          %v2287 = vmul.f32 %v2175, %v2270
          %v2288 = vmul.f32 %v2176, %v2272
          %v2289 = vpack.c.bf16 %v2274, %v2273
          %v2290 = vpack.c.bf16 %v2276, %v2275
          %v2291 = vpack.c.bf16 %v2278, %v2277
          %v2292 = vpack.c.bf16 %v2280, %v2279
          %v2293 = vpack.c.bf16 %v2282, %v2281
          %v2294 = vpack.c.bf16 %v2284, %v2283
          %v2295 = vpack.c.bf16 %v2286, %v2285
          %v2296 = vpack.c.bf16 %v2288, %v2287
          %v2305 = vunpack.c.l.b16 %v2289
          %v2306 = vunpack.c.h.b16 %v2289
          %v2307 = vunpack.c.l.b16 %v2290
          %v2308 = vunpack.c.h.b16 %v2290
          %v2309 = vunpack.c.l.b16 %v2291
          %v2310 = vunpack.c.h.b16 %v2291
          %v2311 = vunpack.c.l.b16 %v2292
          %v2312 = vunpack.c.h.b16 %v2292
          %v2313 = vunpack.c.l.b16 %v2293
          %v2314 = vunpack.c.h.b16 %v2293
          %v2315 = vunpack.c.l.b16 %v2294
          %v2316 = vunpack.c.h.b16 %v2294
          %v2317 = vunpack.c.l.b16 %v2295
          %v2318 = vunpack.c.h.b16 %v2295
          %v2319 = vunpack.c.l.b16 %v2296
          %v2320 = vunpack.c.h.b16 %v2296
          %v2321 = vpack.c.b16 %v2305, %v2305
          %v2322 = vpack.c.b16 %v2306, %v2306
          %v2323 = vpack.c.b16 %v2307, %v2307
          %v2324 = vpack.c.b16 %v2308, %v2308
          %v2325 = vpack.c.b16 %v2309, %v2309
          %v2326 = vpack.c.b16 %v2310, %v2310
          %v2327 = vpack.c.b16 %v2311, %v2311
          %v2328 = vpack.c.b16 %v2312, %v2312
          %v2329 = vpack.c.b16 %v2313, %v2313
          %v2330 = vpack.c.b16 %v2314, %v2314
          %v2331 = vpack.c.b16 %v2315, %v2315
          %v2332 = vpack.c.b16 %v2316, %v2316
          %v2333 = vpack.c.b16 %v2317, %v2317
          %v2334 = vpack.c.b16 %v2318, %v2318
          %v2335 = vpack.c.b16 %v2319, %v2319
          %v2336 = vpack.c.b16 %v2320, %v2320
          %s2353 = smul.u32 %s1123, 2
          %s2354 = smul.addr %s2353, 4
          %s2355 = scalar_lea.vmem [#allocation3], %s2354
          %2356 = vst [vmem:[%s2355] sm:$0xf] %v2321
          %2357 = vst [vmem:[%s2355 + $0x4] sm:$0xf] %v2322
          %2358 = vst [vmem:[%s2355 + $0x8] sm:$0xf] %v2323
          %2359 = vst [vmem:[%s2355 + $0xc] sm:$0xf] %v2324
          %2360 = vst [vmem:[%s2355 + $0x10] sm:$0xf] %v2325
          %2361 = vst [vmem:[%s2355 + $0x14] sm:$0xf] %v2326
          %2362 = vst [vmem:[%s2355 + $0x18] sm:$0xf] %v2327
          %2363 = vst [vmem:[%s2355 + $0x1c] sm:$0xf] %v2328
          %2364 = vst [vmem:[%s2355 + $0x20] sm:$0xf] %v2329
          %2365 = vst [vmem:[%s2355 + $0x24] sm:$0xf] %v2330
          %2366 = vst [vmem:[%s2355 + $0x28] sm:$0xf] %v2331
          %2367 = vst [vmem:[%s2355 + $0x2c] sm:$0xf] %v2332
          %2368 = vst [vmem:[%s2355 + $0x30] sm:$0xf] %v2333
          %2369 = vst [vmem:[%s2355 + $0x34] sm:$0xf] %v2334
          %2370 = vst [vmem:[%s2355 + $0x38] sm:$0xf] %v2335
          %2371 = vst [vmem:[%s2355 + $0x3c] sm:$0xf] %v2336
          %v2372 = vadd.f32 %v2273, %v2274
          %v2373 = vadd.f32 %v2372, %v2275
          %v2374 = vadd.f32 %v2373, %v2276
          %v2375 = vadd.f32 %v2374, %v2277
          %v2376 = vadd.f32 %v2375, %v2278
          %v2377 = vadd.f32 %v2376, %v2279
          %v2378 = vadd.f32 %v2377, %v2280
          %v2379 = vadd.f32 %v2378, %v2281
          %v2380 = vadd.f32 %v2379, %v2282
          %v2381 = vadd.f32 %v2380, %v2283
          %v2382 = vadd.f32 %v2381, %v2284
          %v2383 = vadd.f32 %v2382, %v2285
          %v2384 = vadd.f32 %v2383, %v2286
          %v2385 = vadd.f32 %v2384, %v2287
          %v2386 = vadd.f32 %v2385, %v2288
          %v2387 = vrot.slane %v2386, 4
          %v2388 = vadd.f32 %v2386, %v2387
          %v2389 = vrot.slane %v2388, 2
          %v2390 = vadd.f32 %v2388, %v2389
          %v2391 = vrot.slane %v2390, 1
          %v2392 = vadd.f32 %v2390, %v2391
          %v2393 = vadd.f32 %v1122, %v2392
        $region92: #{tpu_custom_call.1} parent=75 // loop_footer
          %s1121 = sadd.s32 1, %s1117
        $region93: #{tpu_custom_call.1} parent=75 // loop_footer_branch
          %1116 = sbr.rel target = $region89
        $region94: #{tpu_custom_call.1} parent=75 // loop_exit
          _
        %v2394 = vmul.f32 %v1122, 0.00390625
        %v2395 = vpack.c.bf16 %v2394, %v2394
        %v2396 = vld [vmem:[%s7] sm:$0xf]
        %v2397 = vld [vmem:[%s7 + $0x4] sm:$0xf]
        %v2398 = vld [vmem:[%s7 + $0x8] sm:$0xf]
        %v2399 = vld [vmem:[%s7 + $0xc] sm:$0xf]
        %v2400 = vld [vmem:[%s7 + $0x10] sm:$0xf]
        %v2401 = vld [vmem:[%s7 + $0x14] sm:$0xf]
        %v2402 = vld [vmem:[%s7 + $0x18] sm:$0xf]
        %v2403 = vld [vmem:[%s7 + $0x1c] sm:$0xf]
        %v2404 = vld [vmem:[%s7 + $0x20] sm:$0xf]
        %v2405 = vld [vmem:[%s7 + $0x24] sm:$0xf]
        %v2406 = vld [vmem:[%s7 + $0x28] sm:$0xf]
        %v2407 = vld [vmem:[%s7 + $0x2c] sm:$0xf]
        %v2408 = vld [vmem:[%s7 + $0x30] sm:$0xf]
        %v2409 = vld [vmem:[%s7 + $0x34] sm:$0xf]
        %v2410 = vld [vmem:[%s7 + $0x38] sm:$0xf]
        %v2411 = vld [vmem:[%s7 + $0x3c] sm:$0xf]
        %v2412 = vld [vmem:[%s8] sm:$0x1]
        %v2429 = vunpack.c.l.b16 %v2396
        %v2430 = vunpack.c.l.b16 %v2397
        %v2431 = vunpack.c.l.b16 %v2398
        %v2432 = vunpack.c.l.b16 %v2399
        %v2433 = vunpack.c.l.b16 %v2400
        %v2434 = vunpack.c.l.b16 %v2401
        %v2435 = vunpack.c.l.b16 %v2402
        %v2436 = vunpack.c.l.b16 %v2403
        %v2437 = vunpack.c.l.b16 %v2404
        %v2438 = vunpack.c.l.b16 %v2405
        %v2439 = vunpack.c.l.b16 %v2406
        %v2440 = vunpack.c.l.b16 %v2407
        %v2441 = vunpack.c.l.b16 %v2408
        %v2442 = vunpack.c.l.b16 %v2409
        %v2443 = vunpack.c.l.b16 %v2410
        %v2444 = vunpack.c.l.b16 %v2411
        %v2445 = vpack.c.b16 %v2430, %v2429
        %v2446 = vpack.c.b16 %v2432, %v2431
        %v2447 = vpack.c.b16 %v2434, %v2433
        %v2448 = vpack.c.b16 %v2436, %v2435
        %v2449 = vpack.c.b16 %v2438, %v2437
        %v2450 = vpack.c.b16 %v2440, %v2439
        %v2451 = vpack.c.b16 %v2442, %v2441
        %v2452 = vpack.c.b16 %v2444, %v2443
        %2461 = vmatprep.subr.bf16.mxu0 0
        %2462 = vmatpush1.bf16.msra.mxu0 %v2452
        %2463 = vmatprep.subr.bf16.mxu0 0
        %2464 = vmatpush1.bf16.msra.mxu0 %v2451
        %2465 = vmatprep.subr.bf16.mxu0 0
        %2466 = vmatpush1.bf16.msra.mxu0 %v2450
        %2467 = vmatprep.subr.bf16.mxu0 0
        %2468 = vmatpush1.bf16.msra.mxu0 %v2449
        %2469 = vmatprep.subr.bf16.mxu0 0
        %2470 = vmatpush1.bf16.msra.mxu0 %v2448
        %2471 = vmatprep.subr.bf16.mxu0 0
        %2472 = vmatpush1.bf16.msra.mxu0 %v2447
        %2473 = vmatprep.subr.bf16.mxu0 0
        %2474 = vmatpush1.bf16.msra.mxu0 %v2446
        %2475 = vmatprep.subr.bf16.mxu0 0
        %2476 = vmatpush1.bf16.msra.mxu0 %v2445
        %2477 = vmatprep.subr.bf16.mxu0 0
        %2478 = vmatpush2.bf16.msra.mxu0 0
        %2479 = vmatprep.subr.bf16.mxu0 0
        %2480 = vmatpush2.bf16.msra.mxu0 0
        %2481 = vmatprep.subr.bf16.mxu0 0
        %2482 = vmatpush2.bf16.msra.mxu0 0
        %2483 = vmatprep.subr.bf16.mxu0 0
        %2484 = vmatpush2.bf16.msra.mxu0 0
        %2485 = vmatprep.subr.bf16.mxu0 0
        %2486 = vmatpush2.bf16.msra.mxu0 0
        %2487 = vmatprep.subr.bf16.mxu0 0
        %2488 = vmatpush2.bf16.msra.mxu0 0
        %2489 = vmatprep.subr.bf16.mxu0 0
        %2490 = vmatpush2.bf16.msra.mxu0 0
        %2491 = vmatprep.subr.bf16.mxu0 0
        %2492 = vmatpush2.bf16.msra.mxu0 0
        %2493 = vmatprep.mubr.bf16.mxu0 0
        %2494 = vmatmul.mubr.bf16.gmra.mxu0 %v2395
        %v2495 = vpop.f32.mrf.mxu0
        %v2496 = vadd.f32 %v2412, %v2495
        %v2497 = vpop.f32.mrf.mxu0
        %v2498 = vpop.f32.mrf.mxu0
        %v2499 = vpop.f32.mrf.mxu0
        %2500 = vdwg.mxu0
        %v2501 = vxor.u32 %v2496, 2147483648
        %v2502 = vmul.f32 %v2501, 1.442695
        %v2503 = vpow.pop %v2502
        %v2504 = vadd.f32 %v2503, 1.0
        %v2505 = vrcp.pop %v2504
        %v2506 = vmul.f32 1.0, %v2505
        %v2507 = vmul.f32 %v2496, %v2506
        %v2508 = vpack.c.bf16 %v2507, %v2507
        %v2509 = vld [vmem:[%s9] sm:$0xf]
        %v2510 = vld [vmem:[%s10] sm:$0x1]
        %vm2511 = vcmask 64512
        %v2513 = vsel %vm2511, %v2508, 0
        %vm2515 = vcmask 1043456
        %v2517 = vsel %vm2515, %v2509, 0
        %2519 = vmatprep.subr.bf16.mxu0 0
        %2520 = vmatpush1.bf16.msra.mxu0 0
        %2521 = vmatprep.subr.bf16.mxu0 0
        %2522 = vmatpush1.bf16.msra.mxu0 0
        %2523 = vmatprep.subr.bf16.mxu0 0
        %2524 = vmatpush1.bf16.msra.mxu0 0
        %2525 = vmatprep.subr.bf16.mxu0 0
        %2526 = vmatpush1.bf16.msra.mxu0 0
        %2527 = vmatprep.subr.bf16.mxu0 0
        %2528 = vmatpush1.bf16.msra.mxu0 0
        %2529 = vmatprep.subr.bf16.mxu0 0
        %2530 = vmatpush1.bf16.msra.mxu0 0
        %2531 = vmatprep.subr.bf16.mxu0 0
        %2532 = vmatpush1.bf16.msra.mxu0 0
        %2533 = vmatprep.subr.bf16.mxu0 0
        %2534 = vmatpush1.bf16.msra.mxu0 %v2517
        %2535 = vmatprep.subr.bf16.mxu0 0
        %2536 = vmatpush2.bf16.msra.mxu0 0
        %2537 = vmatprep.subr.bf16.mxu0 0
        %2538 = vmatpush2.bf16.msra.mxu0 0
        %2539 = vmatprep.subr.bf16.mxu0 0
        %2540 = vmatpush2.bf16.msra.mxu0 0
        %2541 = vmatprep.subr.bf16.mxu0 0
        %2542 = vmatpush2.bf16.msra.mxu0 0
        %2543 = vmatprep.subr.bf16.mxu0 0
        %2544 = vmatpush2.bf16.msra.mxu0 0
        %2545 = vmatprep.subr.bf16.mxu0 0
        %2546 = vmatpush2.bf16.msra.mxu0 0
        %2547 = vmatprep.subr.bf16.mxu0 0
        %2548 = vmatpush2.bf16.msra.mxu0 0
        %2549 = vmatprep.subr.bf16.mxu0 0
        %2550 = vmatpush2.bf16.msra.mxu0 0
        %2551 = vmatprep.mubr.bf16.mxu0 0
        %2552 = vmatmul.mubr.bf16.gmra.mxu0 %v2513
        %v2553 = vpop.f32.mrf.mxu0
        %v2554 = vadd.f32 %v2510, %v2553
        %v2555 = vpop.f32.mrf.mxu0
        %v2556 = vpop.f32.mrf.mxu0
        %v2557 = vpop.f32.mrf.mxu0
        %2558 = vdwg.mxu0
        %v2559 = vxor.u32 %v2554, 2147483648
        %v2560 = vmul.f32 %v2559, 1.442695
        %v2561 = vpow.pop %v2560
        %v2562 = vadd.f32 %v2561, 1.0
        %v2563 = vrcp.pop %v2562
        %v2564 = vmul.f32 1.0, %v2563
        %v2565 = vlaneseq
        %v2566 = vshrl.u32 %v2565, 7
        %v2567 = vsub.s32 0, %v2566
        %v2568 = vrot.slane %v2564, %v2567
        %v2569 = vlaneseq
        %v2570 = vshrl.u32 %v2569, 7
        %v2571 = vadd.s32 %v2570, 8
        %v2572 = vadd.s32 %v2570, 16
        %v2573 = vadd.s32 %v2570, 24
        %v2574 = vadd.s32 %v2570, 32
        %v2575 = vadd.s32 %v2570, 40
        %v2576 = vadd.s32 %v2570, 48
        %v2577 = vadd.s32 %v2570, 56
        %v2578 = vadd.s32 %v2570, 64
        %v2579 = vadd.s32 %v2570, 72
        %v2580 = vadd.s32 %v2570, 80
        %v2581 = vadd.s32 %v2570, 88
        %v2582 = vadd.s32 %v2570, 96
        %v2583 = vadd.s32 %v2570, 104
        %v2584 = vadd.s32 %v2570, 112
        %v2585 = vadd.s32 %v2570, 120
        %v2586 = vlaneseq
        %v2587 = vand.u32 %v2586, 127
        %vm2588 = vcmp.eq.s32.totalorder %v2570, %v2587
        %vm2589 = vcmp.eq.s32.totalorder %v2571, %v2587
        %vm2590 = vcmp.eq.s32.totalorder %v2572, %v2587
        %vm2591 = vcmp.eq.s32.totalorder %v2573, %v2587
        %vm2592 = vcmp.eq.s32.totalorder %v2574, %v2587
        %vm2593 = vcmp.eq.s32.totalorder %v2575, %v2587
        %vm2594 = vcmp.eq.s32.totalorder %v2576, %v2587
        %vm2595 = vcmp.eq.s32.totalorder %v2577, %v2587
        %vm2596 = vcmp.eq.s32.totalorder %v2578, %v2587
        %vm2597 = vcmp.eq.s32.totalorder %v2579, %v2587
        %vm2598 = vcmp.eq.s32.totalorder %v2580, %v2587
        %vm2599 = vcmp.eq.s32.totalorder %v2581, %v2587
        %vm2600 = vcmp.eq.s32.totalorder %v2582, %v2587
        %vm2601 = vcmp.eq.s32.totalorder %v2583, %v2587
        %vm2602 = vcmp.eq.s32.totalorder %v2584, %v2587
        %vm2603 = vcmp.eq.s32.totalorder %v2585, %v2587
        %v2604 = vsel %vm2588, %v2568, 0.0
        %v2605 = vsel %vm2589, %v2568, 0.0
        %v2606 = vsel %vm2590, %v2568, 0.0
        %v2607 = vsel %vm2591, %v2568, 0.0
        %v2608 = vsel %vm2592, %v2568, 0.0
        %v2609 = vsel %vm2593, %v2568, 0.0
        %v2610 = vsel %vm2594, %v2568, 0.0
        %v2611 = vsel %vm2595, %v2568, 0.0
        %v2612 = vsel %vm2596, %v2568, 0.0
        %v2613 = vsel %vm2597, %v2568, 0.0
        %v2614 = vsel %vm2598, %v2568, 0.0
        %v2615 = vsel %vm2599, %v2568, 0.0
        %v2616 = vsel %vm2600, %v2568, 0.0
        %v2617 = vsel %vm2601, %v2568, 0.0
        %v2618 = vsel %vm2602, %v2568, 0.0
        %v2619 = vsel %vm2603, %v2568, 0.0
        %2620 = vadd.xlane.f32.xlu0 %v2604
        %v2621 = vpop.xlane.xlu0 %2620
        %2622 = vadd.xlane.f32.xlu0 %v2605
        %v2623 = vpop.xlane.xlu0 %2622
        %2624 = vadd.xlane.f32.xlu0 %v2606
        %v2625 = vpop.xlane.xlu0 %2624
        %2626 = vadd.xlane.f32.xlu0 %v2607
        %v2627 = vpop.xlane.xlu0 %2626
        %2628 = vadd.xlane.f32.xlu0 %v2608
        %v2629 = vpop.xlane.xlu0 %2628
        %2630 = vadd.xlane.f32.xlu0 %v2609
        %v2631 = vpop.xlane.xlu0 %2630
        %2632 = vadd.xlane.f32.xlu0 %v2610
        %v2633 = vpop.xlane.xlu0 %2632
        %2634 = vadd.xlane.f32.xlu0 %v2611
        %v2635 = vpop.xlane.xlu0 %2634
        %2636 = vadd.xlane.f32.xlu0 %v2612
        %v2637 = vpop.xlane.xlu0 %2636
        %2638 = vadd.xlane.f32.xlu0 %v2613
        %v2639 = vpop.xlane.xlu0 %2638
        %2640 = vadd.xlane.f32.xlu0 %v2614
        %v2641 = vpop.xlane.xlu0 %2640
        %2642 = vadd.xlane.f32.xlu0 %v2615
        %v2643 = vpop.xlane.xlu0 %2642
        %2644 = vadd.xlane.f32.xlu0 %v2616
        %v2645 = vpop.xlane.xlu0 %2644
        %2646 = vadd.xlane.f32.xlu0 %v2617
        %v2647 = vpop.xlane.xlu0 %2646
        %2648 = vadd.xlane.f32.xlu0 %v2618
        %v2649 = vpop.xlane.xlu0 %2648
        %2650 = vadd.xlane.f32.xlu0 %v2619
        %v2651 = vpop.xlane.xlu0 %2650
        %v2652 = vld [vmem:[%s11] sm:$0xf]
        %v2653 = vld [vmem:[%s11 + $0x4] sm:$0xf]
        %v2654 = vld [vmem:[%s11 + $0x8] sm:$0xf]
        %v2655 = vld [vmem:[%s11 + $0xc] sm:$0xf]
        %v2656 = vld [vmem:[%s11 + $0x10] sm:$0xf]
        %v2657 = vld [vmem:[%s11 + $0x14] sm:$0xf]
        %v2658 = vld [vmem:[%s11 + $0x18] sm:$0xf]
        %v2659 = vld [vmem:[%s11 + $0x1c] sm:$0xf]
        %v2660 = vld [vmem:[%s11 + $0x20] sm:$0xf]
        %v2661 = vld [vmem:[%s11 + $0x24] sm:$0xf]
        %v2662 = vld [vmem:[%s11 + $0x28] sm:$0xf]
        %v2663 = vld [vmem:[%s11 + $0x2c] sm:$0xf]
        %v2664 = vld [vmem:[%s11 + $0x30] sm:$0xf]
        %v2665 = vld [vmem:[%s11 + $0x34] sm:$0xf]
        %v2666 = vld [vmem:[%s11 + $0x38] sm:$0xf]
        %v2667 = vld [vmem:[%s11 + $0x3c] sm:$0xf]
        %v2668 = vunpack.c.l.bf16 %v2652
        %v2669 = vunpack.c.l.bf16 %v2653
        %v2670 = vunpack.c.l.bf16 %v2654
        %v2671 = vunpack.c.l.bf16 %v2655
        %v2672 = vunpack.c.l.bf16 %v2656
        %v2673 = vunpack.c.l.bf16 %v2657
        %v2674 = vunpack.c.l.bf16 %v2658
        %v2675 = vunpack.c.l.bf16 %v2659
        %v2676 = vunpack.c.l.bf16 %v2660
        %v2677 = vunpack.c.l.bf16 %v2661
        %v2678 = vunpack.c.l.bf16 %v2662
        %v2679 = vunpack.c.l.bf16 %v2663
        %v2680 = vunpack.c.l.bf16 %v2664
        %v2681 = vunpack.c.l.bf16 %v2665
        %v2682 = vunpack.c.l.bf16 %v2666
        %v2683 = vunpack.c.l.bf16 %v2667
        %v2684 = vmul.f32 %v2668, %v2621
        %v2685 = vmul.f32 %v2669, %v2623
        %v2686 = vmul.f32 %v2670, %v2625
        %v2687 = vmul.f32 %v2671, %v2627
        %v2688 = vmul.f32 %v2672, %v2629
        %v2689 = vmul.f32 %v2673, %v2631
        %v2690 = vmul.f32 %v2674, %v2633
        %v2691 = vmul.f32 %v2675, %v2635
        %v2692 = vmul.f32 %v2676, %v2637
        %v2693 = vmul.f32 %v2677, %v2639
        %v2694 = vmul.f32 %v2678, %v2641
        %v2695 = vmul.f32 %v2679, %v2643
        %v2696 = vmul.f32 %v2680, %v2645
        %v2697 = vmul.f32 %v2681, %v2647
        %v2698 = vmul.f32 %v2682, %v2649
        %v2699 = vmul.f32 %v2683, %v2651
        %v2700 = vpack.c.bf16 %v2685, %v2684
        %v2701 = vpack.c.bf16 %v2687, %v2686
        %v2702 = vpack.c.bf16 %v2689, %v2688
        %v2703 = vpack.c.bf16 %v2691, %v2690
        %v2704 = vpack.c.bf16 %v2693, %v2692
        %v2705 = vpack.c.bf16 %v2695, %v2694
        %v2706 = vpack.c.bf16 %v2697, %v2696
        %v2707 = vpack.c.bf16 %v2699, %v2698
        %v2708 = vld [vmem:[%s12] sm:$0x1]
        %v2709 = vld [vmem:[%s13] sm:$0x1]
        loop: start=0, step=1, limit=2
        $region95: #{tpu_custom_call.1} parent=75 // loop_pre_header
          _
        $region96: #{tpu_custom_call.1} parent=75 // loop_header
          %s2711 = sphi 0, %s2715
          %p2712 = scmp.ge.s32.totalorder %s2711, 2
        $region97: #{tpu_custom_call.1} parent=75 // loop_header_branch
          %2714 = sbr.rel (%p2712) target = $region101
        $region98: #{tpu_custom_call.1} parent=75 // loop_body
          %s2716 = smul.u32 %s2711, 8
          %s2717 = smul.u32 %s2716, 2
          %s2718 = smul.addr %s2717, 4
          %s2719 = scalar_lea.vmem [#allocation3], %s2718
          %v2720 = vld [vmem:[%s2719] sm:$0xf]
          %v2721 = vld [vmem:[%s2719 + $0x4] sm:$0xf]
          %v2722 = vld [vmem:[%s2719 + $0x8] sm:$0xf]
          %v2723 = vld [vmem:[%s2719 + $0xc] sm:$0xf]
          %v2724 = vld [vmem:[%s2719 + $0x10] sm:$0xf]
          %v2725 = vld [vmem:[%s2719 + $0x14] sm:$0xf]
          %v2726 = vld [vmem:[%s2719 + $0x18] sm:$0xf]
          %v2727 = vld [vmem:[%s2719 + $0x1c] sm:$0xf]
          %v2728 = vld [vmem:[%s2719 + $0x20] sm:$0xf]
          %v2729 = vld [vmem:[%s2719 + $0x24] sm:$0xf]
          %v2730 = vld [vmem:[%s2719 + $0x28] sm:$0xf]
          %v2731 = vld [vmem:[%s2719 + $0x2c] sm:$0xf]
          %v2732 = vld [vmem:[%s2719 + $0x30] sm:$0xf]
          %v2733 = vld [vmem:[%s2719 + $0x34] sm:$0xf]
          %v2734 = vld [vmem:[%s2719 + $0x38] sm:$0xf]
          %v2735 = vld [vmem:[%s2719 + $0x3c] sm:$0xf]
          %v2752 = vunpack.c.l.b16 %v2720
          %v2753 = vunpack.c.l.b16 %v2721
          %v2754 = vunpack.c.l.b16 %v2722
          %v2755 = vunpack.c.l.b16 %v2723
          %v2756 = vunpack.c.l.b16 %v2724
          %v2757 = vunpack.c.l.b16 %v2725
          %v2758 = vunpack.c.l.b16 %v2726
          %v2759 = vunpack.c.l.b16 %v2727
          %v2760 = vunpack.c.l.b16 %v2728
          %v2761 = vunpack.c.l.b16 %v2729
          %v2762 = vunpack.c.l.b16 %v2730
          %v2763 = vunpack.c.l.b16 %v2731
          %v2764 = vunpack.c.l.b16 %v2732
          %v2765 = vunpack.c.l.b16 %v2733
          %v2766 = vunpack.c.l.b16 %v2734
          %v2767 = vunpack.c.l.b16 %v2735
          %v2768 = vpack.c.b16 %v2753, %v2752
          %v2769 = vpack.c.b16 %v2755, %v2754
          %v2770 = vpack.c.b16 %v2757, %v2756
          %v2771 = vpack.c.b16 %v2759, %v2758
          %v2772 = vpack.c.b16 %v2761, %v2760
          %v2773 = vpack.c.b16 %v2763, %v2762
          %v2774 = vpack.c.b16 %v2765, %v2764
          %v2775 = vpack.c.b16 %v2767, %v2766
          %2784 = vmatprep.subr.bf16.mxu0 0
          %2785 = vmatpush1.bf16.msra.mxu0 %v2707
          %2786 = vmatprep.subr.bf16.mxu0 0
          %2787 = vmatpush1.bf16.msra.mxu0 %v2706
          %2788 = vmatprep.subr.bf16.mxu0 0
          %2789 = vmatpush1.bf16.msra.mxu0 %v2705
          %2790 = vmatprep.subr.bf16.mxu0 0
          %2791 = vmatpush1.bf16.msra.mxu0 %v2704
          %2792 = vmatprep.subr.bf16.mxu0 0
          %2793 = vmatpush1.bf16.msra.mxu0 %v2703
          %2794 = vmatprep.subr.bf16.mxu0 0
          %2795 = vmatpush1.bf16.msra.mxu0 %v2702
          %2796 = vmatprep.subr.bf16.mxu0 0
          %2797 = vmatpush1.bf16.msra.mxu0 %v2701
          %2798 = vmatprep.subr.bf16.mxu0 0
          %2799 = vmatpush1.bf16.msra.mxu0 %v2700
          %2800 = vmatprep.subr.bf16.mxu0 0
          %2801 = vmatpush2.bf16.msra.mxu0 0
          %2802 = vmatprep.subr.bf16.mxu0 0
          %2803 = vmatpush2.bf16.msra.mxu0 0
          %2804 = vmatprep.subr.bf16.mxu0 0
          %2805 = vmatpush2.bf16.msra.mxu0 0
          %2806 = vmatprep.subr.bf16.mxu0 0
          %2807 = vmatpush2.bf16.msra.mxu0 0
          %2808 = vmatprep.subr.bf16.mxu0 0
          %2809 = vmatpush2.bf16.msra.mxu0 0
          %2810 = vmatprep.subr.bf16.mxu0 0
          %2811 = vmatpush2.bf16.msra.mxu0 0
          %2812 = vmatprep.subr.bf16.mxu0 0
          %2813 = vmatpush2.bf16.msra.mxu0 0
          %2814 = vmatprep.subr.bf16.mxu0 0
          %2815 = vmatpush2.bf16.msra.mxu0 0
          %2816 = vmatprep.mubr.bf16.mxu0 0
          %2817 = vmatmul.mubr.bf16.gmra.mxu0 %v2768
          %v2818 = vpop.f32.mrf.mxu0
          %v2819 = vadd.f32 0.0, %v2818
          %v2820 = vpop.f32.mrf.mxu0
          %v2821 = vpop.f32.mrf.mxu0
          %v2822 = vadd.f32 0.0, %v2821
          %v2823 = vpop.f32.mrf.mxu0
          %2824 = vmatprep.mubr.bf16.mxu0 0
          %2825 = vmatmul.mubr.bf16.gmra.mxu0 %v2769
          %v2826 = vpop.f32.mrf.mxu0
          %v2827 = vadd.f32 0.0, %v2826
          %v2828 = vpop.f32.mrf.mxu0
          %v2829 = vpop.f32.mrf.mxu0
          %v2830 = vadd.f32 0.0, %v2829
          %v2831 = vpop.f32.mrf.mxu0
          %2832 = vmatprep.mubr.bf16.mxu0 0
          %2833 = vmatmul.mubr.bf16.gmra.mxu0 %v2770
          %v2834 = vpop.f32.mrf.mxu0
          %v2835 = vadd.f32 0.0, %v2834
          %v2836 = vpop.f32.mrf.mxu0
          %v2837 = vpop.f32.mrf.mxu0
          %v2838 = vadd.f32 0.0, %v2837
          %v2839 = vpop.f32.mrf.mxu0
          %2840 = vmatprep.mubr.bf16.mxu0 0
          %2841 = vmatmul.mubr.bf16.gmra.mxu0 %v2771
          %v2842 = vpop.f32.mrf.mxu0
          %v2843 = vadd.f32 0.0, %v2842
          %v2844 = vpop.f32.mrf.mxu0
          %v2845 = vpop.f32.mrf.mxu0
          %v2846 = vadd.f32 0.0, %v2845
          %v2847 = vpop.f32.mrf.mxu0
          %2848 = vmatprep.mubr.bf16.mxu0 0
          %2849 = vmatmul.mubr.bf16.gmra.mxu0 %v2772
          %v2850 = vpop.f32.mrf.mxu0
          %v2851 = vadd.f32 0.0, %v2850
          %v2852 = vpop.f32.mrf.mxu0
          %v2853 = vpop.f32.mrf.mxu0
          %v2854 = vadd.f32 0.0, %v2853
          %v2855 = vpop.f32.mrf.mxu0
          %2856 = vmatprep.mubr.bf16.mxu0 0
          %2857 = vmatmul.mubr.bf16.gmra.mxu0 %v2773
          %v2858 = vpop.f32.mrf.mxu0
          %v2859 = vadd.f32 0.0, %v2858
          %v2860 = vpop.f32.mrf.mxu0
          %v2861 = vpop.f32.mrf.mxu0
          %v2862 = vadd.f32 0.0, %v2861
          %v2863 = vpop.f32.mrf.mxu0
          %2864 = vmatprep.mubr.bf16.mxu0 0
          %2865 = vmatmul.mubr.bf16.gmra.mxu0 %v2774
          %v2866 = vpop.f32.mrf.mxu0
          %v2867 = vadd.f32 0.0, %v2866
          %v2868 = vpop.f32.mrf.mxu0
          %v2869 = vpop.f32.mrf.mxu0
          %v2870 = vadd.f32 0.0, %v2869
          %v2871 = vpop.f32.mrf.mxu0
          %2872 = vmatprep.mubr.bf16.mxu0 0
          %2873 = vmatmul.mubr.bf16.gmra.mxu0 %v2775
          %v2874 = vpop.f32.mrf.mxu0
          %v2875 = vadd.f32 0.0, %v2874
          %v2876 = vpop.f32.mrf.mxu0
          %v2877 = vpop.f32.mrf.mxu0
          %v2878 = vadd.f32 0.0, %v2877
          %v2879 = vpop.f32.mrf.mxu0
          %2880 = vdwg.mxu0
          %v2882 = vlaneseq
          %v2883 = vshrl.u32 %v2882, 7
          %v2884 = vsub.s32 0, %v2883
          %v2885 = vrot.slane %v2708, %v2884
          %v2887 = vmul.f32 %v2819, %v2885
          %v2888 = vmul.f32 %v2822, %v2885
          %v2889 = vmul.f32 %v2827, %v2885
          %v2890 = vmul.f32 %v2830, %v2885
          %v2891 = vmul.f32 %v2835, %v2885
          %v2892 = vmul.f32 %v2838, %v2885
          %v2893 = vmul.f32 %v2843, %v2885
          %v2894 = vmul.f32 %v2846, %v2885
          %v2895 = vmul.f32 %v2851, %v2885
          %v2896 = vmul.f32 %v2854, %v2885
          %v2897 = vmul.f32 %v2859, %v2885
          %v2898 = vmul.f32 %v2862, %v2885
          %v2899 = vmul.f32 %v2867, %v2885
          %v2900 = vmul.f32 %v2870, %v2885
          %v2901 = vmul.f32 %v2875, %v2885
          %v2902 = vmul.f32 %v2878, %v2885
          %v2904 = vlaneseq
          %v2905 = vshrl.u32 %v2904, 7
          %v2906 = vsub.s32 0, %v2905
          %v2907 = vrot.slane %v2709, %v2906
          %v2909 = vadd.f32 %v2887, %v2907
          %v2910 = vadd.f32 %v2888, %v2907
          %v2911 = vadd.f32 %v2889, %v2907
          %v2912 = vadd.f32 %v2890, %v2907
          %v2913 = vadd.f32 %v2891, %v2907
          %v2914 = vadd.f32 %v2892, %v2907
          %v2915 = vadd.f32 %v2893, %v2907
          %v2916 = vadd.f32 %v2894, %v2907
          %v2917 = vadd.f32 %v2895, %v2907
          %v2918 = vadd.f32 %v2896, %v2907
          %v2919 = vadd.f32 %v2897, %v2907
          %v2920 = vadd.f32 %v2898, %v2907
          %v2921 = vadd.f32 %v2899, %v2907
          %v2922 = vadd.f32 %v2900, %v2907
          %v2923 = vadd.f32 %v2901, %v2907
          %v2924 = vadd.f32 %v2902, %v2907
          %s2925 = smul.addr %s2717, 4
          %s2926 = scalar_lea.vmem %s441, %s2925 [#allocation4]
          %v2927 = vld [vmem:[%s2926] sm:$0xf]
          %v2928 = vld [vmem:[%s2926 + $0x4] sm:$0xf]
          %v2929 = vld [vmem:[%s2926 + $0x8] sm:$0xf]
          %v2930 = vld [vmem:[%s2926 + $0xc] sm:$0xf]
          %v2931 = vld [vmem:[%s2926 + $0x10] sm:$0xf]
          %v2932 = vld [vmem:[%s2926 + $0x14] sm:$0xf]
          %v2933 = vld [vmem:[%s2926 + $0x18] sm:$0xf]
          %v2934 = vld [vmem:[%s2926 + $0x1c] sm:$0xf]
          %v2935 = vld [vmem:[%s2926 + $0x20] sm:$0xf]
          %v2936 = vld [vmem:[%s2926 + $0x24] sm:$0xf]
          %v2937 = vld [vmem:[%s2926 + $0x28] sm:$0xf]
          %v2938 = vld [vmem:[%s2926 + $0x2c] sm:$0xf]
          %v2939 = vld [vmem:[%s2926 + $0x30] sm:$0xf]
          %v2940 = vld [vmem:[%s2926 + $0x34] sm:$0xf]
          %v2941 = vld [vmem:[%s2926 + $0x38] sm:$0xf]
          %v2942 = vld [vmem:[%s2926 + $0x3c] sm:$0xf]
          %v2943 = vunpack.c.l.bf16 %v2927
          %v2944 = vunpack.c.l.bf16 %v2928
          %v2945 = vunpack.c.l.bf16 %v2929
          %v2946 = vunpack.c.l.bf16 %v2930
          %v2947 = vunpack.c.l.bf16 %v2931
          %v2948 = vunpack.c.l.bf16 %v2932
          %v2949 = vunpack.c.l.bf16 %v2933
          %v2950 = vunpack.c.l.bf16 %v2934
          %v2951 = vunpack.c.l.bf16 %v2935
          %v2952 = vunpack.c.l.bf16 %v2936
          %v2953 = vunpack.c.l.bf16 %v2937
          %v2954 = vunpack.c.l.bf16 %v2938
          %v2955 = vunpack.c.l.bf16 %v2939
          %v2956 = vunpack.c.l.bf16 %v2940
          %v2957 = vunpack.c.l.bf16 %v2941
          %v2958 = vunpack.c.l.bf16 %v2942
          %v2959 = vadd.f32 %v2909, %v2943
          %v2960 = vadd.f32 %v2910, %v2944
          %v2961 = vadd.f32 %v2911, %v2945
          %v2962 = vadd.f32 %v2912, %v2946
          %v2963 = vadd.f32 %v2913, %v2947
          %v2964 = vadd.f32 %v2914, %v2948
          %v2965 = vadd.f32 %v2915, %v2949
          %v2966 = vadd.f32 %v2916, %v2950
          %v2967 = vadd.f32 %v2917, %v2951
          %v2968 = vadd.f32 %v2918, %v2952
          %v2969 = vadd.f32 %v2919, %v2953
          %v2970 = vadd.f32 %v2920, %v2954
          %v2971 = vadd.f32 %v2921, %v2955
          %v2972 = vadd.f32 %v2922, %v2956
          %v2973 = vadd.f32 %v2923, %v2957
          %v2974 = vadd.f32 %v2924, %v2958
          %s2975 = smul.u32 %s2716, 16
          %s2976 = scalar_lea.vmem %s485, %s2975 [#allocation7]
          %vm2977 = vcmask 261120
          %2978 = vst.msk [vmem:[%s2976] sm:$0xff] %vm2977, %v2959
          %2979 = vst.msk [vmem:[%s2976 + $0x8] sm:$0xff] %vm2977, %v2960
          %2980 = vst.msk [vmem:[%s2976 + $0x10] sm:$0xff] %vm2977, %v2961
          %2981 = vst.msk [vmem:[%s2976 + $0x18] sm:$0xff] %vm2977, %v2962
          %2982 = vst.msk [vmem:[%s2976 + $0x20] sm:$0xff] %vm2977, %v2963
          %2983 = vst.msk [vmem:[%s2976 + $0x28] sm:$0xff] %vm2977, %v2964
          %2984 = vst.msk [vmem:[%s2976 + $0x30] sm:$0xff] %vm2977, %v2965
          %2985 = vst.msk [vmem:[%s2976 + $0x38] sm:$0xff] %vm2977, %v2966
          %2986 = vst.msk [vmem:[%s2976 + $0x40] sm:$0xff] %vm2977, %v2967
          %2987 = vst.msk [vmem:[%s2976 + $0x48] sm:$0xff] %vm2977, %v2968
          %2988 = vst.msk [vmem:[%s2976 + $0x50] sm:$0xff] %vm2977, %v2969
          %2989 = vst.msk [vmem:[%s2976 + $0x58] sm:$0xff] %vm2977, %v2970
          %2990 = vst.msk [vmem:[%s2976 + $0x60] sm:$0xff] %vm2977, %v2971
          %2991 = vst.msk [vmem:[%s2976 + $0x68] sm:$0xff] %vm2977, %v2972
          %2992 = vst.msk [vmem:[%s2976 + $0x70] sm:$0xff] %vm2977, %v2973
          %2993 = vst.msk [vmem:[%s2976 + $0x78] sm:$0xff] %vm2977, %v2974
        $region99: #{tpu_custom_call.1} parent=75 // loop_footer
          %s2715 = sadd.s32 1, %s2711
        $region100: #{tpu_custom_call.1} parent=75 // loop_footer_branch
          %2710 = sbr.rel target = $region96
        $region101: #{tpu_custom_call.1} parent=75 // loop_exit
          _
        %s2994 = sand.u32 %s338, 1
        %s2995 = scalar_lea.sflag [#allocation6], %s2994
        %s2996 = sand.u32 %s338, 1
        %s2997 = smul.addr %s2996, 256
        %s2998 = scalar_lea.vmem [#allocation7], %s2997
        // Predicated region
        $region102: #{tpu_custom_call.1} parent=75 // pred_check
          %p2999 = pneg %p348
        $region103: #{tpu_custom_call.1} parent=75 // pred_check_branch
          %3001 = sbr.rel (%p2999) target = $region105
        $region104: #{tpu_custom_call.1} parent=75 // pred_region
          %s3003 = ssub.s32 4096, 4096
          %3004 = vsyncadd %s2995, %s3003
          %s3005 = smul.addr %s31, 32
          %s3006 = smul.addr %s3005, 128
          %s3007 = scalar_lea.hbm %s14, %s3006
          %s3008 = sshll.u32 %s2998, 4
          %s3009 = int_to_ptr.vmem [resolvable:$true] %s3008
          %3014 = dma.vmem_to_hbm [thread:$0]  %s3009, 4096, %s3007, %s2995, 128, 128, 8
        $region105: #{tpu_custom_call.1} parent=75 // pred_fallthru
          _
      $region76: #{tpu_custom_call.1} parent=5 // pred_fallthru
        _
      %p3015 = scmp.le.s32.totalorder 2, %s26
      // Predicated region
      $region106: #{tpu_custom_call.1} parent=5 // pred_check
        %p3016 = pneg %p3015
      $region107: #{tpu_custom_call.1} parent=5 // pred_check_branch
        %3018 = sbr.rel (%p3016) target = $region109
      $region108: #{tpu_custom_call.1} parent=5 // pred_region
        %s3019 = ssub.s32 %s26, 2
        // Predicated region
        $region110: #{tpu_custom_call.1} parent=108 // pred_check
          %p3020 = pneg %p354
        $region111: #{tpu_custom_call.1} parent=108 // pred_check_branch
          %3022 = sbr.rel (%p3020) target = $region113
        $region112: #{tpu_custom_call.1} parent=108 // pred_region
          %s3023 = sand.u32 %s339, 1
          %s3024 = scalar_lea.sflag [#allocation6], %s3023
          %s3025 = sand.u32 %s339, 1
          %s3026 = smul.addr %s3025, 256
          %s3027 = scalar_lea.vmem [#allocation7], %s3026
          %3028 = dma.done %s3024, 4096
        $region113: #{tpu_custom_call.1} parent=108 // pred_fallthru
          _
      $region109: #{tpu_custom_call.1} parent=5 // pred_fallthru
        _
    $region6: #{tpu_custom_call.1} parent=1 // loop_footer
      %s30 = sadd.s32 1, %s26
    $region7: #{tpu_custom_call.1} parent=1 // loop_footer_branch
      %25 = sbr.rel target = $region3
    $region8: #{tpu_custom_call.1} parent=1 // loop_exit
      _
    %3029 = vsyncpa [#allocation5], 1
    %s3030 = scalar_lea.sflag [#allocation5], 1
    %3031 = vsyncpa %s3030, 1
    %3032 = vsyncpa [#allocation6], 1
    %s3033 = scalar_lea.sflag [#allocation6], 1
    %3034 = vsyncpa %s3033, 1

</llo_original>
